<compile_context>
chip_gen: v5e
topology: v5e:2x2
jax: 0.10.0
libtpu: 0.0.40
codegen_flags: <defaults>
</compile_context>

<pallas_src>
import math

import jax
import jax.numpy as jnp
from jax.experimental import pallas as pl
from jax.experimental.pallas import tpu as pltpu

# Large-but-finite additive mask bias: torch's masked_fill(finfo.min) as an
# *additive* bias can overflow to -inf and NaN after max-subtraction.
_MASK_BIAS = -1e30


def _make_kernel(row_block, col, dim, num_heads):
    hd = dim // num_heads
    hd2 = hd // 2
    d2 = dim // 2

    def kernel(m_ref, bias_ref, w_ref, cos_ref, sin_ref, wo_ref, o_ref, ctx_ref):
        # ---- fused QKV projection: one K=D MXU matmul per row block --------
        x = m_ref[...]                                                # [RB*C, D] bf16
        pkv = jnp.dot(x, w_ref[...],
                      preferred_element_type=jnp.float32)             # [RB*C, 3D] f32
        pkv = pkv.reshape(row_block, col, 3 * dim)                     # no-op for C % 8 == 0

        # ---- RoPE on the [re | im] packed lane layout (pure f32 VPU math,
        #      no lane concat / roll, no extra matmul) -----------------------
        cos = cos_ref[...][None]                                       # [1, C, D/2]
        sin = sin_ref[...][None]
        q_re = pkv[..., 0:d2]
        q_im = pkv[..., d2:dim]
        k_re = pkv[..., dim:dim + d2]
        k_im = pkv[..., dim + d2:2 * dim]
        qr = (q_re * cos - q_im * sin).astype(jnp.bfloat16)
        qi = (q_im * cos + q_re * sin).astype(jnp.bfloat16)
        kr = (k_re * cos - k_im * sin).astype(jnp.bfloat16)
        ki = (k_im * cos + k_re * sin).astype(jnp.bfloat16)
        vb = pkv[..., 2 * dim:].astype(jnp.bfloat16)                   # [RB, C, D]

        bias = bias_ref[...][:, None, :]                               # [RB, 1, C] key mask

        # ---- per-head attention, batched over the RB row axis --------------
        # Only one [RB, C, C] score slab is live at a time; each head's ctx is
        # written straight into the bf16 scratch (no concat, no output RMW).
        for h in range(num_heads):
            s2 = slice(h * hd2, (h + 1) * hd2)
            sv = slice(h * hd, (h + 1) * hd)
            s = jnp.einsum('bqd,bkd->bqk', qr[..., s2], kr[..., s2],
                           preferred_element_type=jnp.float32)
            s = s + jnp.einsum('bqd,bkd->bqk', qi[..., s2], ki[..., s2],
                               preferred_element_type=jnp.float32)
            s = s + bias                                               # additive key mask
            s = s - jnp.max(s, axis=-1, keepdims=True)
            p = jnp.exp(s)
            p = p * pl.reciprocal(jnp.sum(p, axis=-1, keepdims=True))  # exact (EUP)
            ctx = jnp.einsum('bqk,bkd->bqd', p.astype(jnp.bfloat16), vb[..., sv],
                             preferred_element_type=jnp.float32)       # [RB, C, hd]
            ctx_ref[:, :, sv] = ctx.astype(jnp.bfloat16)

        # ---- fused output projection: one K=D matmul, one store per block --
        y = ctx_ref[...].reshape(row_block * col, dim)                 # no-op for C % 8 == 0
        o_ref[...] = jnp.dot(y, wo_ref[...], preferred_element_type=jnp.float32)

    return kernel


def _vmem_bytes_estimate(rb, col, dim, num_heads):
    hd = dim // num_heads
    rbc = rb * col
    blocks = (2 * rbc * dim * 2                     # m block (bf16), double buffered
              + 2 * rbc * dim * 4                   # f32 output block, double buffered
              + 2 * rb * col * 4                    # mask bias
              + 2 * 4 * dim * dim * 2               # c_attn [D,3D] + c_proj [D,D] bf16
              + 2 * 2 * col * (dim // 2) * 4)       # cos + sin tables
    scratch = rbc * dim * 2                         # bf16 ctx scratch
    interm = (rbc * 3 * dim * 4                     # pkv f32
              + 4 * rbc * (dim // 2) * 2            # qr/qi/kr/ki bf16
              + rbc * dim * 2                       # v bf16
              + 2 * rb * col * col * 4              # score slab (+ exp copy) f32
              + rbc * hd * 4)                       # one head's ctx f32
    return int(1.2 * (blocks + scratch + interm))


def _vmem_budget_bytes():
    # Generation-aware budget: ~75% of physical VMEM, leaving headroom for
    # Mosaic internal scratch / semaphores (v5e/v6e: 128 MiB -> ~96 MiB,
    # v7x: 64 MiB -> ~48 MiB).
    try:
        cap = int(getattr(pltpu.get_tpu_info(), "vmem_capacity_bytes", 0)) or (64 << 20)
    except Exception:
        cap = 64 << 20
    return (cap * 3) // 4


def _choose_row_block(n_rows, col, dim, num_heads, budget_bytes):
    """Largest divisor of n_rows that (a) keeps the [rb*C, D] / [rb, C] blocks
    sublane aligned (rb % 8 == 0, or rb spans all rows), (b) fits the VMEM
    budget, and (c) when possible leaves >= 2 row blocks so the 'parallel'
    grid axis can split across TensorCores (v7x megacore)."""
    legal = [rb for rb in range(1, n_rows + 1)
             if n_rows % rb == 0 and (rb % 8 == 0 or rb == n_rows)]
    fits = [rb for rb in legal
            if _vmem_bytes_estimate(rb, col, dim, num_heads) <= budget_bytes]
    if not fits:
        return legal[0]          # smallest legal block; may still exceed budget
    multi = [rb for rb in fits if n_rows // rb >= 2]
    return max(multi) if multi else max(fits)


def msa_row_attention(m, mask, wqkv, wo, num_heads, row_block=None):
    """m: [B, R, C, D]; mask: [B, R, C] bool or None; wqkv: [D, 3D]; wo: [D, D].

    Returns ([B, R, C, D] float32, None)  (return_attn_weight=False path).
    """
    B, R, C, D = m.shape
    assert D % num_heads == 0
    H = num_heads
    hd = D // H
    assert hd % 2 == 0, "rotary head_dim must be even"
    hd2 = hd // 2
    BR = B * R
    scale = 1.0 / math.sqrt(hd)

    budget = _vmem_budget_bytes()
    if row_block is None:
        row_block = _choose_row_block(BR, C, D, H, budget)
    assert BR % row_block == 0, "row_block must divide batch*rows"
    RB = row_block

    # ---- host-side weight repacking:  QKV output lanes become
    #      [ q_re (D/2) | q_im (D/2) | k_re (D/2) | k_im (D/2) | v (D) ]
    # with lane h*hd2 + j <-> (head h, rotary freq j).  Scores are invariant
    # to the shared q/k column permutation; 1/sqrt(head_dim) is baked into q;
    # v and c_proj keep the original layout.
    wq = wqkv[:, :D].astype(jnp.float32) * scale
    wk = wqkv[:, D:2 * D].astype(jnp.float32)
    wv = wqkv[:, 2 * D:3 * D].astype(jnp.float32)

    def reim(w):                                   # [D, D] -> (re [D, D/2], im [D, D/2])
        w4 = w.reshape(D, H, hd2, 2)               # col = h*hd + 2j + p  -> (h, j, p)
        return w4[..., 0].reshape(D, H * hd2), w4[..., 1].reshape(D, H * hd2)

    q_re_w, q_im_w = reim(wq)
    k_re_w, k_im_w = reim(wk)
    w_packed = jnp.concatenate([q_re_w, q_im_w, k_re_w, k_im_w, wv],
                               axis=-1).astype(jnp.bfloat16)           # [D, 3D]
    wo_b = wo.astype(jnp.bfloat16)                                     # [D, D]

    # ---- RoPE tables: single [C, D/2] slab (tiled over heads along lanes),
    #      broadcast over the RB row axis inside the kernel.
    theta = 10000.0
    freqs = 1.0 / (theta ** (jnp.arange(0, hd, 2, dtype=jnp.float32) / hd))   # [hd/2]
    ang = jnp.arange(C, dtype=jnp.float32)[:, None] * freqs[None, :]          # [C, hd/2]
    cos_t = jnp.tile(jnp.cos(ang), (1, H))                                    # [C, D/2]
    sin_t = jnp.tile(jnp.sin(ang), (1, H))

    # ---- additive key-mask bias (flat [BR, C]; large-but-finite constant).
    if mask is None:
        bias = jnp.zeros((BR, C), jnp.float32)
    else:
        bias = jnp.where(mask.reshape(BR, C), 0.0, _MASK_BIAS).astype(jnp.float32)

    mf = m.reshape(BR * C, D).astype(jnp.bfloat16)

    grid = (BR // RB,)
    kernel = _make_kernel(RB, C, D, H)
    vmem_limit = int(min(budget, max(32 << 20, 2 * _vmem_bytes_estimate(RB, C, D, H))))

    out = pl.pallas_call(
        kernel,
        out_shape=jax.ShapeDtypeStruct((BR * C, D), jnp.float32),
        grid_spec=pltpu.PrefetchScalarGridSpec(
            num_scalar_prefetch=0,
            grid=grid,
            in_specs=[
                pl.BlockSpec((RB * C, D), lambda i: (i, 0)),      # m rows
                pl.BlockSpec((RB, C), lambda i: (i, 0)),          # key-mask bias
                pl.BlockSpec((D, 3 * D), lambda i: (0, 0)),       # packed c_attn (grid-invariant)
                pl.BlockSpec((C, D // 2), lambda i: (0, 0)),      # cos table
                pl.BlockSpec((C, D // 2), lambda i: (0, 0)),      # sin table
                pl.BlockSpec((D, D), lambda i: (0, 0)),           # c_proj (grid-invariant)
            ],
            out_specs=pl.BlockSpec((RB * C, D), lambda i: (i, 0)),
            scratch_shapes=[pltpu.VMEM((RB, C, D), jnp.bfloat16)],  # per-head ctx accumulator
        ),
        compiler_params=pltpu.CompilerParams(
            dimension_semantics=("parallel",),
            vmem_limit_bytes=vmem_limit,
        ),
    )(mf, bias, w_packed, cos_t, sin_t, wo_b)

    # TODO(synk): return_attn_weight=True, gating, attention dropout, GQA
    # (num_kv_heads < num_heads) and the chunk_size/chunk_layer path are not
    # implemented (inference defaults exercise none of them).
    return out.reshape(B, R, C, D), None


def ref_msa_row_attention(m, mask, wqkv, wo, num_heads):
    """Pure-JAX f32 reference matching the PyTorch forward (eval mode)."""
    B, R, C, D = m.shape
    hd = D // num_heads
    qkv = jnp.einsum("brcd,de->brce", m, wqkv)
    q, k, v = qkv[..., :D], qkv[..., D:2 * D], qkv[..., 2 * D:]
    q = q.reshape(B, R, C, num_heads, hd)
    k = k.reshape(B, R, C, num_heads, hd)
    v = v.reshape(B, R, C, num_heads, hd)

    theta = 10000.0
    freqs = 1.0 / (theta ** (jnp.arange(0, hd, 2, dtype=jnp.float32) / hd))
    ang = jnp.outer(jnp.arange(C, dtype=jnp.float32), freqs)
    cos = jnp.cos(ang)[None, None, :, None, :]
    sin = jnp.sin(ang)[None, None, :, None, :]

    def rope(x):
        x2 = x.reshape(x.shape[:-1] + (hd // 2, 2))
        xr, xi = x2[..., 0], x2[..., 1]
        yr = xr * cos - xi * sin
        yi = xr * sin + xi * cos
        return jnp.stack([yr, yi], axis=-1).reshape(x.shape)

    q, k = rope(q), rope(k)
    qT = jnp.swapaxes(q, -2, -3)
    kT = jnp.swapaxes(k, -2, -3)
    vT = jnp.swapaxes(v, -2, -3)
    s = jnp.einsum("brhqd,brhkd->brhqk", qT, kT) / math.sqrt(hd)
    key_mask = mask[:, :, None, None, :]
    s = jnp.where(key_mask, s, jnp.finfo(jnp.float32).min)
    p = jax.nn.softmax(s, axis=-1)
    y = jnp.einsum("brhqk,brhkd->brhqd", p, vT)
    y = jnp.swapaxes(y, -2, -3).reshape(B, R, C, D)
    return jnp.einsum("brcd,de->brce", y, wo)


if __name__ == "__main__":
    key = jax.random.PRNGKey(0)
    B, R, C = 2, 8, 8          # batch, MSA rows, MSA columns (attention seq axis)
    dim, num_heads = 32, 4     # hidden size, heads (head_dim = 8)
    k1, k2, k3 = jax.random.split(key, 3)

    m = jax.random.normal(k1, (B, R, C, dim), dtype=jnp.float32)
    # mask out the last two columns (keys) of every row
    mask = jnp.ones((B, R, C), dtype=bool).at[..., -2:].set(False)

    # deterministic synthetic parameters (c_attn and c_proj, bias=False)
    wqkv = jax.random.normal(k2, (dim, 3 * dim), dtype=jnp.float32) / math.sqrt(dim)
    wo = jax.random.normal(k3, (dim, dim), dtype=jnp.float32) * 0.02  # 'final' init -> small

    out, attn_w = msa_row_attention(m, mask, wqkv, wo, num_heads)  # auto row_block -> 2 blocks
    out = jax.block_until_ready(out)

    ref = ref_msa_row_attention(m, mask, wqkv, wo, num_heads)
    assert out.shape == (B, R, C, dim)
    assert attn_w is None
    rel_err = float(jnp.max(jnp.abs(out - ref)) / (jnp.max(jnp.abs(ref)) + 1e-8))
    # bf16 MXU operands (f32 accumulation, exact reciprocal) -> modest tolerance
    assert rel_err < 4e-2, f"mismatch vs reference: rel_err={rel_err}"
    print("KERNEL_OK")
</pallas_src>

<mosaic_0001>
module attributes {stable_mosaic.version = 11 : i64} {
  func.func @kernel(%arg0: i32, %arg1: memref<64x32xbf16, #tpu.memory_space<vmem>>, %arg2: memref<8x8xf32, #tpu.memory_space<vmem>>, %arg3: memref<32x96xbf16, #tpu.memory_space<vmem>>, %arg4: memref<8x16xf32, #tpu.memory_space<vmem>>, %arg5: memref<8x16xf32, #tpu.memory_space<vmem>>, %arg6: memref<32x32xbf16, #tpu.memory_space<vmem>>, %arg7: memref<64x32xf32, #tpu.memory_space<vmem>>, %arg8: memref<8x8x32xbf16, #tpu.memory_space<vmem>>) attributes {dimension_semantics = [#tpu.dimension_semantics<parallel>], iteration_bounds = array<i64: 2>, scalar_prefetch = 0 : i64, scratch_operands = 1 : i64, tpu.core_type = #tpu.core_type<tc>, window_params = [{transform_indices = @transform_0, window_bounds = array<i64: 64, 32>}, {transform_indices = @transform_1, window_bounds = array<i64: 8, 8>}, {pipeline_mode = #tpu.pipeline_mode<synchronous>, transform_indices = @transform_2, window_bounds = array<i64: 32, 96>}, {pipeline_mode = #tpu.pipeline_mode<synchronous>, transform_indices = @transform_3, window_bounds = array<i64: 8, 16>}, {pipeline_mode = #tpu.pipeline_mode<synchronous>, transform_indices = @transform_4, window_bounds = array<i64: 8, 16>}, {pipeline_mode = #tpu.pipeline_mode<synchronous>, transform_indices = @transform_5, window_bounds = array<i64: 32, 32>}, {transform_indices = @transform_6, window_bounds = array<i64: 64, 32>}]} {
    %c0 = arith.constant 0 : index
    %c0_0 = arith.constant 0 : index
    %0 = vector.load %arg1[%c0, %c0_0] : memref<64x32xbf16, #tpu.memory_space<vmem>>, vector<64x32xbf16>
    %c0_1 = arith.constant 0 : index
    %c0_2 = arith.constant 0 : index
    %1 = vector.load %arg3[%c0_1, %c0_2] : memref<32x96xbf16, #tpu.memory_space<vmem>>, vector<32x96xbf16>
    %cst = arith.constant dense<0.000000e+00> : vector<64x96xf32>
    %2 = tpu.matmul %0, %1, %cst {dimension_numbers = #tpu.dot_dimension_numbers<[1], [0], [0], [1], [0, 0, 1, 1], [], []>} : vector<64x32xbf16>, vector<32x96xbf16>, vector<64x96xf32> -> vector<64x96xf32>
    %3 = vector.shape_cast %2 : vector<64x96xf32> to vector<8x8x96xf32>
    %c0_3 = arith.constant 0 : index
    %c0_4 = arith.constant 0 : index
    %4 = vector.load %arg4[%c0_3, %c0_4] : memref<8x16xf32, #tpu.memory_space<vmem>>, vector<8x16xf32>
    %5 = vector.shape_cast %4 : vector<8x16xf32> to vector<1x8x16xf32>
    %c0_5 = arith.constant 0 : index
    %c0_6 = arith.constant 0 : index
    %6 = vector.load %arg5[%c0_5, %c0_6] : memref<8x16xf32, #tpu.memory_space<vmem>>, vector<8x16xf32>
    %7 = vector.shape_cast %6 : vector<8x16xf32> to vector<1x8x16xf32>
    %8 = vector.extract_strided_slice %3 {offsets = [0, 0, 0], sizes = [8, 8, 16], strides = [1, 1, 1]} : vector<8x8x96xf32> to vector<8x8x16xf32>
    %9 = vector.extract_strided_slice %3 {offsets = [0, 0, 16], sizes = [8, 8, 16], strides = [1, 1, 1]} : vector<8x8x96xf32> to vector<8x8x16xf32>
    %10 = vector.extract_strided_slice %3 {offsets = [0, 0, 32], sizes = [8, 8, 16], strides = [1, 1, 1]} : vector<8x8x96xf32> to vector<8x8x16xf32>
    %11 = vector.extract_strided_slice %3 {offsets = [0, 0, 48], sizes = [8, 8, 16], strides = [1, 1, 1]} : vector<8x8x96xf32> to vector<8x8x16xf32>
    %12 = vector.broadcast %5 : vector<1x8x16xf32> to vector<8x8x16xf32>
    %13 = arith.mulf %8, %12 : vector<8x8x16xf32>
    %14 = vector.broadcast %7 : vector<1x8x16xf32> to vector<8x8x16xf32>
    %15 = arith.mulf %9, %14 : vector<8x8x16xf32>
    %16 = arith.subf %13, %15 : vector<8x8x16xf32>
    %17 = arith.truncf %16 : vector<8x8x16xf32> to vector<8x8x16xbf16>
    %18 = vector.broadcast %5 : vector<1x8x16xf32> to vector<8x8x16xf32>
    %19 = arith.mulf %9, %18 : vector<8x8x16xf32>
    %20 = vector.broadcast %7 : vector<1x8x16xf32> to vector<8x8x16xf32>
    %21 = arith.mulf %8, %20 : vector<8x8x16xf32>
    %22 = arith.addf %19, %21 : vector<8x8x16xf32>
    %23 = arith.truncf %22 : vector<8x8x16xf32> to vector<8x8x16xbf16>
    %24 = vector.broadcast %5 : vector<1x8x16xf32> to vector<8x8x16xf32>
    %25 = arith.mulf %10, %24 : vector<8x8x16xf32>
    %26 = vector.broadcast %7 : vector<1x8x16xf32> to vector<8x8x16xf32>
    %27 = arith.mulf %11, %26 : vector<8x8x16xf32>
    %28 = arith.subf %25, %27 : vector<8x8x16xf32>
    %29 = arith.truncf %28 : vector<8x8x16xf32> to vector<8x8x16xbf16>
    %30 = vector.broadcast %5 : vector<1x8x16xf32> to vector<8x8x16xf32>
    %31 = arith.mulf %11, %30 : vector<8x8x16xf32>
    %32 = vector.broadcast %7 : vector<1x8x16xf32> to vector<8x8x16xf32>
    %33 = arith.mulf %10, %32 : vector<8x8x16xf32>
    %34 = arith.addf %31, %33 : vector<8x8x16xf32>
    %35 = arith.truncf %34 : vector<8x8x16xf32> to vector<8x8x16xbf16>
    %36 = vector.extract_strided_slice %3 {offsets = [0, 0, 64], sizes = [8, 8, 32], strides = [1, 1, 1]} : vector<8x8x96xf32> to vector<8x8x32xf32>
    %37 = arith.truncf %36 : vector<8x8x32xf32> to vector<8x8x32xbf16>
    %c0_7 = arith.constant 0 : index
    %c0_8 = arith.constant 0 : index
    %38 = vector.load %arg2[%c0_7, %c0_8] : memref<8x8xf32, #tpu.memory_space<vmem>>, vector<8x8xf32>
    %39 = vector.shape_cast %38 : vector<8x8xf32> to vector<8x1x8xf32>
    %40 = vector.extract_strided_slice %17 {offsets = [0, 0, 0], sizes = [8, 8, 4], strides = [1, 1, 1]} : vector<8x8x16xbf16> to vector<8x8x4xbf16>
    %41 = vector.extract_strided_slice %29 {offsets = [0, 0, 0], sizes = [8, 8, 4], strides = [1, 1, 1]} : vector<8x8x16xbf16> to vector<8x8x4xbf16>
    "tpu.trace_start"() <{level = 10 : i32, message = "bqd,bkd->bqk"}> : () -> ()
    %cst_9 = arith.constant dense<0.000000e+00> : vector<8x8x8xf32>
    %42 = tpu.matmul %40, %41, %cst_9 {dimension_numbers = #tpu.dot_dimension_numbers<[2], [2], [1], [1], [0, 0, 0, 1, 1, 1], [0], [0]>} : vector<8x8x4xbf16>, vector<8x8x4xbf16>, vector<8x8x8xf32> -> vector<8x8x8xf32>
    "tpu.trace_stop"() : () -> ()
    %43 = vector.extract_strided_slice %23 {offsets = [0, 0, 0], sizes = [8, 8, 4], strides = [1, 1, 1]} : vector<8x8x16xbf16> to vector<8x8x4xbf16>
    %44 = vector.extract_strided_slice %35 {offsets = [0, 0, 0], sizes = [8, 8, 4], strides = [1, 1, 1]} : vector<8x8x16xbf16> to vector<8x8x4xbf16>
    "tpu.trace_start"() <{level = 10 : i32, message = "bqd,bkd->bqk"}> : () -> ()
    %cst_10 = arith.constant dense<0.000000e+00> : vector<8x8x8xf32>
    %45 = tpu.matmul %43, %44, %cst_10 {dimension_numbers = #tpu.dot_dimension_numbers<[2], [2], [1], [1], [0, 0, 0, 1, 1, 1], [0], [0]>} : vector<8x8x4xbf16>, vector<8x8x4xbf16>, vector<8x8x8xf32> -> vector<8x8x8xf32>
    "tpu.trace_stop"() : () -> ()
    %46 = arith.addf %42, %45 : vector<8x8x8xf32>
    %47 = vector.broadcast %39 : vector<8x1x8xf32> to vector<8x8x8xf32>
    %48 = arith.addf %46, %47 : vector<8x8x8xf32>
    %cst_11 = arith.constant dense<0xFF800000> : vector<8x8xf32>
    %49 = vector.multi_reduction <maximumf>, %48, %cst_11 [2] : vector<8x8x8xf32> to vector<8x8xf32>
    %50 = vector.shape_cast %49 : vector<8x8xf32> to vector<8x8x1xf32>
    %51 = vector.broadcast %50 : vector<8x8x1xf32> to vector<8x8x8xf32>
    %52 = arith.subf %48, %51 : vector<8x8x8xf32>
    %53 = math.exp %52 : vector<8x8x8xf32>
    %cst_12 = arith.constant dense<0.000000e+00> : vector<8x8xf32>
    %54 = vector.multi_reduction <add>, %53, %cst_12 [2] : vector<8x8x8xf32> to vector<8x8xf32>
    %55 = vector.shape_cast %54 : vector<8x8xf32> to vector<8x8x1xf32>
    %56 = tpu.reciprocal %55 : vector<8x8x1xf32> -> vector<8x8x1xf32>
    %57 = vector.broadcast %56 : vector<8x8x1xf32> to vector<8x8x8xf32>
    %58 = arith.mulf %53, %57 : vector<8x8x8xf32>
    %59 = arith.truncf %58 : vector<8x8x8xf32> to vector<8x8x8xbf16>
    %60 = vector.extract_strided_slice %37 {offsets = [0, 0, 0], sizes = [8, 8, 8], strides = [1, 1, 1]} : vector<8x8x32xbf16> to vector<8x8x8xbf16>
    "tpu.trace_start"() <{level = 10 : i32, message = "bqk,bkd->bqd"}> : () -> ()
    %cst_13 = arith.constant dense<0.000000e+00> : vector<8x8x8xf32>
    %61 = tpu.matmul %59, %60, %cst_13 {dimension_numbers = #tpu.dot_dimension_numbers<[2], [1], [1], [2], [0, 0, 0, 1, 1, 2], [0], [0]>} : vector<8x8x8xbf16>, vector<8x8x8xbf16>, vector<8x8x8xf32> -> vector<8x8x8xf32>
    "tpu.trace_stop"() : () -> ()
    %62 = arith.truncf %61 : vector<8x8x8xf32> to vector<8x8x8xbf16>
    %c0_14 = arith.constant 0 : index
    %c0_15 = arith.constant 0 : index
    %c0_16 = arith.constant 0 : index
    %63 = vector.load %arg8[%c0_14, %c0_15, %c0_16] : memref<8x8x32xbf16, #tpu.memory_space<vmem>>, vector<8x8x8xbf16>
    tpu.vector_store %arg8[%c0_14, %c0_15, %c0_16], %62 {strides = array<i32>} : memref<8x8x32xbf16, #tpu.memory_space<vmem>>, vector<8x8x8xbf16>,
    %64 = vector.extract_strided_slice %17 {offsets = [0, 0, 4], sizes = [8, 8, 4], strides = [1, 1, 1]} : vector<8x8x16xbf16> to vector<8x8x4xbf16>
    %65 = vector.extract_strided_slice %29 {offsets = [0, 0, 4], sizes = [8, 8, 4], strides = [1, 1, 1]} : vector<8x8x16xbf16> to vector<8x8x4xbf16>
    "tpu.trace_start"() <{level = 10 : i32, message = "bqd,bkd->bqk"}> : () -> ()
    %cst_17 = arith.constant dense<0.000000e+00> : vector<8x8x8xf32>
    %66 = tpu.matmul %64, %65, %cst_17 {dimension_numbers = #tpu.dot_dimension_numbers<[2], [2], [1], [1], [0, 0, 0, 1, 1, 1], [0], [0]>} : vector<8x8x4xbf16>, vector<8x8x4xbf16>, vector<8x8x8xf32> -> vector<8x8x8xf32>
    "tpu.trace_stop"() : () -> ()
    %67 = vector.extract_strided_slice %23 {offsets = [0, 0, 4], sizes = [8, 8, 4], strides = [1, 1, 1]} : vector<8x8x16xbf16> to vector<8x8x4xbf16>
    %68 = vector.extract_strided_slice %35 {offsets = [0, 0, 4], sizes = [8, 8, 4], strides = [1, 1, 1]} : vector<8x8x16xbf16> to vector<8x8x4xbf16>
    "tpu.trace_start"() <{level = 10 : i32, message = "bqd,bkd->bqk"}> : () -> ()
    %cst_18 = arith.constant dense<0.000000e+00> : vector<8x8x8xf32>
    %69 = tpu.matmul %67, %68, %cst_18 {dimension_numbers = #tpu.dot_dimension_numbers<[2], [2], [1], [1], [0, 0, 0, 1, 1, 1], [0], [0]>} : vector<8x8x4xbf16>, vector<8x8x4xbf16>, vector<8x8x8xf32> -> vector<8x8x8xf32>
    "tpu.trace_stop"() : () -> ()
    %70 = arith.addf %66, %69 : vector<8x8x8xf32>
    %71 = vector.broadcast %39 : vector<8x1x8xf32> to vector<8x8x8xf32>
    %72 = arith.addf %70, %71 : vector<8x8x8xf32>
    %cst_19 = arith.constant dense<0xFF800000> : vector<8x8xf32>
    %73 = vector.multi_reduction <maximumf>, %72, %cst_19 [2] : vector<8x8x8xf32> to vector<8x8xf32>
    %74 = vector.shape_cast %73 : vector<8x8xf32> to vector<8x8x1xf32>
    %75 = vector.broadcast %74 : vector<8x8x1xf32> to vector<8x8x8xf32>
    %76 = arith.subf %72, %75 : vector<8x8x8xf32>
    %77 = math.exp %76 : vector<8x8x8xf32>
    %cst_20 = arith.constant dense<0.000000e+00> : vector<8x8xf32>
    %78 = vector.multi_reduction <add>, %77, %cst_20 [2] : vector<8x8x8xf32> to vector<8x8xf32>
    %79 = vector.shape_cast %78 : vector<8x8xf32> to vector<8x8x1xf32>
    %80 = tpu.reciprocal %79 : vector<8x8x1xf32> -> vector<8x8x1xf32>
    %81 = vector.broadcast %80 : vector<8x8x1xf32> to vector<8x8x8xf32>
    %82 = arith.mulf %77, %81 : vector<8x8x8xf32>
    %83 = arith.truncf %82 : vector<8x8x8xf32> to vector<8x8x8xbf16>
    %84 = vector.extract_strided_slice %37 {offsets = [0, 0, 8], sizes = [8, 8, 8], strides = [1, 1, 1]} : vector<8x8x32xbf16> to vector<8x8x8xbf16>
    "tpu.trace_start"() <{level = 10 : i32, message = "bqk,bkd->bqd"}> : () -> ()
    %cst_21 = arith.constant dense<0.000000e+00> : vector<8x8x8xf32>
    %85 = tpu.matmul %83, %84, %cst_21 {dimension_numbers = #tpu.dot_dimension_numbers<[2], [1], [1], [2], [0, 0, 0, 1, 1, 2], [0], [0]>} : vector<8x8x8xbf16>, vector<8x8x8xbf16>, vector<8x8x8xf32> -> vector<8x8x8xf32>
    "tpu.trace_stop"() : () -> ()
    %86 = arith.truncf %85 : vector<8x8x8xf32> to vector<8x8x8xbf16>
    %c0_22 = arith.constant 0 : index
    %c0_23 = arith.constant 0 : index
    %c8 = arith.constant 8 : index
    %87 = vector.load %arg8[%c0_22, %c0_23, %c8] : memref<8x8x32xbf16, #tpu.memory_space<vmem>>, vector<8x8x8xbf16>
    tpu.vector_store %arg8[%c0_22, %c0_23, %c8], %86 {strides = array<i32>} : memref<8x8x32xbf16, #tpu.memory_space<vmem>>, vector<8x8x8xbf16>,
    %88 = vector.extract_strided_slice %17 {offsets = [0, 0, 8], sizes = [8, 8, 4], strides = [1, 1, 1]} : vector<8x8x16xbf16> to vector<8x8x4xbf16>
    %89 = vector.extract_strided_slice %29 {offsets = [0, 0, 8], sizes = [8, 8, 4], strides = [1, 1, 1]} : vector<8x8x16xbf16> to vector<8x8x4xbf16>
    "tpu.trace_start"() <{level = 10 : i32, message = "bqd,bkd->bqk"}> : () -> ()
    %cst_24 = arith.constant dense<0.000000e+00> : vector<8x8x8xf32>
    %90 = tpu.matmul %88, %89, %cst_24 {dimension_numbers = #tpu.dot_dimension_numbers<[2], [2], [1], [1], [0, 0, 0, 1, 1, 1], [0], [0]>} : vector<8x8x4xbf16>, vector<8x8x4xbf16>, vector<8x8x8xf32> -> vector<8x8x8xf32>
    "tpu.trace_stop"() : () -> ()
    %91 = vector.extract_strided_slice %23 {offsets = [0, 0, 8], sizes = [8, 8, 4], strides = [1, 1, 1]} : vector<8x8x16xbf16> to vector<8x8x4xbf16>
    %92 = vector.extract_strided_slice %35 {offsets = [0, 0, 8], sizes = [8, 8, 4], strides = [1, 1, 1]} : vector<8x8x16xbf16> to vector<8x8x4xbf16>
    "tpu.trace_start"() <{level = 10 : i32, message = "bqd,bkd->bqk"}> : () -> ()
    %cst_25 = arith.constant dense<0.000000e+00> : vector<8x8x8xf32>
    %93 = tpu.matmul %91, %92, %cst_25 {dimension_numbers = #tpu.dot_dimension_numbers<[2], [2], [1], [1], [0, 0, 0, 1, 1, 1], [0], [0]>} : vector<8x8x4xbf16>, vector<8x8x4xbf16>, vector<8x8x8xf32> -> vector<8x8x8xf32>
    "tpu.trace_stop"() : () -> ()
    %94 = arith.addf %90, %93 : vector<8x8x8xf32>
    %95 = vector.broadcast %39 : vector<8x1x8xf32> to vector<8x8x8xf32>
    %96 = arith.addf %94, %95 : vector<8x8x8xf32>
    %cst_26 = arith.constant dense<0xFF800000> : vector<8x8xf32>
    %97 = vector.multi_reduction <maximumf>, %96, %cst_26 [2] : vector<8x8x8xf32> to vector<8x8xf32>
    %98 = vector.shape_cast %97 : vector<8x8xf32> to vector<8x8x1xf32>
    %99 = vector.broadcast %98 : vector<8x8x1xf32> to vector<8x8x8xf32>
    %100 = arith.subf %96, %99 : vector<8x8x8xf32>
    %101 = math.exp %100 : vector<8x8x8xf32>
    %cst_27 = arith.constant dense<0.000000e+00> : vector<8x8xf32>
    %102 = vector.multi_reduction <add>, %101, %cst_27 [2] : vector<8x8x8xf32> to vector<8x8xf32>
    %103 = vector.shape_cast %102 : vector<8x8xf32> to vector<8x8x1xf32>
    %104 = tpu.reciprocal %103 : vector<8x8x1xf32> -> vector<8x8x1xf32>
    %105 = vector.broadcast %104 : vector<8x8x1xf32> to vector<8x8x8xf32>
    %106 = arith.mulf %101, %105 : vector<8x8x8xf32>
    %107 = arith.truncf %106 : vector<8x8x8xf32> to vector<8x8x8xbf16>
    %108 = vector.extract_strided_slice %37 {offsets = [0, 0, 16], sizes = [8, 8, 8], strides = [1, 1, 1]} : vector<8x8x32xbf16> to vector<8x8x8xbf16>
    "tpu.trace_start"() <{level = 10 : i32, message = "bqk,bkd->bqd"}> : () -> ()
    %cst_28 = arith.constant dense<0.000000e+00> : vector<8x8x8xf32>
    %109 = tpu.matmul %107, %108, %cst_28 {dimension_numbers = #tpu.dot_dimension_numbers<[2], [1], [1], [2], [0, 0, 0, 1, 1, 2], [0], [0]>} : vector<8x8x8xbf16>, vector<8x8x8xbf16>, vector<8x8x8xf32> -> vector<8x8x8xf32>
    "tpu.trace_stop"() : () -> ()
    %110 = arith.truncf %109 : vector<8x8x8xf32> to vector<8x8x8xbf16>
    %c0_29 = arith.constant 0 : index
    %c0_30 = arith.constant 0 : index
    %c16 = arith.constant 16 : index
    %111 = vector.load %arg8[%c0_29, %c0_30, %c16] : memref<8x8x32xbf16, #tpu.memory_space<vmem>>, vector<8x8x8xbf16>
    tpu.vector_store %arg8[%c0_29, %c0_30, %c16], %110 {strides = array<i32>} : memref<8x8x32xbf16, #tpu.memory_space<vmem>>, vector<8x8x8xbf16>,
    %112 = vector.extract_strided_slice %17 {offsets = [0, 0, 12], sizes = [8, 8, 4], strides = [1, 1, 1]} : vector<8x8x16xbf16> to vector<8x8x4xbf16>
    %113 = vector.extract_strided_slice %29 {offsets = [0, 0, 12], sizes = [8, 8, 4], strides = [1, 1, 1]} : vector<8x8x16xbf16> to vector<8x8x4xbf16>
    "tpu.trace_start"() <{level = 10 : i32, message = "bqd,bkd->bqk"}> : () -> ()
    %cst_31 = arith.constant dense<0.000000e+00> : vector<8x8x8xf32>
    %114 = tpu.matmul %112, %113, %cst_31 {dimension_numbers = #tpu.dot_dimension_numbers<[2], [2], [1], [1], [0, 0, 0, 1, 1, 1], [0], [0]>} : vector<8x8x4xbf16>, vector<8x8x4xbf16>, vector<8x8x8xf32> -> vector<8x8x8xf32>
    "tpu.trace_stop"() : () -> ()
    %115 = vector.extract_strided_slice %23 {offsets = [0, 0, 12], sizes = [8, 8, 4], strides = [1, 1, 1]} : vector<8x8x16xbf16> to vector<8x8x4xbf16>
    %116 = vector.extract_strided_slice %35 {offsets = [0, 0, 12], sizes = [8, 8, 4], strides = [1, 1, 1]} : vector<8x8x16xbf16> to vector<8x8x4xbf16>
    "tpu.trace_start"() <{level = 10 : i32, message = "bqd,bkd->bqk"}> : () -> ()
    %cst_32 = arith.constant dense<0.000000e+00> : vector<8x8x8xf32>
    %117 = tpu.matmul %115, %116, %cst_32 {dimension_numbers = #tpu.dot_dimension_numbers<[2], [2], [1], [1], [0, 0, 0, 1, 1, 1], [0], [0]>} : vector<8x8x4xbf16>, vector<8x8x4xbf16>, vector<8x8x8xf32> -> vector<8x8x8xf32>
    "tpu.trace_stop"() : () -> ()
    %118 = arith.addf %114, %117 : vector<8x8x8xf32>
    %119 = vector.broadcast %39 : vector<8x1x8xf32> to vector<8x8x8xf32>
    %120 = arith.addf %118, %119 : vector<8x8x8xf32>
    %cst_33 = arith.constant dense<0xFF800000> : vector<8x8xf32>
    %121 = vector.multi_reduction <maximumf>, %120, %cst_33 [2] : vector<8x8x8xf32> to vector<8x8xf32>
    %122 = vector.shape_cast %121 : vector<8x8xf32> to vector<8x8x1xf32>
    %123 = vector.broadcast %122 : vector<8x8x1xf32> to vector<8x8x8xf32>
    %124 = arith.subf %120, %123 : vector<8x8x8xf32>
    %125 = math.exp %124 : vector<8x8x8xf32>
    %cst_34 = arith.constant dense<0.000000e+00> : vector<8x8xf32>
    %126 = vector.multi_reduction <add>, %125, %cst_34 [2] : vector<8x8x8xf32> to vector<8x8xf32>
    %127 = vector.shape_cast %126 : vector<8x8xf32> to vector<8x8x1xf32>
    %128 = tpu.reciprocal %127 : vector<8x8x1xf32> -> vector<8x8x1xf32>
    %129 = vector.broadcast %128 : vector<8x8x1xf32> to vector<8x8x8xf32>
    %130 = arith.mulf %125, %129 : vector<8x8x8xf32>
    %131 = arith.truncf %130 : vector<8x8x8xf32> to vector<8x8x8xbf16>
    %132 = vector.extract_strided_slice %37 {offsets = [0, 0, 24], sizes = [8, 8, 8], strides = [1, 1, 1]} : vector<8x8x32xbf16> to vector<8x8x8xbf16>
    "tpu.trace_start"() <{level = 10 : i32, message = "bqk,bkd->bqd"}> : () -> ()
    %cst_35 = arith.constant dense<0.000000e+00> : vector<8x8x8xf32>
    %133 = tpu.matmul %131, %132, %cst_35 {dimension_numbers = #tpu.dot_dimension_numbers<[2], [1], [1], [2], [0, 0, 0, 1, 1, 2], [0], [0]>} : vector<8x8x8xbf16>, vector<8x8x8xbf16>, vector<8x8x8xf32> -> vector<8x8x8xf32>
    "tpu.trace_stop"() : () -> ()
    %134 = arith.truncf %133 : vector<8x8x8xf32> to vector<8x8x8xbf16>
    %c0_36 = arith.constant 0 : index
    %c0_37 = arith.constant 0 : index
    %c24 = arith.constant 24 : index
    %135 = vector.load %arg8[%c0_36, %c0_37, %c24] : memref<8x8x32xbf16, #tpu.memory_space<vmem>>, vector<8x8x8xbf16>
    tpu.vector_store %arg8[%c0_36, %c0_37, %c24], %134 {strides = array<i32>} : memref<8x8x32xbf16, #tpu.memory_space<vmem>>, vector<8x8x8xbf16>,
    %c0_38 = arith.constant 0 : index
    %c0_39 = arith.constant 0 : index
    %c0_40 = arith.constant 0 : index
    %136 = vector.load %arg8[%c0_38, %c0_39, %c0_40] : memref<8x8x32xbf16, #tpu.memory_space<vmem>>, vector<8x8x32xbf16>
    %137 = vector.shape_cast %136 : vector<8x8x32xbf16> to vector<64x32xbf16>
    %c0_41 = arith.constant 0 : index
    %c0_42 = arith.constant 0 : index
    %138 = vector.load %arg6[%c0_41, %c0_42] : memref<32x32xbf16, #tpu.memory_space<vmem>>, vector<32x32xbf16>
    %cst_43 = arith.constant dense<0.000000e+00> : vector<64x32xf32>
    %139 = tpu.matmul %137, %138, %cst_43 {dimension_numbers = #tpu.dot_dimension_numbers<[1], [0], [0], [1], [0, 0, 1, 1], [], []>} : vector<64x32xbf16>, vector<32x32xbf16>, vector<64x32xf32> -> vector<64x32xf32>
    %c0_44 = arith.constant 0 : index
    %c0_45 = arith.constant 0 : index
    %140 = vector.load %arg7[%c0_44, %c0_45] : memref<64x32xf32, #tpu.memory_space<vmem>>, vector<64x32xf32>
    tpu.vector_store %arg7[%c0_44, %c0_45], %139 {strides = array<i32>} : memref<64x32xf32, #tpu.memory_space<vmem>>, vector<64x32xf32>,
    return
  }
  func.func @transform_0(%arg0: i32) -> (i32, i32) {
    %c0_i32 = arith.constant 0 : i32
    %c0_i32_0 = arith.constant 0 : i32
    return %arg0, %c0_i32 : i32, i32
  }
  func.func @transform_1(%arg0: i32) -> (i32, i32) {
    %c0_i32 = arith.constant 0 : i32
    %c0_i32_0 = arith.constant 0 : i32
    return %arg0, %c0_i32 : i32, i32
  }
  func.func @transform_2(%arg0: i32) -> (i32, i32) {
    %c0_i32 = arith.constant 0 : i32
    %c0_i32_0 = arith.constant 0 : i32
    %c0_i32_1 = arith.constant 0 : i32
    return %c0_i32, %c0_i32_0 : i32, i32
  }
  func.func @transform_3(%arg0: i32) -> (i32, i32) {
    %c0_i32 = arith.constant 0 : i32
    %c0_i32_0 = arith.constant 0 : i32
    %c0_i32_1 = arith.constant 0 : i32
    return %c0_i32, %c0_i32_0 : i32, i32
  }
  func.func @transform_4(%arg0: i32) -> (i32, i32) {
    %c0_i32 = arith.constant 0 : i32
    %c0_i32_0 = arith.constant 0 : i32
    %c0_i32_1 = arith.constant 0 : i32
    return %c0_i32, %c0_i32_0 : i32, i32
  }
  func.func @transform_5(%arg0: i32) -> (i32, i32) {
    %c0_i32 = arith.constant 0 : i32
    %c0_i32_0 = arith.constant 0 : i32
    %c0_i32_1 = arith.constant 0 : i32
    return %c0_i32, %c0_i32_0 : i32, i32
  }
  func.func @transform_6(%arg0: i32) -> (i32, i32) {
    %c0_i32 = arith.constant 0 : i32
    %c0_i32_0 = arith.constant 0 : i32
    return %arg0, %c0_i32 : i32, i32
  }
}

</mosaic_0001>

<llo_original>
// kernel: tpu_custom_call.1
$region0: #{tpu_custom_call.1}
  #allocation0 [shape = 'u32[]', space=smem, size = 0x4, offset = 0x4, fixed_abs, tag = 'smem constant byte address 0x4 - core index']
  #allocation1 [shape = 'u32[72,128]{1,0:T(1,128)}', space=vmem, size = 0x9000, scoped, tag = 'internal scratch']
  #allocation2 [shape = 'bf16[8,8,32]{2,1,0:T(8,128)(2,1)}', space=vmem, size = 0x4000, scoped, tag = 'scratch operand']
  %s0 = inlined_call_operand.vmem [shape: bf16[128,32], index: 0, kind: input, shape index: {}]
  %s1 = inlined_call_operand.vmem [shape: f32[16,8], index: 1, kind: input, shape index: {}]
  %s2 = inlined_call_operand.vmem [shape: bf16[32,96], index: 2, kind: input, shape index: {}]
  %s3 = inlined_call_operand.vmem [shape: f32[8,16], index: 3, kind: input, shape index: {}]
  %s4 = inlined_call_operand.vmem [shape: f32[8,16], index: 4, kind: input, shape index: {}]
  %s5 = inlined_call_operand.vmem [shape: bf16[32,32], index: 5, kind: input, shape index: {}]
  %s6 = inlined_call_operand.vmem [shape: f32[128,32], index: 6, kind: output, shape index: {}]
  %s7 = sld [smem:[#allocation0]]
  $region57: #{tpu_custom_call.1} parent=0
    _
  %s9 = ssub.s32 1, %s7
  %s10 = scalar_select 0, %s9, %s7
  loop: start=0, step=1, limit=4
  $region2: #{tpu_custom_call.1} parent=0 // loop_pre_header
    _
  $region3: #{tpu_custom_call.1} parent=0 // loop_header
    %s12 = sphi 0, %s16
    %p13 = scmp.ge.s32.totalorder %s12, 4
    %s22 = sphi 0, %s24
    %s25 = sphi 0, %s22
    %s26 = sphi 0, %s25
    %s42 = sphi 0, %s26
    %s48 = sphi 0, %s50
    %s51 = sphi 0, %s48
    %s52 = sphi 0, %s51
    %s68 = sphi 0, %s52
    %s72 = sphi 0, %s72
    %s74 = sphi 0, %s72
    %s75 = sphi 0, %s74
    %s89 = sphi 0, %s75
    %s93 = sphi 0, %s93
    %s95 = sphi 0, %s93
    %s96 = sphi 0, %s95
    %s110 = sphi 0, %s96
    %s114 = sphi 0, %s114
    %s116 = sphi 0, %s114
    %s117 = sphi 0, %s116
    %s131 = sphi 0, %s117
    %s135 = sphi 0, %s135
    %s137 = sphi 0, %s135
    %s138 = sphi 0, %s137
    %s152 = sphi 0, %s138
    %s158 = sphi 0, %s160
    %s161 = sphi 0, %s158
    %s162 = sphi 0, %s161
    %s178 = sphi 0, %s162
  $region4: #{tpu_custom_call.1} parent=0 // loop_header_branch
    %15 = sbr.rel (%p13) target = $region8
  $region5: #{tpu_custom_call.1} parent=0 // loop_body
    %s17 = ssub.s32 %s12, 1
    %s18 = ssub.s32 %s12, 2
    %s19 = sadd.s32 %s12, 1
    %s20 = ssub.s32 %s12, %s19
    %p21 = scmp.eq.s32.totalorder %s20, 0
    %s23 = sadd.s32 %s22, 1
    %s24 = scalar_select %p21, %s22, %s23
    %p27 = pneg %p21
    %p28 = scmp.eq.s32.totalorder %s12, 1
    %p29 = por %p27, %p28
    %p30 = scmp.ne.s32.totalorder %s22, %s25
    %p31 = scmp.eq.s32.totalorder %s12, 0
    %p32 = por %p30, %p31
    %p33 = scmp.ne.s32.totalorder %s22, %s25
    %p34 = scmp.eq.s32.totalorder %s17, 1
    %p35 = por %p33, %p34
    %p36 = scmp.ne.s32.totalorder %s25, %s26
    %p37 = scmp.eq.s32.totalorder %s17, 0
    %p38 = por %p36, %p37
    %p39 = scmp.ne.s32.totalorder %s25, %s26
    %p40 = scmp.eq.s32.totalorder %s18, 1
    %p41 = por %p39, %p40
    %p43 = scmp.ne.s32.totalorder %s26, %s42
    %p44 = scmp.eq.s32.totalorder %s18, 0
    %p45 = por %p43, %p44
    %s46 = ssub.s32 %s12, %s19
    %p47 = scmp.eq.s32.totalorder %s46, 0
    %s49 = sadd.s32 %s48, 1
    %s50 = scalar_select %p47, %s48, %s49
    %p53 = pneg %p47
    %p54 = scmp.eq.s32.totalorder %s12, 1
    %p55 = por %p53, %p54
    %p56 = scmp.ne.s32.totalorder %s48, %s51
    %p57 = scmp.eq.s32.totalorder %s12, 0
    %p58 = por %p56, %p57
    %p59 = scmp.ne.s32.totalorder %s48, %s51
    %p60 = scmp.eq.s32.totalorder %s17, 1
    %p61 = por %p59, %p60
    %p62 = scmp.ne.s32.totalorder %s51, %s52
    %p63 = scmp.eq.s32.totalorder %s17, 0
    %p64 = por %p62, %p63
    %p65 = scmp.ne.s32.totalorder %s51, %s52
    %p66 = scmp.eq.s32.totalorder %s18, 1
    %p67 = por %p65, %p66
    %p69 = scmp.ne.s32.totalorder %s52, %s68
    %p70 = scmp.eq.s32.totalorder %s18, 0
    %p71 = por %p69, %p70
    %s73 = sadd.s32 %s72, 1
    %p76 = scmp.eq.s32.totalorder %s12, 1
    %p77 = scmp.ne.s32.totalorder %s72, %s74
    %p78 = scmp.eq.s32.totalorder %s12, 0
    %p79 = por %p77, %p78
    %p80 = scmp.ne.s32.totalorder %s72, %s74
    %p81 = scmp.eq.s32.totalorder %s17, 1
    %p82 = por %p80, %p81
    %p83 = scmp.ne.s32.totalorder %s74, %s75
    %p84 = scmp.eq.s32.totalorder %s17, 0
    %p85 = por %p83, %p84
    %p86 = scmp.ne.s32.totalorder %s74, %s75
    %p87 = scmp.eq.s32.totalorder %s18, 1
    %p88 = por %p86, %p87
    %p90 = scmp.ne.s32.totalorder %s75, %s89
    %p91 = scmp.eq.s32.totalorder %s18, 0
    %p92 = por %p90, %p91
    %s94 = sadd.s32 %s93, 1
    %p97 = scmp.eq.s32.totalorder %s12, 1
    %p98 = scmp.ne.s32.totalorder %s93, %s95
    %p99 = scmp.eq.s32.totalorder %s12, 0
    %p100 = por %p98, %p99
    %p101 = scmp.ne.s32.totalorder %s93, %s95
    %p102 = scmp.eq.s32.totalorder %s17, 1
    %p103 = por %p101, %p102
    %p104 = scmp.ne.s32.totalorder %s95, %s96
    %p105 = scmp.eq.s32.totalorder %s17, 0
    %p106 = por %p104, %p105
    %p107 = scmp.ne.s32.totalorder %s95, %s96
    %p108 = scmp.eq.s32.totalorder %s18, 1
    %p109 = por %p107, %p108
    %p111 = scmp.ne.s32.totalorder %s96, %s110
    %p112 = scmp.eq.s32.totalorder %s18, 0
    %p113 = por %p111, %p112
    %s115 = sadd.s32 %s114, 1
    %p118 = scmp.eq.s32.totalorder %s12, 1
    %p119 = scmp.ne.s32.totalorder %s114, %s116
    %p120 = scmp.eq.s32.totalorder %s12, 0
    %p121 = por %p119, %p120
    %p122 = scmp.ne.s32.totalorder %s114, %s116
    %p123 = scmp.eq.s32.totalorder %s17, 1
    %p124 = por %p122, %p123
    %p125 = scmp.ne.s32.totalorder %s116, %s117
    %p126 = scmp.eq.s32.totalorder %s17, 0
    %p127 = por %p125, %p126
    %p128 = scmp.ne.s32.totalorder %s116, %s117
    %p129 = scmp.eq.s32.totalorder %s18, 1
    %p130 = por %p128, %p129
    %p132 = scmp.ne.s32.totalorder %s117, %s131
    %p133 = scmp.eq.s32.totalorder %s18, 0
    %p134 = por %p132, %p133
    %s136 = sadd.s32 %s135, 1
    %p139 = scmp.eq.s32.totalorder %s12, 1
    %p140 = scmp.ne.s32.totalorder %s135, %s137
    %p141 = scmp.eq.s32.totalorder %s12, 0
    %p142 = por %p140, %p141
    %p143 = scmp.ne.s32.totalorder %s135, %s137
    %p144 = scmp.eq.s32.totalorder %s17, 1
    %p145 = por %p143, %p144
    %p146 = scmp.ne.s32.totalorder %s137, %s138
    %p147 = scmp.eq.s32.totalorder %s17, 0
    %p148 = por %p146, %p147
    %p149 = scmp.ne.s32.totalorder %s137, %s138
    %p150 = scmp.eq.s32.totalorder %s18, 1
    %p151 = por %p149, %p150
    %p153 = scmp.ne.s32.totalorder %s138, %s152
    %p154 = scmp.eq.s32.totalorder %s18, 0
    %p155 = por %p153, %p154
    %s156 = ssub.s32 %s12, %s19
    %p157 = scmp.eq.s32.totalorder %s156, 0
    %s159 = sadd.s32 %s158, 1
    %s160 = scalar_select %p157, %s158, %s159
    %p163 = pneg %p157
    %p164 = scmp.eq.s32.totalorder %s12, 1
    %p165 = por %p163, %p164
    %p166 = scmp.ne.s32.totalorder %s158, %s161
    %p167 = scmp.eq.s32.totalorder %s12, 0
    %p168 = por %p166, %p167
    %p169 = scmp.ne.s32.totalorder %s158, %s161
    %p170 = scmp.eq.s32.totalorder %s17, 1
    %p171 = por %p169, %p170
    %p172 = scmp.ne.s32.totalorder %s161, %s162
    %p173 = scmp.eq.s32.totalorder %s17, 0
    %p174 = por %p172, %p173
    %p175 = scmp.ne.s32.totalorder %s161, %s162
    %p176 = scmp.eq.s32.totalorder %s18, 1
    %p177 = por %p175, %p176
    %p179 = scmp.ne.s32.totalorder %s162, %s178
    %p180 = scmp.eq.s32.totalorder %s18, 0
    %p181 = por %p179, %p180
    %p182 = scmp.le.s32.totalorder 1, %s12
    %p183 = scmp.lt.s32.totalorder %s12, 3
    %p184 = pnand %p182, %p183
    %p185 = pneg %p184
    // Predicated region
    $region9: #{tpu_custom_call.1} parent=5 // pred_check
      _
    $region10: #{tpu_custom_call.1} parent=5 // pred_check_branch
      %187 = sbr.rel (%p184) target = $region12
    $region11: #{tpu_custom_call.1} parent=5 // pred_region
      %s188 = ssub.s32 %s12, 1
      // Predicated region
      $region13: #{tpu_custom_call.1} parent=11 // pred_check
        %p189 = pneg %p85
      $region14: #{tpu_custom_call.1} parent=11 // pred_check_branch
        %191 = sbr.rel (%p189) target = $region16
      $region15: #{tpu_custom_call.1} parent=11 // pred_region
        _
      $region16: #{tpu_custom_call.1} parent=11 // pred_fallthru
        _
      // Predicated region
      $region17: #{tpu_custom_call.1} parent=11 // pred_check
        %p192 = pneg %p106
      $region18: #{tpu_custom_call.1} parent=11 // pred_check_branch
        %194 = sbr.rel (%p192) target = $region20
      $region19: #{tpu_custom_call.1} parent=11 // pred_region
        _
      $region20: #{tpu_custom_call.1} parent=11 // pred_fallthru
        _
      // Predicated region
      $region21: #{tpu_custom_call.1} parent=11 // pred_check
        %p195 = pneg %p127
      $region22: #{tpu_custom_call.1} parent=11 // pred_check_branch
        %197 = sbr.rel (%p195) target = $region24
      $region23: #{tpu_custom_call.1} parent=11 // pred_region
        _
      $region24: #{tpu_custom_call.1} parent=11 // pred_fallthru
        _
      // Predicated region
      $region25: #{tpu_custom_call.1} parent=11 // pred_check
        %p198 = pneg %p148
      $region26: #{tpu_custom_call.1} parent=11 // pred_check_branch
        %200 = sbr.rel (%p198) target = $region28
      $region27: #{tpu_custom_call.1} parent=11 // pred_region
        _
      $region28: #{tpu_custom_call.1} parent=11 // pred_fallthru
        _
    $region12: #{tpu_custom_call.1} parent=5 // pred_fallthru
      _
    %p201 = scmp.lt.s32.totalorder %s12, 2
    // Predicated region
    $region29: #{tpu_custom_call.1} parent=5 // pred_check
      %p202 = pneg %p201
    $region30: #{tpu_custom_call.1} parent=5 // pred_check_branch
      %204 = sbr.rel (%p202) target = $region32
    $region31: #{tpu_custom_call.1} parent=5 // pred_region
      // Predicated region
      $region33: #{tpu_custom_call.1} parent=31 // pred_check
        %p205 = pneg %p32
      $region34: #{tpu_custom_call.1} parent=31 // pred_check_branch
        %207 = sbr.rel (%p205) target = $region36
      $region35: #{tpu_custom_call.1} parent=31 // pred_region
        %s208 = smul.u32 8, %s12
        %p209 = scmp.lt.s32.totalorder %s208, 15
        %s210 = scalar_select %p209, %s208, 15
        %s211 = smul.addr %s210, 4
        %s212 = scalar_lea.vmem %s0, %s211
        %s213 = smul.u32 8, %s12
      $region36: #{tpu_custom_call.1} parent=31 // pred_fallthru
        _
      // Predicated region
      $region37: #{tpu_custom_call.1} parent=31 // pred_check
        %p214 = pneg %p58
      $region38: #{tpu_custom_call.1} parent=31 // pred_check_branch
        %216 = sbr.rel (%p214) target = $region40
      $region39: #{tpu_custom_call.1} parent=31 // pred_region
        %p217 = scmp.lt.s32.totalorder %s12, 1
        %s218 = scalar_select %p217, %s12, 1
        %s219 = smul.addr %s218, 8
        %s220 = scalar_lea.vmem %s1, %s219
      $region40: #{tpu_custom_call.1} parent=31 // pred_fallthru
        _
    $region32: #{tpu_custom_call.1} parent=5 // pred_fallthru
      _
    %p221 = scmp.le.s32.totalorder 1, %s12
    %p222 = scmp.lt.s32.totalorder %s12, 3
    %p223 = pnand %p221, %p222
    %p224 = pneg %p223
    // Predicated region
    $region41: #{tpu_custom_call.1} parent=5 // pred_check
      _
    $region42: #{tpu_custom_call.1} parent=5 // pred_check_branch
      %226 = sbr.rel (%p223) target = $region44
    $region43: #{tpu_custom_call.1} parent=5 // pred_region
      %s227 = ssub.s32 %s12, 1
      %s228 = smul.u32 8, %s17
      %p229 = scmp.lt.s32.totalorder %s228, 15
      %s230 = scalar_select %p229, %s228, 15
      %s231 = smul.addr %s230, 4
      %s232 = scalar_lea.vmem %s0, %s231
      %p233 = pneg %p38
      %p234 = pneg %p35
      %p235 = scmp.lt.s32.totalorder %s17, 1
      %s236 = scalar_select %p235, %s17, 1
      %s237 = smul.addr %s236, 8
      %s238 = scalar_lea.vmem %s1, %s237
      %p239 = pneg %p64
      %p240 = pneg %p61
      %p241 = pneg %p85
      %p242 = pneg %p82
      %p243 = pneg %p106
      %p244 = pneg %p103
      %p245 = pneg %p127
      %p246 = pneg %p124
      %p247 = pneg %p148
      %p248 = pneg %p145
      %p249 = pneg %p174
      %p250 = pneg %p171
      %s251 = smul.u32 8, %s17
      %p252 = scmp.lt.s32.totalorder %s251, 15
      %s253 = scalar_select %p252, %s251, 15
      %s254 = smul.addr %s253, 8
      %s255 = scalar_lea.vmem %s6, %s254
      %s256 = smul.u32 8, %s17
      %p257 = scmp.lt.s32.totalorder %s256, 15
      %s258 = scalar_select %p257, %s256, 15
      %s259 = smul.addr %s258, 4
      %s260 = scalar_lea.vmem %s0, %s259
      %s261 = smul.u32 8, %s17
      %p262 = scmp.lt.s32.totalorder %s17, 1
      %s263 = scalar_select %p262, %s17, 1
      %s264 = smul.addr %s263, 8
      %s265 = scalar_lea.vmem %s1, %s264
      %s266 = smul.u32 8, %s17
      %p267 = scmp.lt.s32.totalorder %s266, 15
      %s268 = scalar_select %p267, %s266, 15
      %s269 = smul.addr %s268, 8
      %s270 = scalar_lea.vmem %s6, %s269
      %s271 = smul.u32 8, %s17
      %v273 = vld [vmem:[%s260] sm:$0xf]
      %v274 = vld [vmem:[%s260 + $0x4] sm:$0xf]
      %v275 = vld [vmem:[%s260 + $0x8] sm:$0xf]
      %v276 = vld [vmem:[%s260 + $0xc] sm:$0xf]
      %v277 = vld [vmem:[%s260 + $0x10] sm:$0xf]
      %v278 = vld [vmem:[%s260 + $0x14] sm:$0xf]
      %v279 = vld [vmem:[%s260 + $0x18] sm:$0xf]
      %v280 = vld [vmem:[%s260 + $0x1c] sm:$0xf]
      %v281 = vld [vmem:[%s2] sm:$0xf]
      %v282 = vld [vmem:[%s2 + $0x4] sm:$0xf]
      %v283 = vld [vmem:[%s2 + $0x8] sm:$0xf]
      %v284 = vld [vmem:[%s2 + $0xc] sm:$0xf]
      %v293 = vunpack.c.l.b16 %v273
      %v294 = vunpack.c.l.b16 %v274
      %v295 = vunpack.c.l.b16 %v275
      %v296 = vunpack.c.l.b16 %v276
      %v297 = vunpack.c.l.b16 %v277
      %v298 = vunpack.c.l.b16 %v278
      %v299 = vunpack.c.l.b16 %v279
      %v300 = vunpack.c.l.b16 %v280
      %v301 = vpack.c.b16 %v294, %v293
      %v302 = vpack.c.b16 %v296, %v295
      %v303 = vpack.c.b16 %v298, %v297
      %v304 = vpack.c.b16 %v300, %v299
      %v309 = vunpack.c.l.b16 %v281
      %v310 = vunpack.c.l.b16 %v282
      %v311 = vunpack.c.l.b16 %v283
      %v312 = vunpack.c.l.b16 %v284
      %v313 = vpack.c.b16 %v310, %v309
      %v314 = vpack.c.b16 %v312, %v311
      %vm317 = vcmask 261120
      %v319 = vsel %vm317, %v301, 0
      %v322 = vsel %vm317, %v302, 0
      %v325 = vsel %vm317, %v303, 0
      %v328 = vsel %vm317, %v304, 0
      %330 = vmatpush.bf16.msra.mxu0 0
      %331 = vmatpush.bf16.msra.mxu0 0
      %332 = vmatpush.bf16.msra.mxu0 0
      %333 = vmatpush.bf16.msra.mxu0 0
      %334 = vmatpush.bf16.msra.mxu0 0
      %335 = vmatpush.bf16.msra.mxu0 0
      %336 = vmatpush.bf16.msra.mxu0 %v314
      %337 = vmatpush.bf16.msra.mxu0 %v313
      %338 = vmatmul.bf16.gmra.mxu0 %v319
      %v339 = vpop.f32.mrf.mxu0
      %v340 = vadd.f32 0.0, %v339
      %v341 = vpop.f32.mrf.mxu0
      %v342 = vadd.f32 0.0, %v341
      %343 = vmatmul.bf16.gmra.mxu0 %v322
      %v344 = vpop.f32.mrf.mxu0
      %v345 = vadd.f32 0.0, %v344
      %v346 = vpop.f32.mrf.mxu0
      %v347 = vadd.f32 0.0, %v346
      %348 = vmatmul.bf16.gmra.mxu0 %v325
      %v349 = vpop.f32.mrf.mxu0
      %v350 = vadd.f32 0.0, %v349
      %v351 = vpop.f32.mrf.mxu0
      %v352 = vadd.f32 0.0, %v351
      %353 = vmatmul.bf16.gmra.mxu0 %v328
      %v354 = vpop.f32.mrf.mxu0
      %v355 = vadd.f32 0.0, %v354
      %v356 = vpop.f32.mrf.mxu0
      %v357 = vadd.f32 0.0, %v356
      %358 = vdwg.mxu0
      %v359 = vld [vmem:[%s3] sm:$0xff]
      %v360 = vld [vmem:[%s4] sm:$0xff]
      %v361 = vmul.f32 %v340, %v359
      %v362 = vmul.f32 %v342, %v359
      %v363 = vmul.f32 %v345, %v359
      %v364 = vmul.f32 %v347, %v359
      %v365 = vmul.f32 %v350, %v359
      %v366 = vmul.f32 %v352, %v359
      %v367 = vmul.f32 %v355, %v359
      %v368 = vmul.f32 %v357, %v359
      %370 = vrot.lane.b32.xlu0 %v360, 16
      %v371 = vpop.permute.xlu0 %370
      %v373 = vmul.f32 %v340, %v371
      %v374 = vmul.f32 %v342, %v371
      %v375 = vmul.f32 %v345, %v371
      %v376 = vmul.f32 %v347, %v371
      %v377 = vmul.f32 %v350, %v371
      %v378 = vmul.f32 %v352, %v371
      %v379 = vmul.f32 %v355, %v371
      %v380 = vmul.f32 %v357, %v371
      %389 = vrot.lane.b32.xlu0 %v373, 112
      %v390 = vpop.permute.xlu0 %389
      %391 = vrot.lane.b32.xlu0 %v374, 112
      %v392 = vpop.permute.xlu0 %391
      %393 = vrot.lane.b32.xlu0 %v375, 112
      %v394 = vpop.permute.xlu0 %393
      %395 = vrot.lane.b32.xlu0 %v376, 112
      %v396 = vpop.permute.xlu0 %395
      %397 = vrot.lane.b32.xlu0 %v377, 112
      %v398 = vpop.permute.xlu0 %397
      %399 = vrot.lane.b32.xlu0 %v378, 112
      %v400 = vpop.permute.xlu0 %399
      %401 = vrot.lane.b32.xlu0 %v379, 112
      %v402 = vpop.permute.xlu0 %401
      %403 = vrot.lane.b32.xlu0 %v380, 112
      %v404 = vpop.permute.xlu0 %403
      %v413 = vsub.f32 %v361, %v390
      %v414 = vsub.f32 %v362, %v392
      %v415 = vsub.f32 %v363, %v394
      %v416 = vsub.f32 %v364, %v396
      %v417 = vsub.f32 %v365, %v398
      %v418 = vsub.f32 %v366, %v400
      %v419 = vsub.f32 %v367, %v402
      %v420 = vsub.f32 %v368, %v404
      %v421 = vpack.c.bf16 %v413, %v413
      %v422 = vpack.c.bf16 %v414, %v414
      %v423 = vpack.c.bf16 %v415, %v415
      %v424 = vpack.c.bf16 %v416, %v416
      %v425 = vpack.c.bf16 %v417, %v417
      %v426 = vpack.c.bf16 %v418, %v418
      %v427 = vpack.c.bf16 %v419, %v419
      %v428 = vpack.c.bf16 %v420, %v420
      %430 = vrot.lane.b32.xlu0 %v359, 16
      %v431 = vpop.permute.xlu0 %430
      %v433 = vmul.f32 %v340, %v431
      %v434 = vmul.f32 %v342, %v431
      %v435 = vmul.f32 %v345, %v431
      %v436 = vmul.f32 %v347, %v431
      %v437 = vmul.f32 %v350, %v431
      %v438 = vmul.f32 %v352, %v431
      %v439 = vmul.f32 %v355, %v431
      %v440 = vmul.f32 %v357, %v431
      %v441 = vmul.f32 %v340, %v360
      %v442 = vmul.f32 %v342, %v360
      %v443 = vmul.f32 %v345, %v360
      %v444 = vmul.f32 %v347, %v360
      %v445 = vmul.f32 %v350, %v360
      %v446 = vmul.f32 %v352, %v360
      %v447 = vmul.f32 %v355, %v360
      %v448 = vmul.f32 %v357, %v360
      %457 = vrot.lane.b32.xlu0 %v441, 16
      %v458 = vpop.permute.xlu0 %457
      %459 = vrot.lane.b32.xlu0 %v442, 16
      %v460 = vpop.permute.xlu0 %459
      %461 = vrot.lane.b32.xlu0 %v443, 16
      %v462 = vpop.permute.xlu0 %461
      %463 = vrot.lane.b32.xlu0 %v444, 16
      %v464 = vpop.permute.xlu0 %463
      %465 = vrot.lane.b32.xlu0 %v445, 16
      %v466 = vpop.permute.xlu0 %465
      %467 = vrot.lane.b32.xlu0 %v446, 16
      %v468 = vpop.permute.xlu0 %467
      %469 = vrot.lane.b32.xlu0 %v447, 16
      %v470 = vpop.permute.xlu0 %469
      %471 = vrot.lane.b32.xlu0 %v448, 16
      %v472 = vpop.permute.xlu0 %471
      %v481 = vadd.f32 %v433, %v458
      %v482 = vadd.f32 %v434, %v460
      %v483 = vadd.f32 %v435, %v462
      %v484 = vadd.f32 %v436, %v464
      %v485 = vadd.f32 %v437, %v466
      %v486 = vadd.f32 %v438, %v468
      %v487 = vadd.f32 %v439, %v470
      %v488 = vadd.f32 %v440, %v472
      %v489 = vpack.c.bf16 %v481, %v481
      %v490 = vpack.c.bf16 %v482, %v482
      %v491 = vpack.c.bf16 %v483, %v483
      %v492 = vpack.c.bf16 %v484, %v484
      %v493 = vpack.c.bf16 %v485, %v485
      %v494 = vpack.c.bf16 %v486, %v486
      %v495 = vpack.c.bf16 %v487, %v487
      %v496 = vpack.c.bf16 %v488, %v488
      %497 = vrot.lane.b32.xlu0 %v359, 32
      %v498 = vpop.permute.xlu0 %497
      %v500 = vmul.f32 %v340, %v498
      %v501 = vmul.f32 %v342, %v498
      %v502 = vmul.f32 %v345, %v498
      %v503 = vmul.f32 %v347, %v498
      %v504 = vmul.f32 %v350, %v498
      %v505 = vmul.f32 %v352, %v498
      %v506 = vmul.f32 %v355, %v498
      %v507 = vmul.f32 %v357, %v498
      %508 = vrot.lane.b32.xlu0 %v360, 48
      %v509 = vpop.permute.xlu0 %508
      %v511 = vmul.f32 %v340, %v509
      %v512 = vmul.f32 %v342, %v509
      %v513 = vmul.f32 %v345, %v509
      %v514 = vmul.f32 %v347, %v509
      %v515 = vmul.f32 %v350, %v509
      %v516 = vmul.f32 %v352, %v509
      %v517 = vmul.f32 %v355, %v509
      %v518 = vmul.f32 %v357, %v509
      %527 = vrot.lane.b32.xlu0 %v511, 112
      %v528 = vpop.permute.xlu0 %527
      %529 = vrot.lane.b32.xlu0 %v512, 112
      %v530 = vpop.permute.xlu0 %529
      %531 = vrot.lane.b32.xlu0 %v513, 112
      %v532 = vpop.permute.xlu0 %531
      %533 = vrot.lane.b32.xlu0 %v514, 112
      %v534 = vpop.permute.xlu0 %533
      %535 = vrot.lane.b32.xlu0 %v515, 112
      %v536 = vpop.permute.xlu0 %535
      %537 = vrot.lane.b32.xlu0 %v516, 112
      %v538 = vpop.permute.xlu0 %537
      %539 = vrot.lane.b32.xlu0 %v517, 112
      %v540 = vpop.permute.xlu0 %539
      %541 = vrot.lane.b32.xlu0 %v518, 112
      %v542 = vpop.permute.xlu0 %541
      %v551 = vsub.f32 %v500, %v528
      %v552 = vsub.f32 %v501, %v530
      %v553 = vsub.f32 %v502, %v532
      %v554 = vsub.f32 %v503, %v534
      %v555 = vsub.f32 %v504, %v536
      %v556 = vsub.f32 %v505, %v538
      %v557 = vsub.f32 %v506, %v540
      %v558 = vsub.f32 %v507, %v542
      %v559 = vpack.c.bf16 %v551, %v551
      %v560 = vpack.c.bf16 %v552, %v552
      %v561 = vpack.c.bf16 %v553, %v553
      %v562 = vpack.c.bf16 %v554, %v554
      %v563 = vpack.c.bf16 %v555, %v555
      %v564 = vpack.c.bf16 %v556, %v556
      %v565 = vpack.c.bf16 %v557, %v557
      %v566 = vpack.c.bf16 %v558, %v558
      %567 = vrot.lane.b32.xlu0 %v359, 48
      %v568 = vpop.permute.xlu0 %567
      %v570 = vmul.f32 %v340, %v568
      %v571 = vmul.f32 %v342, %v568
      %v572 = vmul.f32 %v345, %v568
      %v573 = vmul.f32 %v347, %v568
      %v574 = vmul.f32 %v350, %v568
      %v575 = vmul.f32 %v352, %v568
      %v576 = vmul.f32 %v355, %v568
      %v577 = vmul.f32 %v357, %v568
      %578 = vrot.lane.b32.xlu0 %v360, 32
      %v579 = vpop.permute.xlu0 %578
      %v581 = vmul.f32 %v340, %v579
      %v582 = vmul.f32 %v342, %v579
      %v583 = vmul.f32 %v345, %v579
      %v584 = vmul.f32 %v347, %v579
      %v585 = vmul.f32 %v350, %v579
      %v586 = vmul.f32 %v352, %v579
      %v587 = vmul.f32 %v355, %v579
      %v588 = vmul.f32 %v357, %v579
      %597 = vrot.lane.b32.xlu0 %v581, 16
      %v598 = vpop.permute.xlu0 %597
      %599 = vrot.lane.b32.xlu0 %v582, 16
      %v600 = vpop.permute.xlu0 %599
      %601 = vrot.lane.b32.xlu0 %v583, 16
      %v602 = vpop.permute.xlu0 %601
      %603 = vrot.lane.b32.xlu0 %v584, 16
      %v604 = vpop.permute.xlu0 %603
      %605 = vrot.lane.b32.xlu0 %v585, 16
      %v606 = vpop.permute.xlu0 %605
      %607 = vrot.lane.b32.xlu0 %v586, 16
      %v608 = vpop.permute.xlu0 %607
      %609 = vrot.lane.b32.xlu0 %v587, 16
      %v610 = vpop.permute.xlu0 %609
      %611 = vrot.lane.b32.xlu0 %v588, 16
      %v612 = vpop.permute.xlu0 %611
      %v621 = vadd.f32 %v570, %v598
      %v622 = vadd.f32 %v571, %v600
      %v623 = vadd.f32 %v572, %v602
      %v624 = vadd.f32 %v573, %v604
      %v625 = vadd.f32 %v574, %v606
      %v626 = vadd.f32 %v575, %v608
      %v627 = vadd.f32 %v576, %v610
      %v628 = vadd.f32 %v577, %v612
      %v629 = vpack.c.bf16 %v621, %v621
      %v630 = vpack.c.bf16 %v622, %v622
      %v631 = vpack.c.bf16 %v623, %v623
      %v632 = vpack.c.bf16 %v624, %v624
      %v633 = vpack.c.bf16 %v625, %v625
      %v634 = vpack.c.bf16 %v626, %v626
      %v635 = vpack.c.bf16 %v627, %v627
      %v636 = vpack.c.bf16 %v628, %v628
      %v637 = vpack.c.bf16 %v340, %v340
      %v638 = vpack.c.bf16 %v342, %v342
      %v639 = vpack.c.bf16 %v345, %v345
      %v640 = vpack.c.bf16 %v347, %v347
      %v641 = vpack.c.bf16 %v350, %v350
      %v642 = vpack.c.bf16 %v352, %v352
      %v643 = vpack.c.bf16 %v355, %v355
      %v644 = vpack.c.bf16 %v357, %v357
      %v645 = vld [vmem:[%s265] sm:$0xff]
      %v647 = vrot.slane %v645, 1
      %v648 = vrot.slane %v645, 2
      %v649 = vrot.slane %v645, 3
      %v650 = vrot.slane %v645, 4
      %v651 = vrot.slane %v645, 5
      %v652 = vrot.slane %v645, 6
      %v653 = vrot.slane %v645, 7
      %v655 = vunpack.c.l.b16 %v489
      %v656 = vpack.c.b16 %v655, %v655
      %657 = vrot.lane.b32.xlu0 %v656, 112
      %v658 = vpop.permute.xlu0 %657
      %v660 = vunpack.c.l.b16 %v629
      %v661 = vpack.c.b16 %v660, %v660
      %662 = vrot.lane.b32.xlu0 %v661, 80
      %v663 = vpop.permute.xlu0 %662
      %vm664 = vcmask 31744
      %v666 = vsel %vm664, %v658, 0
      %v669 = vsel %vm664, %v663, 0
      %671 = vmatpush.bf16.xpose.msra.mxu0 0
      %672 = vmatpush.bf16.xpose.msra.mxu0 0
      %673 = vmatpush.bf16.xpose.msra.mxu0 0
      %674 = vmatpush.bf16.xpose.msra.mxu0 0
      %675 = vmatpush.bf16.xpose.msra.mxu0 0
      %676 = vmatpush.bf16.xpose.msra.mxu0 0
      %677 = vmatpush.bf16.xpose.msra.mxu0 0
      %678 = vmatpush.bf16.xpose.msra.mxu0 %v669
      %679 = vmatmul.bf16.gmra.mxu0 %v666
      %v680 = vpop.f32.mrf.mxu0
      %v681 = vadd.f32 0.0, %v680
      %v682 = vpop.f32.mrf.mxu0
      %683 = vdwg.mxu0
      %v685 = vunpack.c.l.b16 %v490
      %v686 = vpack.c.b16 %v685, %v685
      %687 = vrot.lane.b32.xlu0 %v686, 112
      %v688 = vpop.permute.xlu0 %687
      %v690 = vunpack.c.l.b16 %v630
      %v691 = vpack.c.b16 %v690, %v690
      %692 = vrot.lane.b32.xlu0 %v691, 80
      %v693 = vpop.permute.xlu0 %692
      %v695 = vsel %vm664, %v688, 0
      %v698 = vsel %vm664, %v693, 0
      %700 = vmatpush.bf16.xpose.msra.mxu0 0
      %701 = vmatpush.bf16.xpose.msra.mxu0 0
      %702 = vmatpush.bf16.xpose.msra.mxu0 0
      %703 = vmatpush.bf16.xpose.msra.mxu0 0
      %704 = vmatpush.bf16.xpose.msra.mxu0 0
      %705 = vmatpush.bf16.xpose.msra.mxu0 0
      %706 = vmatpush.bf16.xpose.msra.mxu0 0
      %707 = vmatpush.bf16.xpose.msra.mxu0 %v698
      %708 = vmatmul.bf16.gmra.mxu0 %v695
      %v709 = vpop.f32.mrf.mxu0
      %v710 = vadd.f32 0.0, %v709
      %v711 = vpop.f32.mrf.mxu0
      %712 = vdwg.mxu0
      %v714 = vunpack.c.l.b16 %v491
      %v715 = vpack.c.b16 %v714, %v714
      %716 = vrot.lane.b32.xlu0 %v715, 112
      %v717 = vpop.permute.xlu0 %716
      %v719 = vunpack.c.l.b16 %v631
      %v720 = vpack.c.b16 %v719, %v719
      %721 = vrot.lane.b32.xlu0 %v720, 80
      %v722 = vpop.permute.xlu0 %721
      %v724 = vsel %vm664, %v717, 0
      %v727 = vsel %vm664, %v722, 0
      %729 = vmatpush.bf16.xpose.msra.mxu0 0
      %730 = vmatpush.bf16.xpose.msra.mxu0 0
      %731 = vmatpush.bf16.xpose.msra.mxu0 0
      %732 = vmatpush.bf16.xpose.msra.mxu0 0
      %733 = vmatpush.bf16.xpose.msra.mxu0 0
      %734 = vmatpush.bf16.xpose.msra.mxu0 0
      %735 = vmatpush.bf16.xpose.msra.mxu0 0
      %736 = vmatpush.bf16.xpose.msra.mxu0 %v727
      %737 = vmatmul.bf16.gmra.mxu0 %v724
      %v738 = vpop.f32.mrf.mxu0
      %v739 = vadd.f32 0.0, %v738
      %v740 = vpop.f32.mrf.mxu0
      %741 = vdwg.mxu0
      %v743 = vunpack.c.l.b16 %v492
      %v744 = vpack.c.b16 %v743, %v743
      %745 = vrot.lane.b32.xlu0 %v744, 112
      %v746 = vpop.permute.xlu0 %745
      %v748 = vunpack.c.l.b16 %v632
      %v749 = vpack.c.b16 %v748, %v748
      %750 = vrot.lane.b32.xlu0 %v749, 80
      %v751 = vpop.permute.xlu0 %750
      %v753 = vsel %vm664, %v746, 0
      %v756 = vsel %vm664, %v751, 0
      %758 = vmatpush.bf16.xpose.msra.mxu0 0
      %759 = vmatpush.bf16.xpose.msra.mxu0 0
      %760 = vmatpush.bf16.xpose.msra.mxu0 0
      %761 = vmatpush.bf16.xpose.msra.mxu0 0
      %762 = vmatpush.bf16.xpose.msra.mxu0 0
      %763 = vmatpush.bf16.xpose.msra.mxu0 0
      %764 = vmatpush.bf16.xpose.msra.mxu0 0
      %765 = vmatpush.bf16.xpose.msra.mxu0 %v756
      %766 = vmatmul.bf16.gmra.mxu0 %v753
      %v767 = vpop.f32.mrf.mxu0
      %v768 = vadd.f32 0.0, %v767
      %v769 = vpop.f32.mrf.mxu0
      %770 = vdwg.mxu0
      %v772 = vunpack.c.l.b16 %v493
      %v773 = vpack.c.b16 %v772, %v772
      %774 = vrot.lane.b32.xlu0 %v773, 112
      %v775 = vpop.permute.xlu0 %774
      %v777 = vunpack.c.l.b16 %v633
      %v778 = vpack.c.b16 %v777, %v777
      %779 = vrot.lane.b32.xlu0 %v778, 80
      %v780 = vpop.permute.xlu0 %779
      %v782 = vsel %vm664, %v775, 0
      %v785 = vsel %vm664, %v780, 0
      %787 = vmatpush.bf16.xpose.msra.mxu0 0
      %788 = vmatpush.bf16.xpose.msra.mxu0 0
      %789 = vmatpush.bf16.xpose.msra.mxu0 0
      %790 = vmatpush.bf16.xpose.msra.mxu0 0
      %791 = vmatpush.bf16.xpose.msra.mxu0 0
      %792 = vmatpush.bf16.xpose.msra.mxu0 0
      %793 = vmatpush.bf16.xpose.msra.mxu0 0
      %794 = vmatpush.bf16.xpose.msra.mxu0 %v785
      %795 = vmatmul.bf16.gmra.mxu0 %v782
      %v796 = vpop.f32.mrf.mxu0
      %v797 = vadd.f32 0.0, %v796
      %v798 = vpop.f32.mrf.mxu0
      %799 = vdwg.mxu0
      %v801 = vunpack.c.l.b16 %v494
      %v802 = vpack.c.b16 %v801, %v801
      %803 = vrot.lane.b32.xlu0 %v802, 112
      %v804 = vpop.permute.xlu0 %803
      %v806 = vunpack.c.l.b16 %v634
      %v807 = vpack.c.b16 %v806, %v806
      %808 = vrot.lane.b32.xlu0 %v807, 80
      %v809 = vpop.permute.xlu0 %808
      %v811 = vsel %vm664, %v804, 0
      %v814 = vsel %vm664, %v809, 0
      %816 = vmatpush.bf16.xpose.msra.mxu0 0
      %817 = vmatpush.bf16.xpose.msra.mxu0 0
      %818 = vmatpush.bf16.xpose.msra.mxu0 0
      %819 = vmatpush.bf16.xpose.msra.mxu0 0
      %820 = vmatpush.bf16.xpose.msra.mxu0 0
      %821 = vmatpush.bf16.xpose.msra.mxu0 0
      %822 = vmatpush.bf16.xpose.msra.mxu0 0
      %823 = vmatpush.bf16.xpose.msra.mxu0 %v814
      %824 = vmatmul.bf16.gmra.mxu0 %v811
      %v825 = vpop.f32.mrf.mxu0
      %v826 = vadd.f32 0.0, %v825
      %v827 = vpop.f32.mrf.mxu0
      %828 = vdwg.mxu0
      %v830 = vunpack.c.l.b16 %v495
      %v831 = vpack.c.b16 %v830, %v830
      %832 = vrot.lane.b32.xlu0 %v831, 112
      %v833 = vpop.permute.xlu0 %832
      %v835 = vunpack.c.l.b16 %v635
      %v836 = vpack.c.b16 %v835, %v835
      %837 = vrot.lane.b32.xlu0 %v836, 80
      %v838 = vpop.permute.xlu0 %837
      %v840 = vsel %vm664, %v833, 0
      %v843 = vsel %vm664, %v838, 0
      %845 = vmatpush.bf16.xpose.msra.mxu0 0
      %846 = vmatpush.bf16.xpose.msra.mxu0 0
      %847 = vmatpush.bf16.xpose.msra.mxu0 0
      %848 = vmatpush.bf16.xpose.msra.mxu0 0
      %849 = vmatpush.bf16.xpose.msra.mxu0 0
      %850 = vmatpush.bf16.xpose.msra.mxu0 0
      %851 = vmatpush.bf16.xpose.msra.mxu0 0
      %852 = vmatpush.bf16.xpose.msra.mxu0 %v843
      %853 = vmatmul.bf16.gmra.mxu0 %v840
      %v854 = vpop.f32.mrf.mxu0
      %v855 = vadd.f32 0.0, %v854
      %v856 = vpop.f32.mrf.mxu0
      %857 = vdwg.mxu0
      %v859 = vunpack.c.l.b16 %v496
      %v860 = vpack.c.b16 %v859, %v859
      %861 = vrot.lane.b32.xlu0 %v860, 112
      %v862 = vpop.permute.xlu0 %861
      %v864 = vunpack.c.l.b16 %v636
      %v865 = vpack.c.b16 %v864, %v864
      %866 = vrot.lane.b32.xlu0 %v865, 80
      %v867 = vpop.permute.xlu0 %866
      %v869 = vsel %vm664, %v862, 0
      %v872 = vsel %vm664, %v867, 0
      %874 = vmatpush.bf16.xpose.msra.mxu0 0
      %875 = vmatpush.bf16.xpose.msra.mxu0 0
      %876 = vmatpush.bf16.xpose.msra.mxu0 0
      %877 = vmatpush.bf16.xpose.msra.mxu0 0
      %878 = vmatpush.bf16.xpose.msra.mxu0 0
      %879 = vmatpush.bf16.xpose.msra.mxu0 0
      %880 = vmatpush.bf16.xpose.msra.mxu0 0
      %881 = vmatpush.bf16.xpose.msra.mxu0 %v872
      %882 = vmatmul.bf16.gmra.mxu0 %v869
      %v883 = vpop.f32.mrf.mxu0
      %v884 = vadd.f32 0.0, %v883
      %v885 = vpop.f32.mrf.mxu0
      %886 = vdwg.mxu0
      %v888 = vunpack.c.l.b16 %v559
      %v889 = vpack.c.b16 %v888, %v888
      %890 = vrot.lane.b32.xlu0 %v889, 96
      %v891 = vpop.permute.xlu0 %890
      %v893 = vsel %vm664, %v421, 0
      %v896 = vsel %vm664, %v891, 0
      %898 = vmatpush.bf16.xpose.msra.mxu0 0
      %899 = vmatpush.bf16.xpose.msra.mxu0 0
      %900 = vmatpush.bf16.xpose.msra.mxu0 0
      %901 = vmatpush.bf16.xpose.msra.mxu0 0
      %902 = vmatpush.bf16.xpose.msra.mxu0 0
      %903 = vmatpush.bf16.xpose.msra.mxu0 0
      %904 = vmatpush.bf16.xpose.msra.mxu0 0
      %905 = vmatpush.bf16.xpose.msra.mxu0 %v896
      %906 = vmatmul.bf16.gmra.mxu0 %v893
      %v907 = vpop.f32.mrf.mxu0
      %v908 = vadd.f32 %v681, %v907
      %v909 = vpop.f32.mrf.mxu0
      %910 = vdwg.mxu0
      %v912 = vunpack.c.l.b16 %v560
      %v913 = vpack.c.b16 %v912, %v912
      %914 = vrot.lane.b32.xlu0 %v913, 96
      %v915 = vpop.permute.xlu0 %914
      %v917 = vsel %vm664, %v422, 0
      %v920 = vsel %vm664, %v915, 0
      %922 = vmatpush.bf16.xpose.msra.mxu0 0
      %923 = vmatpush.bf16.xpose.msra.mxu0 0
      %924 = vmatpush.bf16.xpose.msra.mxu0 0
      %925 = vmatpush.bf16.xpose.msra.mxu0 0
      %926 = vmatpush.bf16.xpose.msra.mxu0 0
      %927 = vmatpush.bf16.xpose.msra.mxu0 0
      %928 = vmatpush.bf16.xpose.msra.mxu0 0
      %929 = vmatpush.bf16.xpose.msra.mxu0 %v920
      %930 = vmatmul.bf16.gmra.mxu0 %v917
      %v931 = vpop.f32.mrf.mxu0
      %v932 = vadd.f32 %v710, %v931
      %v933 = vpop.f32.mrf.mxu0
      %934 = vdwg.mxu0
      %v936 = vunpack.c.l.b16 %v561
      %v937 = vpack.c.b16 %v936, %v936
      %938 = vrot.lane.b32.xlu0 %v937, 96
      %v939 = vpop.permute.xlu0 %938
      %v941 = vsel %vm664, %v423, 0
      %v944 = vsel %vm664, %v939, 0
      %946 = vmatpush.bf16.xpose.msra.mxu0 0
      %947 = vmatpush.bf16.xpose.msra.mxu0 0
      %948 = vmatpush.bf16.xpose.msra.mxu0 0
      %949 = vmatpush.bf16.xpose.msra.mxu0 0
      %950 = vmatpush.bf16.xpose.msra.mxu0 0
      %951 = vmatpush.bf16.xpose.msra.mxu0 0
      %952 = vmatpush.bf16.xpose.msra.mxu0 0
      %953 = vmatpush.bf16.xpose.msra.mxu0 %v944
      %954 = vmatmul.bf16.gmra.mxu0 %v941
      %v955 = vpop.f32.mrf.mxu0
      %v956 = vadd.f32 %v739, %v955
      %v957 = vpop.f32.mrf.mxu0
      %958 = vdwg.mxu0
      %v960 = vunpack.c.l.b16 %v562
      %v961 = vpack.c.b16 %v960, %v960
      %962 = vrot.lane.b32.xlu0 %v961, 96
      %v963 = vpop.permute.xlu0 %962
      %v965 = vsel %vm664, %v424, 0
      %v968 = vsel %vm664, %v963, 0
      %970 = vmatpush.bf16.xpose.msra.mxu0 0
      %971 = vmatpush.bf16.xpose.msra.mxu0 0
      %972 = vmatpush.bf16.xpose.msra.mxu0 0
      %973 = vmatpush.bf16.xpose.msra.mxu0 0
      %974 = vmatpush.bf16.xpose.msra.mxu0 0
      %975 = vmatpush.bf16.xpose.msra.mxu0 0
      %976 = vmatpush.bf16.xpose.msra.mxu0 0
      %977 = vmatpush.bf16.xpose.msra.mxu0 %v968
      %978 = vmatmul.bf16.gmra.mxu0 %v965
      %v979 = vpop.f32.mrf.mxu0
      %v980 = vadd.f32 %v768, %v979
      %v981 = vpop.f32.mrf.mxu0
      %982 = vdwg.mxu0
      %v984 = vunpack.c.l.b16 %v563
      %v985 = vpack.c.b16 %v984, %v984
      %986 = vrot.lane.b32.xlu0 %v985, 96
      %v987 = vpop.permute.xlu0 %986
      %v989 = vsel %vm664, %v425, 0
      %v992 = vsel %vm664, %v987, 0
      %994 = vmatpush.bf16.xpose.msra.mxu0 0
      %995 = vmatpush.bf16.xpose.msra.mxu0 0
      %996 = vmatpush.bf16.xpose.msra.mxu0 0
      %997 = vmatpush.bf16.xpose.msra.mxu0 0
      %998 = vmatpush.bf16.xpose.msra.mxu0 0
      %999 = vmatpush.bf16.xpose.msra.mxu0 0
      %1000 = vmatpush.bf16.xpose.msra.mxu0 0
      %1001 = vmatpush.bf16.xpose.msra.mxu0 %v992
      %1002 = vmatmul.bf16.gmra.mxu0 %v989
      %v1003 = vpop.f32.mrf.mxu0
      %v1004 = vadd.f32 %v797, %v1003
      %v1005 = vpop.f32.mrf.mxu0
      %1006 = vdwg.mxu0
      %v1008 = vunpack.c.l.b16 %v564
      %v1009 = vpack.c.b16 %v1008, %v1008
      %1010 = vrot.lane.b32.xlu0 %v1009, 96
      %v1011 = vpop.permute.xlu0 %1010
      %v1013 = vsel %vm664, %v426, 0
      %v1016 = vsel %vm664, %v1011, 0
      %1018 = vmatpush.bf16.xpose.msra.mxu0 0
      %1019 = vmatpush.bf16.xpose.msra.mxu0 0
      %1020 = vmatpush.bf16.xpose.msra.mxu0 0
      %1021 = vmatpush.bf16.xpose.msra.mxu0 0
      %1022 = vmatpush.bf16.xpose.msra.mxu0 0
      %1023 = vmatpush.bf16.xpose.msra.mxu0 0
      %1024 = vmatpush.bf16.xpose.msra.mxu0 0
      %1025 = vmatpush.bf16.xpose.msra.mxu0 %v1016
      %1026 = vmatmul.bf16.gmra.mxu0 %v1013
      %v1027 = vpop.f32.mrf.mxu0
      %v1028 = vadd.f32 %v826, %v1027
      %v1029 = vpop.f32.mrf.mxu0
      %1030 = vdwg.mxu0
      %v1032 = vunpack.c.l.b16 %v565
      %v1033 = vpack.c.b16 %v1032, %v1032
      %1034 = vrot.lane.b32.xlu0 %v1033, 96
      %v1035 = vpop.permute.xlu0 %1034
      %v1037 = vsel %vm664, %v427, 0
      %v1040 = vsel %vm664, %v1035, 0
      %1042 = vmatpush.bf16.xpose.msra.mxu0 0
      %1043 = vmatpush.bf16.xpose.msra.mxu0 0
      %1044 = vmatpush.bf16.xpose.msra.mxu0 0
      %1045 = vmatpush.bf16.xpose.msra.mxu0 0
      %1046 = vmatpush.bf16.xpose.msra.mxu0 0
      %1047 = vmatpush.bf16.xpose.msra.mxu0 0
      %1048 = vmatpush.bf16.xpose.msra.mxu0 0
      %1049 = vmatpush.bf16.xpose.msra.mxu0 %v1040
      %1050 = vmatmul.bf16.gmra.mxu0 %v1037
      %v1051 = vpop.f32.mrf.mxu0
      %v1052 = vadd.f32 %v855, %v1051
      %v1053 = vpop.f32.mrf.mxu0
      %1054 = vdwg.mxu0
      %v1056 = vunpack.c.l.b16 %v566
      %v1057 = vpack.c.b16 %v1056, %v1056
      %1058 = vrot.lane.b32.xlu0 %v1057, 96
      %v1059 = vpop.permute.xlu0 %1058
      %v1061 = vsel %vm664, %v428, 0
      %v1064 = vsel %vm664, %v1059, 0
      %1066 = vmatpush.bf16.xpose.msra.mxu0 0
      %1067 = vmatpush.bf16.xpose.msra.mxu0 0
      %1068 = vmatpush.bf16.xpose.msra.mxu0 0
      %1069 = vmatpush.bf16.xpose.msra.mxu0 0
      %1070 = vmatpush.bf16.xpose.msra.mxu0 0
      %1071 = vmatpush.bf16.xpose.msra.mxu0 0
      %1072 = vmatpush.bf16.xpose.msra.mxu0 0
      %1073 = vmatpush.bf16.xpose.msra.mxu0 %v1064
      %1074 = vmatmul.bf16.gmra.mxu0 %v1061
      %v1075 = vpop.f32.mrf.mxu0
      %v1076 = vadd.f32 %v884, %v1075
      %v1077 = vpop.f32.mrf.mxu0
      %1078 = vdwg.mxu0
      %v1079 = vperm.slane %v645, 0
      %v1080 = vperm.slane %v647, 0
      %v1081 = vperm.slane %v648, 0
      %v1082 = vperm.slane %v649, 0
      %v1083 = vperm.slane %v650, 0
      %v1084 = vperm.slane %v651, 0
      %v1085 = vperm.slane %v652, 0
      %v1086 = vperm.slane %v653, 0
      %v1095 = vadd.f32 %v908, %v1079
      %v1096 = vadd.f32 %v932, %v1080
      %v1097 = vadd.f32 %v956, %v1081
      %v1098 = vadd.f32 %v980, %v1082
      %v1099 = vadd.f32 %v1004, %v1083
      %v1100 = vadd.f32 %v1028, %v1084
      %v1101 = vadd.f32 %v1052, %v1085
      %v1102 = vadd.f32 %v1076, %v1086
      %vm1103 = vcmask 64512
      %v1104 = vsel %vm1103, %v1095, -inf
      %1105 = vmax.xlane.f32.xlu0 %v1104
      %v1106 = vpop.xlane.xlu0 %1105
      %v1107 = vsel %vm1103, %v1096, -inf
      %1108 = vmax.xlane.f32.xlu0 %v1107
      %v1109 = vpop.xlane.xlu0 %1108
      %v1110 = vsel %vm1103, %v1097, -inf
      %1111 = vmax.xlane.f32.xlu0 %v1110
      %v1112 = vpop.xlane.xlu0 %1111
      %v1113 = vsel %vm1103, %v1098, -inf
      %1114 = vmax.xlane.f32.xlu0 %v1113
      %v1115 = vpop.xlane.xlu0 %1114
      %v1116 = vsel %vm1103, %v1099, -inf
      %1117 = vmax.xlane.f32.xlu0 %v1116
      %v1118 = vpop.xlane.xlu0 %1117
      %v1119 = vsel %vm1103, %v1100, -inf
      %1120 = vmax.xlane.f32.xlu0 %v1119
      %v1121 = vpop.xlane.xlu0 %1120
      %v1122 = vsel %vm1103, %v1101, -inf
      %1123 = vmax.xlane.f32.xlu0 %v1122
      %v1124 = vpop.xlane.xlu0 %1123
      %v1125 = vsel %vm1103, %v1102, -inf
      %1126 = vmax.xlane.f32.xlu0 %v1125
      %v1127 = vpop.xlane.xlu0 %1126
      %v1128 = vsub.f32 %v1095, %v1106
      %v1129 = vsub.f32 %v1096, %v1109
      %v1130 = vsub.f32 %v1097, %v1112
      %v1131 = vsub.f32 %v1098, %v1115
      %v1132 = vsub.f32 %v1099, %v1118
      %v1133 = vsub.f32 %v1100, %v1121
      %v1134 = vsub.f32 %v1101, %v1124
      %v1135 = vsub.f32 %v1102, %v1127
      %v1136 = vmul.f32 %v1128, 1.442695
      %v1137 = vpow.pop %v1136
      %v1138 = vmul.f32 %v1129, 1.442695
      %v1139 = vpow.pop %v1138
      %v1140 = vmul.f32 %v1130, 1.442695
      %v1141 = vpow.pop %v1140
      %v1142 = vmul.f32 %v1131, 1.442695
      %v1143 = vpow.pop %v1142
      %v1144 = vmul.f32 %v1132, 1.442695
      %v1145 = vpow.pop %v1144
      %v1146 = vmul.f32 %v1133, 1.442695
      %v1147 = vpow.pop %v1146
      %v1148 = vmul.f32 %v1134, 1.442695
      %v1149 = vpow.pop %v1148
      %v1150 = vmul.f32 %v1135, 1.442695
      %v1151 = vpow.pop %v1150
      %v1152 = vsel %vm1103, %v1137, 0.0
      %1153 = vadd.xlane.f32.xlu0 %v1152
      %v1154 = vpop.xlane.xlu0 %1153
      %v1155 = vsel %vm1103, %v1139, 0.0
      %1156 = vadd.xlane.f32.xlu0 %v1155
      %v1157 = vpop.xlane.xlu0 %1156
      %v1158 = vsel %vm1103, %v1141, 0.0
      %1159 = vadd.xlane.f32.xlu0 %v1158
      %v1160 = vpop.xlane.xlu0 %1159
      %v1161 = vsel %vm1103, %v1143, 0.0
      %1162 = vadd.xlane.f32.xlu0 %v1161
      %v1163 = vpop.xlane.xlu0 %1162
      %v1164 = vsel %vm1103, %v1145, 0.0
      %1165 = vadd.xlane.f32.xlu0 %v1164
      %v1166 = vpop.xlane.xlu0 %1165
      %v1167 = vsel %vm1103, %v1147, 0.0
      %1168 = vadd.xlane.f32.xlu0 %v1167
      %v1169 = vpop.xlane.xlu0 %1168
      %v1170 = vsel %vm1103, %v1149, 0.0
      %1171 = vadd.xlane.f32.xlu0 %v1170
      %v1172 = vpop.xlane.xlu0 %1171
      %v1173 = vsel %vm1103, %v1151, 0.0
      %1174 = vadd.xlane.f32.xlu0 %v1173
      %v1175 = vpop.xlane.xlu0 %1174
      %v1176 = vrcp.pop %v1154
      %v1177 = vmul.f32 %v1154, %v1176
      %v1178 = vsub.f32 1.0, %v1177
      %v1179 = vmul.f32 %v1176, %v1178
      %v1180 = vadd.f32 %v1176, %v1179
      %vm1181 = vweird.f32 %v1154
      %vm1182 = vweird.f32 %v1176
      %vm1183 = vmor %vm1181, %vm1182
      %v1184 = vsel %vm1183, %v1176, %v1180
      %v1185 = vand.u32 2147483647, %v1154
      %vm1186 = vcmp.eq.f32.partialorder %v1185, 8.507059e+37
      %v1187 = vand.u32 %v1154, 2147483648
      %v1188 = vor.u32 1.1754944e-38, %v1187
      %v1189 = vsel %vm1186, %v1188, %v1184
      %v1190 = vrcp.pop %v1157
      %v1191 = vmul.f32 %v1157, %v1190
      %v1192 = vsub.f32 1.0, %v1191
      %v1193 = vmul.f32 %v1190, %v1192
      %v1194 = vadd.f32 %v1190, %v1193
      %vm1195 = vweird.f32 %v1157
      %vm1196 = vweird.f32 %v1190
      %vm1197 = vmor %vm1195, %vm1196
      %v1198 = vsel %vm1197, %v1190, %v1194
      %v1199 = vand.u32 2147483647, %v1157
      %vm1200 = vcmp.eq.f32.partialorder %v1199, 8.507059e+37
      %v1201 = vand.u32 %v1157, 2147483648
      %v1202 = vor.u32 1.1754944e-38, %v1201
      %v1203 = vsel %vm1200, %v1202, %v1198
      %v1204 = vrcp.pop %v1160
      %v1205 = vmul.f32 %v1160, %v1204
      %v1206 = vsub.f32 1.0, %v1205
      %v1207 = vmul.f32 %v1204, %v1206
      %v1208 = vadd.f32 %v1204, %v1207
      %vm1209 = vweird.f32 %v1160
      %vm1210 = vweird.f32 %v1204
      %vm1211 = vmor %vm1209, %vm1210
      %v1212 = vsel %vm1211, %v1204, %v1208
      %v1213 = vand.u32 2147483647, %v1160
      %vm1214 = vcmp.eq.f32.partialorder %v1213, 8.507059e+37
      %v1215 = vand.u32 %v1160, 2147483648
      %v1216 = vor.u32 1.1754944e-38, %v1215
      %v1217 = vsel %vm1214, %v1216, %v1212
      %v1218 = vrcp.pop %v1163
      %v1219 = vmul.f32 %v1163, %v1218
      %v1220 = vsub.f32 1.0, %v1219
      %v1221 = vmul.f32 %v1218, %v1220
      %v1222 = vadd.f32 %v1218, %v1221
      %vm1223 = vweird.f32 %v1163
      %vm1224 = vweird.f32 %v1218
      %vm1225 = vmor %vm1223, %vm1224
      %v1226 = vsel %vm1225, %v1218, %v1222
      %v1227 = vand.u32 2147483647, %v1163
      %vm1228 = vcmp.eq.f32.partialorder %v1227, 8.507059e+37
      %v1229 = vand.u32 %v1163, 2147483648
      %v1230 = vor.u32 1.1754944e-38, %v1229
      %v1231 = vsel %vm1228, %v1230, %v1226
      %v1232 = vrcp.pop %v1166
      %v1233 = vmul.f32 %v1166, %v1232
      %v1234 = vsub.f32 1.0, %v1233
      %v1235 = vmul.f32 %v1232, %v1234
      %v1236 = vadd.f32 %v1232, %v1235
      %vm1237 = vweird.f32 %v1166
      %vm1238 = vweird.f32 %v1232
      %vm1239 = vmor %vm1237, %vm1238
      %v1240 = vsel %vm1239, %v1232, %v1236
      %v1241 = vand.u32 2147483647, %v1166
      %vm1242 = vcmp.eq.f32.partialorder %v1241, 8.507059e+37
      %v1243 = vand.u32 %v1166, 2147483648
      %v1244 = vor.u32 1.1754944e-38, %v1243
      %v1245 = vsel %vm1242, %v1244, %v1240
      %v1246 = vrcp.pop %v1169
      %v1247 = vmul.f32 %v1169, %v1246
      %v1248 = vsub.f32 1.0, %v1247
      %v1249 = vmul.f32 %v1246, %v1248
      %v1250 = vadd.f32 %v1246, %v1249
      %vm1251 = vweird.f32 %v1169
      %vm1252 = vweird.f32 %v1246
      %vm1253 = vmor %vm1251, %vm1252
      %v1254 = vsel %vm1253, %v1246, %v1250
      %v1255 = vand.u32 2147483647, %v1169
      %vm1256 = vcmp.eq.f32.partialorder %v1255, 8.507059e+37
      %v1257 = vand.u32 %v1169, 2147483648
      %v1258 = vor.u32 1.1754944e-38, %v1257
      %v1259 = vsel %vm1256, %v1258, %v1254
      %v1260 = vrcp.pop %v1172
      %v1261 = vmul.f32 %v1172, %v1260
      %v1262 = vsub.f32 1.0, %v1261
      %v1263 = vmul.f32 %v1260, %v1262
      %v1264 = vadd.f32 %v1260, %v1263
      %vm1265 = vweird.f32 %v1172
      %vm1266 = vweird.f32 %v1260
      %vm1267 = vmor %vm1265, %vm1266
      %v1268 = vsel %vm1267, %v1260, %v1264
      %v1269 = vand.u32 2147483647, %v1172
      %vm1270 = vcmp.eq.f32.partialorder %v1269, 8.507059e+37
      %v1271 = vand.u32 %v1172, 2147483648
      %v1272 = vor.u32 1.1754944e-38, %v1271
      %v1273 = vsel %vm1270, %v1272, %v1268
      %v1274 = vrcp.pop %v1175
      %v1275 = vmul.f32 %v1175, %v1274
      %v1276 = vsub.f32 1.0, %v1275
      %v1277 = vmul.f32 %v1274, %v1276
      %v1278 = vadd.f32 %v1274, %v1277
      %vm1279 = vweird.f32 %v1175
      %vm1280 = vweird.f32 %v1274
      %vm1281 = vmor %vm1279, %vm1280
      %v1282 = vsel %vm1281, %v1274, %v1278
      %v1283 = vand.u32 2147483647, %v1175
      %vm1284 = vcmp.eq.f32.partialorder %v1283, 8.507059e+37
      %v1285 = vand.u32 %v1175, 2147483648
      %v1286 = vor.u32 1.1754944e-38, %v1285
      %v1287 = vsel %vm1284, %v1286, %v1282
      %v1288 = vmul.f32 %v1137, %v1189
      %v1289 = vmul.f32 %v1139, %v1203
      %v1290 = vmul.f32 %v1141, %v1217
      %v1291 = vmul.f32 %v1143, %v1231
      %v1292 = vmul.f32 %v1145, %v1245
      %v1293 = vmul.f32 %v1147, %v1259
      %v1294 = vmul.f32 %v1149, %v1273
      %v1295 = vmul.f32 %v1151, %v1287
      %v1296 = vpack.c.bf16 %v1288, %v1288
      %v1297 = vpack.c.bf16 %v1289, %v1289
      %v1298 = vpack.c.bf16 %v1290, %v1290
      %v1299 = vpack.c.bf16 %v1291, %v1291
      %v1300 = vpack.c.bf16 %v1292, %v1292
      %v1301 = vpack.c.bf16 %v1293, %v1293
      %v1302 = vpack.c.bf16 %v1294, %v1294
      %v1303 = vpack.c.bf16 %v1295, %v1295
      %v1305 = vunpack.c.l.b16 %v637
      %v1306 = vpack.c.b16 %v1305, %v1305
      %1307 = vrot.lane.b32.xlu0 %v1306, 64
      %v1308 = vpop.permute.xlu0 %1307
      %v1310 = vsel %vm1103, %v1296, 0
      %vm1312 = vcmask 1043456
      %v1314 = vsel %vm1312, %v1308, 0
      %1316 = vmatpush.bf16.msra.mxu0 0
      %1317 = vmatpush.bf16.msra.mxu0 0
      %1318 = vmatpush.bf16.msra.mxu0 0
      %1319 = vmatpush.bf16.msra.mxu0 0
      %1320 = vmatpush.bf16.msra.mxu0 0
      %1321 = vmatpush.bf16.msra.mxu0 0
      %1322 = vmatpush.bf16.msra.mxu0 0
      %1323 = vmatpush.bf16.msra.mxu0 %v1314
      %1324 = vmatmul.bf16.gmra.mxu0 %v1310
      %v1325 = vpop.f32.mrf.mxu0
      %v1326 = vadd.f32 0.0, %v1325
      %v1327 = vpop.f32.mrf.mxu0
      %1328 = vdwg.mxu0
      %v1330 = vunpack.c.l.b16 %v638
      %v1331 = vpack.c.b16 %v1330, %v1330
      %1332 = vrot.lane.b32.xlu0 %v1331, 64
      %v1333 = vpop.permute.xlu0 %1332
      %v1335 = vsel %vm1103, %v1297, 0
      %v1338 = vsel %vm1312, %v1333, 0
      %1340 = vmatpush.bf16.msra.mxu0 0
      %1341 = vmatpush.bf16.msra.mxu0 0
      %1342 = vmatpush.bf16.msra.mxu0 0
      %1343 = vmatpush.bf16.msra.mxu0 0
      %1344 = vmatpush.bf16.msra.mxu0 0
      %1345 = vmatpush.bf16.msra.mxu0 0
      %1346 = vmatpush.bf16.msra.mxu0 0
      %1347 = vmatpush.bf16.msra.mxu0 %v1338
      %1348 = vmatmul.bf16.gmra.mxu0 %v1335
      %v1349 = vpop.f32.mrf.mxu0
      %v1350 = vadd.f32 0.0, %v1349
      %v1351 = vpop.f32.mrf.mxu0
      %1352 = vdwg.mxu0
      %v1354 = vunpack.c.l.b16 %v639
      %v1355 = vpack.c.b16 %v1354, %v1354
      %1356 = vrot.lane.b32.xlu0 %v1355, 64
      %v1357 = vpop.permute.xlu0 %1356
      %v1359 = vsel %vm1103, %v1298, 0
      %v1362 = vsel %vm1312, %v1357, 0
      %1364 = vmatpush.bf16.msra.mxu0 0
      %1365 = vmatpush.bf16.msra.mxu0 0
      %1366 = vmatpush.bf16.msra.mxu0 0
      %1367 = vmatpush.bf16.msra.mxu0 0
      %1368 = vmatpush.bf16.msra.mxu0 0
      %1369 = vmatpush.bf16.msra.mxu0 0
      %1370 = vmatpush.bf16.msra.mxu0 0
      %1371 = vmatpush.bf16.msra.mxu0 %v1362
      %1372 = vmatmul.bf16.gmra.mxu0 %v1359
      %v1373 = vpop.f32.mrf.mxu0
      %v1374 = vadd.f32 0.0, %v1373
      %v1375 = vpop.f32.mrf.mxu0
      %1376 = vdwg.mxu0
      %v1378 = vunpack.c.l.b16 %v640
      %v1379 = vpack.c.b16 %v1378, %v1378
      %1380 = vrot.lane.b32.xlu0 %v1379, 64
      %v1381 = vpop.permute.xlu0 %1380
      %v1383 = vsel %vm1103, %v1299, 0
      %v1386 = vsel %vm1312, %v1381, 0
      %1388 = vmatpush.bf16.msra.mxu0 0
      %1389 = vmatpush.bf16.msra.mxu0 0
      %1390 = vmatpush.bf16.msra.mxu0 0
      %1391 = vmatpush.bf16.msra.mxu0 0
      %1392 = vmatpush.bf16.msra.mxu0 0
      %1393 = vmatpush.bf16.msra.mxu0 0
      %1394 = vmatpush.bf16.msra.mxu0 0
      %1395 = vmatpush.bf16.msra.mxu0 %v1386
      %1396 = vmatmul.bf16.gmra.mxu0 %v1383
      %v1397 = vpop.f32.mrf.mxu0
      %v1398 = vadd.f32 0.0, %v1397
      %v1399 = vpop.f32.mrf.mxu0
      %1400 = vdwg.mxu0
      %v1402 = vunpack.c.l.b16 %v641
      %v1403 = vpack.c.b16 %v1402, %v1402
      %1404 = vrot.lane.b32.xlu0 %v1403, 64
      %v1405 = vpop.permute.xlu0 %1404
      %v1407 = vsel %vm1103, %v1300, 0
      %v1410 = vsel %vm1312, %v1405, 0
      %1412 = vmatpush.bf16.msra.mxu0 0
      %1413 = vmatpush.bf16.msra.mxu0 0
      %1414 = vmatpush.bf16.msra.mxu0 0
      %1415 = vmatpush.bf16.msra.mxu0 0
      %1416 = vmatpush.bf16.msra.mxu0 0
      %1417 = vmatpush.bf16.msra.mxu0 0
      %1418 = vmatpush.bf16.msra.mxu0 0
      %1419 = vmatpush.bf16.msra.mxu0 %v1410
      %1420 = vmatmul.bf16.gmra.mxu0 %v1407
      %v1421 = vpop.f32.mrf.mxu0
      %v1422 = vadd.f32 0.0, %v1421
      %v1423 = vpop.f32.mrf.mxu0
      %1424 = vdwg.mxu0
      %v1426 = vunpack.c.l.b16 %v642
      %v1427 = vpack.c.b16 %v1426, %v1426
      %1428 = vrot.lane.b32.xlu0 %v1427, 64
      %v1429 = vpop.permute.xlu0 %1428
      %v1431 = vsel %vm1103, %v1301, 0
      %v1434 = vsel %vm1312, %v1429, 0
      %1436 = vmatpush.bf16.msra.mxu0 0
      %1437 = vmatpush.bf16.msra.mxu0 0
      %1438 = vmatpush.bf16.msra.mxu0 0
      %1439 = vmatpush.bf16.msra.mxu0 0
      %1440 = vmatpush.bf16.msra.mxu0 0
      %1441 = vmatpush.bf16.msra.mxu0 0
      %1442 = vmatpush.bf16.msra.mxu0 0
      %1443 = vmatpush.bf16.msra.mxu0 %v1434
      %1444 = vmatmul.bf16.gmra.mxu0 %v1431
      %v1445 = vpop.f32.mrf.mxu0
      %v1446 = vadd.f32 0.0, %v1445
      %v1447 = vpop.f32.mrf.mxu0
      %1448 = vdwg.mxu0
      %v1450 = vunpack.c.l.b16 %v643
      %v1451 = vpack.c.b16 %v1450, %v1450
      %1452 = vrot.lane.b32.xlu0 %v1451, 64
      %v1453 = vpop.permute.xlu0 %1452
      %v1455 = vsel %vm1103, %v1302, 0
      %v1458 = vsel %vm1312, %v1453, 0
      %1460 = vmatpush.bf16.msra.mxu0 0
      %1461 = vmatpush.bf16.msra.mxu0 0
      %1462 = vmatpush.bf16.msra.mxu0 0
      %1463 = vmatpush.bf16.msra.mxu0 0
      %1464 = vmatpush.bf16.msra.mxu0 0
      %1465 = vmatpush.bf16.msra.mxu0 0
      %1466 = vmatpush.bf16.msra.mxu0 0
      %1467 = vmatpush.bf16.msra.mxu0 %v1458
      %1468 = vmatmul.bf16.gmra.mxu0 %v1455
      %v1469 = vpop.f32.mrf.mxu0
      %v1470 = vadd.f32 0.0, %v1469
      %v1471 = vpop.f32.mrf.mxu0
      %1472 = vdwg.mxu0
      %v1474 = vunpack.c.l.b16 %v644
      %v1475 = vpack.c.b16 %v1474, %v1474
      %1476 = vrot.lane.b32.xlu0 %v1475, 64
      %v1477 = vpop.permute.xlu0 %1476
      %v1479 = vsel %vm1103, %v1303, 0
      %v1482 = vsel %vm1312, %v1477, 0
      %1484 = vmatpush.bf16.msra.mxu0 0
      %1485 = vmatpush.bf16.msra.mxu0 0
      %1486 = vmatpush.bf16.msra.mxu0 0
      %1487 = vmatpush.bf16.msra.mxu0 0
      %1488 = vmatpush.bf16.msra.mxu0 0
      %1489 = vmatpush.bf16.msra.mxu0 0
      %1490 = vmatpush.bf16.msra.mxu0 0
      %1491 = vmatpush.bf16.msra.mxu0 %v1482
      %1492 = vmatmul.bf16.gmra.mxu0 %v1479
      %v1493 = vpop.f32.mrf.mxu0
      %v1494 = vadd.f32 0.0, %v1493
      %v1495 = vpop.f32.mrf.mxu0
      %1496 = vdwg.mxu0
      %v1497 = vpack.c.bf16 %v1326, %v1326
      %v1498 = vpack.c.bf16 %v1350, %v1350
      %v1499 = vpack.c.bf16 %v1374, %v1374
      %v1500 = vpack.c.bf16 %v1398, %v1398
      %v1501 = vpack.c.bf16 %v1422, %v1422
      %v1502 = vpack.c.bf16 %v1446, %v1446
      %v1503 = vpack.c.bf16 %v1470, %v1470
      %v1504 = vpack.c.bf16 %v1494, %v1494
      %vm1505 = vcmask 60416
      %1506 = vst.msk [vmem:[#allocation2] sm:$0xf] %vm1505, %v1497
      %1507 = vst.msk [vmem:[#allocation2 + $0x4] sm:$0xf] %vm1505, %v1498
      %1508 = vst.msk [vmem:[#allocation2 + $0x8] sm:$0xf] %vm1505, %v1499
      %1509 = vst.msk [vmem:[#allocation2 + $0xc] sm:$0xf] %vm1505, %v1500
      %1510 = vst.msk [vmem:[#allocation2 + $0x10] sm:$0xf] %vm1505, %v1501
      %1511 = vst.msk [vmem:[#allocation2 + $0x14] sm:$0xf] %vm1505, %v1502
      %1512 = vst.msk [vmem:[#allocation2 + $0x18] sm:$0xf] %vm1505, %v1503
      %1513 = vst.msk [vmem:[#allocation2 + $0x1c] sm:$0xf] %vm1505, %v1504
      %1514 = vrot.lane.b32.xlu0 %v656, 108
      %v1515 = vpop.permute.xlu0 %1514
      %1516 = vrot.lane.b32.xlu0 %v661, 76
      %v1517 = vpop.permute.xlu0 %1516
      %v1519 = vsel %vm664, %v1515, 0
      %v1522 = vsel %vm664, %v1517, 0
      %1524 = vmatpush.bf16.xpose.msra.mxu0 0
      %1525 = vmatpush.bf16.xpose.msra.mxu0 0
      %1526 = vmatpush.bf16.xpose.msra.mxu0 0
      %1527 = vmatpush.bf16.xpose.msra.mxu0 0
      %1528 = vmatpush.bf16.xpose.msra.mxu0 0
      %1529 = vmatpush.bf16.xpose.msra.mxu0 0
      %1530 = vmatpush.bf16.xpose.msra.mxu0 0
      %1531 = vmatpush.bf16.xpose.msra.mxu0 %v1522
      %1532 = vmatmul.bf16.gmra.mxu0 %v1519
      %v1533 = vpop.f32.mrf.mxu0
      %v1534 = vadd.f32 0.0, %v1533
      %v1535 = vpop.f32.mrf.mxu0
      %1536 = vdwg.mxu0
      %1537 = vrot.lane.b32.xlu0 %v686, 108
      %v1538 = vpop.permute.xlu0 %1537
      %1539 = vrot.lane.b32.xlu0 %v691, 76
      %v1540 = vpop.permute.xlu0 %1539
      %v1542 = vsel %vm664, %v1538, 0
      %v1545 = vsel %vm664, %v1540, 0
      %1547 = vmatpush.bf16.xpose.msra.mxu0 0
      %1548 = vmatpush.bf16.xpose.msra.mxu0 0
      %1549 = vmatpush.bf16.xpose.msra.mxu0 0
      %1550 = vmatpush.bf16.xpose.msra.mxu0 0
      %1551 = vmatpush.bf16.xpose.msra.mxu0 0
      %1552 = vmatpush.bf16.xpose.msra.mxu0 0
      %1553 = vmatpush.bf16.xpose.msra.mxu0 0
      %1554 = vmatpush.bf16.xpose.msra.mxu0 %v1545
      %1555 = vmatmul.bf16.gmra.mxu0 %v1542
      %v1556 = vpop.f32.mrf.mxu0
      %v1557 = vadd.f32 0.0, %v1556
      %v1558 = vpop.f32.mrf.mxu0
      %1559 = vdwg.mxu0
      %1560 = vrot.lane.b32.xlu0 %v715, 108
      %v1561 = vpop.permute.xlu0 %1560
      %1562 = vrot.lane.b32.xlu0 %v720, 76
      %v1563 = vpop.permute.xlu0 %1562
      %v1565 = vsel %vm664, %v1561, 0
      %v1568 = vsel %vm664, %v1563, 0
      %1570 = vmatpush.bf16.xpose.msra.mxu0 0
      %1571 = vmatpush.bf16.xpose.msra.mxu0 0
      %1572 = vmatpush.bf16.xpose.msra.mxu0 0
      %1573 = vmatpush.bf16.xpose.msra.mxu0 0
      %1574 = vmatpush.bf16.xpose.msra.mxu0 0
      %1575 = vmatpush.bf16.xpose.msra.mxu0 0
      %1576 = vmatpush.bf16.xpose.msra.mxu0 0
      %1577 = vmatpush.bf16.xpose.msra.mxu0 %v1568
      %1578 = vmatmul.bf16.gmra.mxu0 %v1565
      %v1579 = vpop.f32.mrf.mxu0
      %v1580 = vadd.f32 0.0, %v1579
      %v1581 = vpop.f32.mrf.mxu0
      %1582 = vdwg.mxu0
      %1583 = vrot.lane.b32.xlu0 %v744, 108
      %v1584 = vpop.permute.xlu0 %1583
      %1585 = vrot.lane.b32.xlu0 %v749, 76
      %v1586 = vpop.permute.xlu0 %1585
      %v1588 = vsel %vm664, %v1584, 0
      %v1591 = vsel %vm664, %v1586, 0
      %1593 = vmatpush.bf16.xpose.msra.mxu0 0
      %1594 = vmatpush.bf16.xpose.msra.mxu0 0
      %1595 = vmatpush.bf16.xpose.msra.mxu0 0
      %1596 = vmatpush.bf16.xpose.msra.mxu0 0
      %1597 = vmatpush.bf16.xpose.msra.mxu0 0
      %1598 = vmatpush.bf16.xpose.msra.mxu0 0
      %1599 = vmatpush.bf16.xpose.msra.mxu0 0
      %1600 = vmatpush.bf16.xpose.msra.mxu0 %v1591
      %1601 = vmatmul.bf16.gmra.mxu0 %v1588
      %v1602 = vpop.f32.mrf.mxu0
      %v1603 = vadd.f32 0.0, %v1602
      %v1604 = vpop.f32.mrf.mxu0
      %1605 = vdwg.mxu0
      %1606 = vrot.lane.b32.xlu0 %v773, 108
      %v1607 = vpop.permute.xlu0 %1606
      %1608 = vrot.lane.b32.xlu0 %v778, 76
      %v1609 = vpop.permute.xlu0 %1608
      %v1611 = vsel %vm664, %v1607, 0
      %v1614 = vsel %vm664, %v1609, 0
      %1616 = vmatpush.bf16.xpose.msra.mxu0 0
      %1617 = vmatpush.bf16.xpose.msra.mxu0 0
      %1618 = vmatpush.bf16.xpose.msra.mxu0 0
      %1619 = vmatpush.bf16.xpose.msra.mxu0 0
      %1620 = vmatpush.bf16.xpose.msra.mxu0 0
      %1621 = vmatpush.bf16.xpose.msra.mxu0 0
      %1622 = vmatpush.bf16.xpose.msra.mxu0 0
      %1623 = vmatpush.bf16.xpose.msra.mxu0 %v1614
      %1624 = vmatmul.bf16.gmra.mxu0 %v1611
      %v1625 = vpop.f32.mrf.mxu0
      %v1626 = vadd.f32 0.0, %v1625
      %v1627 = vpop.f32.mrf.mxu0
      %1628 = vdwg.mxu0
      %1629 = vrot.lane.b32.xlu0 %v802, 108
      %v1630 = vpop.permute.xlu0 %1629
      %1631 = vrot.lane.b32.xlu0 %v807, 76
      %v1632 = vpop.permute.xlu0 %1631
      %v1634 = vsel %vm664, %v1630, 0
      %v1637 = vsel %vm664, %v1632, 0
      %1639 = vmatpush.bf16.xpose.msra.mxu0 0
      %1640 = vmatpush.bf16.xpose.msra.mxu0 0
      %1641 = vmatpush.bf16.xpose.msra.mxu0 0
      %1642 = vmatpush.bf16.xpose.msra.mxu0 0
      %1643 = vmatpush.bf16.xpose.msra.mxu0 0
      %1644 = vmatpush.bf16.xpose.msra.mxu0 0
      %1645 = vmatpush.bf16.xpose.msra.mxu0 0
      %1646 = vmatpush.bf16.xpose.msra.mxu0 %v1637
      %1647 = vmatmul.bf16.gmra.mxu0 %v1634
      %v1648 = vpop.f32.mrf.mxu0
      %v1649 = vadd.f32 0.0, %v1648
      %v1650 = vpop.f32.mrf.mxu0
      %1651 = vdwg.mxu0
      %1652 = vrot.lane.b32.xlu0 %v831, 108
      %v1653 = vpop.permute.xlu0 %1652
      %1654 = vrot.lane.b32.xlu0 %v836, 76
      %v1655 = vpop.permute.xlu0 %1654
      %v1657 = vsel %vm664, %v1653, 0
      %v1660 = vsel %vm664, %v1655, 0
      %1662 = vmatpush.bf16.xpose.msra.mxu0 0
      %1663 = vmatpush.bf16.xpose.msra.mxu0 0
      %1664 = vmatpush.bf16.xpose.msra.mxu0 0
      %1665 = vmatpush.bf16.xpose.msra.mxu0 0
      %1666 = vmatpush.bf16.xpose.msra.mxu0 0
      %1667 = vmatpush.bf16.xpose.msra.mxu0 0
      %1668 = vmatpush.bf16.xpose.msra.mxu0 0
      %1669 = vmatpush.bf16.xpose.msra.mxu0 %v1660
      %1670 = vmatmul.bf16.gmra.mxu0 %v1657
      %v1671 = vpop.f32.mrf.mxu0
      %v1672 = vadd.f32 0.0, %v1671
      %v1673 = vpop.f32.mrf.mxu0
      %1674 = vdwg.mxu0
      %1675 = vrot.lane.b32.xlu0 %v860, 108
      %v1676 = vpop.permute.xlu0 %1675
      %1677 = vrot.lane.b32.xlu0 %v865, 76
      %v1678 = vpop.permute.xlu0 %1677
      %v1680 = vsel %vm664, %v1676, 0
      %v1683 = vsel %vm664, %v1678, 0
      %1685 = vmatpush.bf16.xpose.msra.mxu0 0
      %1686 = vmatpush.bf16.xpose.msra.mxu0 0
      %1687 = vmatpush.bf16.xpose.msra.mxu0 0
      %1688 = vmatpush.bf16.xpose.msra.mxu0 0
      %1689 = vmatpush.bf16.xpose.msra.mxu0 0
      %1690 = vmatpush.bf16.xpose.msra.mxu0 0
      %1691 = vmatpush.bf16.xpose.msra.mxu0 0
      %1692 = vmatpush.bf16.xpose.msra.mxu0 %v1683
      %1693 = vmatmul.bf16.gmra.mxu0 %v1680
      %v1694 = vpop.f32.mrf.mxu0
      %v1695 = vadd.f32 0.0, %v1694
      %v1696 = vpop.f32.mrf.mxu0
      %1697 = vdwg.mxu0
      %v1699 = vunpack.c.l.b16 %v421
      %v1700 = vpack.c.b16 %v1699, %v1699
      %1701 = vrot.lane.b32.xlu0 %v1700, 124
      %v1702 = vpop.permute.xlu0 %1701
      %1703 = vrot.lane.b32.xlu0 %v889, 92
      %v1704 = vpop.permute.xlu0 %1703
      %v1706 = vsel %vm664, %v1702, 0
      %v1709 = vsel %vm664, %v1704, 0
      %1711 = vmatpush.bf16.xpose.msra.mxu0 0
      %1712 = vmatpush.bf16.xpose.msra.mxu0 0
      %1713 = vmatpush.bf16.xpose.msra.mxu0 0
      %1714 = vmatpush.bf16.xpose.msra.mxu0 0
      %1715 = vmatpush.bf16.xpose.msra.mxu0 0
      %1716 = vmatpush.bf16.xpose.msra.mxu0 0
      %1717 = vmatpush.bf16.xpose.msra.mxu0 0
      %1718 = vmatpush.bf16.xpose.msra.mxu0 %v1709
      %1719 = vmatmul.bf16.gmra.mxu0 %v1706
      %v1720 = vpop.f32.mrf.mxu0
      %v1721 = vadd.f32 %v1534, %v1720
      %v1722 = vpop.f32.mrf.mxu0
      %1723 = vdwg.mxu0
      %v1725 = vunpack.c.l.b16 %v422
      %v1726 = vpack.c.b16 %v1725, %v1725
      %1727 = vrot.lane.b32.xlu0 %v1726, 124
      %v1728 = vpop.permute.xlu0 %1727
      %1729 = vrot.lane.b32.xlu0 %v913, 92
      %v1730 = vpop.permute.xlu0 %1729
      %v1732 = vsel %vm664, %v1728, 0
      %v1735 = vsel %vm664, %v1730, 0
      %1737 = vmatpush.bf16.xpose.msra.mxu0 0
      %1738 = vmatpush.bf16.xpose.msra.mxu0 0
      %1739 = vmatpush.bf16.xpose.msra.mxu0 0
      %1740 = vmatpush.bf16.xpose.msra.mxu0 0
      %1741 = vmatpush.bf16.xpose.msra.mxu0 0
      %1742 = vmatpush.bf16.xpose.msra.mxu0 0
      %1743 = vmatpush.bf16.xpose.msra.mxu0 0
      %1744 = vmatpush.bf16.xpose.msra.mxu0 %v1735
      %1745 = vmatmul.bf16.gmra.mxu0 %v1732
      %v1746 = vpop.f32.mrf.mxu0
      %v1747 = vadd.f32 %v1557, %v1746
      %v1748 = vpop.f32.mrf.mxu0
      %1749 = vdwg.mxu0
      %v1751 = vunpack.c.l.b16 %v423
      %v1752 = vpack.c.b16 %v1751, %v1751
      %1753 = vrot.lane.b32.xlu0 %v1752, 124
      %v1754 = vpop.permute.xlu0 %1753
      %1755 = vrot.lane.b32.xlu0 %v937, 92
      %v1756 = vpop.permute.xlu0 %1755
      %v1758 = vsel %vm664, %v1754, 0
      %v1761 = vsel %vm664, %v1756, 0
      %1763 = vmatpush.bf16.xpose.msra.mxu0 0
      %1764 = vmatpush.bf16.xpose.msra.mxu0 0
      %1765 = vmatpush.bf16.xpose.msra.mxu0 0
      %1766 = vmatpush.bf16.xpose.msra.mxu0 0
      %1767 = vmatpush.bf16.xpose.msra.mxu0 0
      %1768 = vmatpush.bf16.xpose.msra.mxu0 0
      %1769 = vmatpush.bf16.xpose.msra.mxu0 0
      %1770 = vmatpush.bf16.xpose.msra.mxu0 %v1761
      %1771 = vmatmul.bf16.gmra.mxu0 %v1758
      %v1772 = vpop.f32.mrf.mxu0
      %v1773 = vadd.f32 %v1580, %v1772
      %v1774 = vpop.f32.mrf.mxu0
      %1775 = vdwg.mxu0
      %v1777 = vunpack.c.l.b16 %v424
      %v1778 = vpack.c.b16 %v1777, %v1777
      %1779 = vrot.lane.b32.xlu0 %v1778, 124
      %v1780 = vpop.permute.xlu0 %1779
      %1781 = vrot.lane.b32.xlu0 %v961, 92
      %v1782 = vpop.permute.xlu0 %1781
      %v1784 = vsel %vm664, %v1780, 0
      %v1787 = vsel %vm664, %v1782, 0
      %1789 = vmatpush.bf16.xpose.msra.mxu0 0
      %1790 = vmatpush.bf16.xpose.msra.mxu0 0
      %1791 = vmatpush.bf16.xpose.msra.mxu0 0
      %1792 = vmatpush.bf16.xpose.msra.mxu0 0
      %1793 = vmatpush.bf16.xpose.msra.mxu0 0
      %1794 = vmatpush.bf16.xpose.msra.mxu0 0
      %1795 = vmatpush.bf16.xpose.msra.mxu0 0
      %1796 = vmatpush.bf16.xpose.msra.mxu0 %v1787
      %1797 = vmatmul.bf16.gmra.mxu0 %v1784
      %v1798 = vpop.f32.mrf.mxu0
      %v1799 = vadd.f32 %v1603, %v1798
      %v1800 = vpop.f32.mrf.mxu0
      %1801 = vdwg.mxu0
      %v1803 = vunpack.c.l.b16 %v425
      %v1804 = vpack.c.b16 %v1803, %v1803
      %1805 = vrot.lane.b32.xlu0 %v1804, 124
      %v1806 = vpop.permute.xlu0 %1805
      %1807 = vrot.lane.b32.xlu0 %v985, 92
      %v1808 = vpop.permute.xlu0 %1807
      %v1810 = vsel %vm664, %v1806, 0
      %v1813 = vsel %vm664, %v1808, 0
      %1815 = vmatpush.bf16.xpose.msra.mxu0 0
      %1816 = vmatpush.bf16.xpose.msra.mxu0 0
      %1817 = vmatpush.bf16.xpose.msra.mxu0 0
      %1818 = vmatpush.bf16.xpose.msra.mxu0 0
      %1819 = vmatpush.bf16.xpose.msra.mxu0 0
      %1820 = vmatpush.bf16.xpose.msra.mxu0 0
      %1821 = vmatpush.bf16.xpose.msra.mxu0 0
      %1822 = vmatpush.bf16.xpose.msra.mxu0 %v1813
      %1823 = vmatmul.bf16.gmra.mxu0 %v1810
      %v1824 = vpop.f32.mrf.mxu0
      %v1825 = vadd.f32 %v1626, %v1824
      %v1826 = vpop.f32.mrf.mxu0
      %1827 = vdwg.mxu0
      %v1829 = vunpack.c.l.b16 %v426
      %v1830 = vpack.c.b16 %v1829, %v1829
      %1831 = vrot.lane.b32.xlu0 %v1830, 124
      %v1832 = vpop.permute.xlu0 %1831
      %1833 = vrot.lane.b32.xlu0 %v1009, 92
      %v1834 = vpop.permute.xlu0 %1833
      %v1836 = vsel %vm664, %v1832, 0
      %v1839 = vsel %vm664, %v1834, 0
      %1841 = vmatpush.bf16.xpose.msra.mxu0 0
      %1842 = vmatpush.bf16.xpose.msra.mxu0 0
      %1843 = vmatpush.bf16.xpose.msra.mxu0 0
      %1844 = vmatpush.bf16.xpose.msra.mxu0 0
      %1845 = vmatpush.bf16.xpose.msra.mxu0 0
      %1846 = vmatpush.bf16.xpose.msra.mxu0 0
      %1847 = vmatpush.bf16.xpose.msra.mxu0 0
      %1848 = vmatpush.bf16.xpose.msra.mxu0 %v1839
      %1849 = vmatmul.bf16.gmra.mxu0 %v1836
      %v1850 = vpop.f32.mrf.mxu0
      %v1851 = vadd.f32 %v1649, %v1850
      %v1852 = vpop.f32.mrf.mxu0
      %1853 = vdwg.mxu0
      %v1855 = vunpack.c.l.b16 %v427
      %v1856 = vpack.c.b16 %v1855, %v1855
      %1857 = vrot.lane.b32.xlu0 %v1856, 124
      %v1858 = vpop.permute.xlu0 %1857
      %1859 = vrot.lane.b32.xlu0 %v1033, 92
      %v1860 = vpop.permute.xlu0 %1859
      %v1862 = vsel %vm664, %v1858, 0
      %v1865 = vsel %vm664, %v1860, 0
      %1867 = vmatpush.bf16.xpose.msra.mxu0 0
      %1868 = vmatpush.bf16.xpose.msra.mxu0 0
      %1869 = vmatpush.bf16.xpose.msra.mxu0 0
      %1870 = vmatpush.bf16.xpose.msra.mxu0 0
      %1871 = vmatpush.bf16.xpose.msra.mxu0 0
      %1872 = vmatpush.bf16.xpose.msra.mxu0 0
      %1873 = vmatpush.bf16.xpose.msra.mxu0 0
      %1874 = vmatpush.bf16.xpose.msra.mxu0 %v1865
      %1875 = vmatmul.bf16.gmra.mxu0 %v1862
      %v1876 = vpop.f32.mrf.mxu0
      %v1877 = vadd.f32 %v1672, %v1876
      %v1878 = vpop.f32.mrf.mxu0
      %1879 = vdwg.mxu0
      %v1881 = vunpack.c.l.b16 %v428
      %v1882 = vpack.c.b16 %v1881, %v1881
      %1883 = vrot.lane.b32.xlu0 %v1882, 124
      %v1884 = vpop.permute.xlu0 %1883
      %1885 = vrot.lane.b32.xlu0 %v1057, 92
      %v1886 = vpop.permute.xlu0 %1885
      %v1888 = vsel %vm664, %v1884, 0
      %v1891 = vsel %vm664, %v1886, 0
      %1893 = vmatpush.bf16.xpose.msra.mxu0 0
      %1894 = vmatpush.bf16.xpose.msra.mxu0 0
      %1895 = vmatpush.bf16.xpose.msra.mxu0 0
      %1896 = vmatpush.bf16.xpose.msra.mxu0 0
      %1897 = vmatpush.bf16.xpose.msra.mxu0 0
      %1898 = vmatpush.bf16.xpose.msra.mxu0 0
      %1899 = vmatpush.bf16.xpose.msra.mxu0 0
      %1900 = vmatpush.bf16.xpose.msra.mxu0 %v1891
      %1901 = vmatmul.bf16.gmra.mxu0 %v1888
      %v1902 = vpop.f32.mrf.mxu0
      %v1903 = vadd.f32 %v1695, %v1902
      %v1904 = vpop.f32.mrf.mxu0
      %1905 = vdwg.mxu0
      %v1906 = vadd.f32 %v1721, %v1079
      %v1907 = vadd.f32 %v1747, %v1080
      %v1908 = vadd.f32 %v1773, %v1081
      %v1909 = vadd.f32 %v1799, %v1082
      %v1910 = vadd.f32 %v1825, %v1083
      %v1911 = vadd.f32 %v1851, %v1084
      %v1912 = vadd.f32 %v1877, %v1085
      %v1913 = vadd.f32 %v1903, %v1086
      %v1914 = vsel %vm1103, %v1906, -inf
      %1915 = vmax.xlane.f32.xlu0 %v1914
      %v1916 = vpop.xlane.xlu0 %1915
      %v1917 = vsel %vm1103, %v1907, -inf
      %1918 = vmax.xlane.f32.xlu0 %v1917
      %v1919 = vpop.xlane.xlu0 %1918
      %v1920 = vsel %vm1103, %v1908, -inf
      %1921 = vmax.xlane.f32.xlu0 %v1920
      %v1922 = vpop.xlane.xlu0 %1921
      %v1923 = vsel %vm1103, %v1909, -inf
      %1924 = vmax.xlane.f32.xlu0 %v1923
      %v1925 = vpop.xlane.xlu0 %1924
      %v1926 = vsel %vm1103, %v1910, -inf
      %1927 = vmax.xlane.f32.xlu0 %v1926
      %v1928 = vpop.xlane.xlu0 %1927
      %v1929 = vsel %vm1103, %v1911, -inf
      %1930 = vmax.xlane.f32.xlu0 %v1929
      %v1931 = vpop.xlane.xlu0 %1930
      %v1932 = vsel %vm1103, %v1912, -inf
      %1933 = vmax.xlane.f32.xlu0 %v1932
      %v1934 = vpop.xlane.xlu0 %1933
      %v1935 = vsel %vm1103, %v1913, -inf
      %1936 = vmax.xlane.f32.xlu0 %v1935
      %v1937 = vpop.xlane.xlu0 %1936
      %v1938 = vsub.f32 %v1906, %v1916
      %v1939 = vsub.f32 %v1907, %v1919
      %v1940 = vsub.f32 %v1908, %v1922
      %v1941 = vsub.f32 %v1909, %v1925
      %v1942 = vsub.f32 %v1910, %v1928
      %v1943 = vsub.f32 %v1911, %v1931
      %v1944 = vsub.f32 %v1912, %v1934
      %v1945 = vsub.f32 %v1913, %v1937
      %v1946 = vmul.f32 %v1938, 1.442695
      %v1947 = vpow.pop %v1946
      %v1948 = vmul.f32 %v1939, 1.442695
      %v1949 = vpow.pop %v1948
      %v1950 = vmul.f32 %v1940, 1.442695
      %v1951 = vpow.pop %v1950
      %v1952 = vmul.f32 %v1941, 1.442695
      %v1953 = vpow.pop %v1952
      %v1954 = vmul.f32 %v1942, 1.442695
      %v1955 = vpow.pop %v1954
      %v1956 = vmul.f32 %v1943, 1.442695
      %v1957 = vpow.pop %v1956
      %v1958 = vmul.f32 %v1944, 1.442695
      %v1959 = vpow.pop %v1958
      %v1960 = vmul.f32 %v1945, 1.442695
      %v1961 = vpow.pop %v1960
      %v1962 = vsel %vm1103, %v1947, 0.0
      %1963 = vadd.xlane.f32.xlu0 %v1962
      %v1964 = vpop.xlane.xlu0 %1963
      %v1965 = vsel %vm1103, %v1949, 0.0
      %1966 = vadd.xlane.f32.xlu0 %v1965
      %v1967 = vpop.xlane.xlu0 %1966
      %v1968 = vsel %vm1103, %v1951, 0.0
      %1969 = vadd.xlane.f32.xlu0 %v1968
      %v1970 = vpop.xlane.xlu0 %1969
      %v1971 = vsel %vm1103, %v1953, 0.0
      %1972 = vadd.xlane.f32.xlu0 %v1971
      %v1973 = vpop.xlane.xlu0 %1972
      %v1974 = vsel %vm1103, %v1955, 0.0
      %1975 = vadd.xlane.f32.xlu0 %v1974
      %v1976 = vpop.xlane.xlu0 %1975
      %v1977 = vsel %vm1103, %v1957, 0.0
      %1978 = vadd.xlane.f32.xlu0 %v1977
      %v1979 = vpop.xlane.xlu0 %1978
      %v1980 = vsel %vm1103, %v1959, 0.0
      %1981 = vadd.xlane.f32.xlu0 %v1980
      %v1982 = vpop.xlane.xlu0 %1981
      %v1983 = vsel %vm1103, %v1961, 0.0
      %1984 = vadd.xlane.f32.xlu0 %v1983
      %v1985 = vpop.xlane.xlu0 %1984
      %v1986 = vrcp.pop %v1964
      %v1987 = vmul.f32 %v1964, %v1986
      %v1988 = vsub.f32 1.0, %v1987
      %v1989 = vmul.f32 %v1986, %v1988
      %v1990 = vadd.f32 %v1986, %v1989
      %vm1991 = vweird.f32 %v1964
      %vm1992 = vweird.f32 %v1986
      %vm1993 = vmor %vm1991, %vm1992
      %v1994 = vsel %vm1993, %v1986, %v1990
      %v1995 = vand.u32 2147483647, %v1964
      %vm1996 = vcmp.eq.f32.partialorder %v1995, 8.507059e+37
      %v1997 = vand.u32 %v1964, 2147483648
      %v1998 = vor.u32 1.1754944e-38, %v1997
      %v1999 = vsel %vm1996, %v1998, %v1994
      %v2000 = vrcp.pop %v1967
      %v2001 = vmul.f32 %v1967, %v2000
      %v2002 = vsub.f32 1.0, %v2001
      %v2003 = vmul.f32 %v2000, %v2002
      %v2004 = vadd.f32 %v2000, %v2003
      %vm2005 = vweird.f32 %v1967
      %vm2006 = vweird.f32 %v2000
      %vm2007 = vmor %vm2005, %vm2006
      %v2008 = vsel %vm2007, %v2000, %v2004
      %v2009 = vand.u32 2147483647, %v1967
      %vm2010 = vcmp.eq.f32.partialorder %v2009, 8.507059e+37
      %v2011 = vand.u32 %v1967, 2147483648
      %v2012 = vor.u32 1.1754944e-38, %v2011
      %v2013 = vsel %vm2010, %v2012, %v2008
      %v2014 = vrcp.pop %v1970
      %v2015 = vmul.f32 %v1970, %v2014
      %v2016 = vsub.f32 1.0, %v2015
      %v2017 = vmul.f32 %v2014, %v2016
      %v2018 = vadd.f32 %v2014, %v2017
      %vm2019 = vweird.f32 %v1970
      %vm2020 = vweird.f32 %v2014
      %vm2021 = vmor %vm2019, %vm2020
      %v2022 = vsel %vm2021, %v2014, %v2018
      %v2023 = vand.u32 2147483647, %v1970
      %vm2024 = vcmp.eq.f32.partialorder %v2023, 8.507059e+37
      %v2025 = vand.u32 %v1970, 2147483648
      %v2026 = vor.u32 1.1754944e-38, %v2025
      %v2027 = vsel %vm2024, %v2026, %v2022
      %v2028 = vrcp.pop %v1973
      %v2029 = vmul.f32 %v1973, %v2028
      %v2030 = vsub.f32 1.0, %v2029
      %v2031 = vmul.f32 %v2028, %v2030
      %v2032 = vadd.f32 %v2028, %v2031
      %vm2033 = vweird.f32 %v1973
      %vm2034 = vweird.f32 %v2028
      %vm2035 = vmor %vm2033, %vm2034
      %v2036 = vsel %vm2035, %v2028, %v2032
      %v2037 = vand.u32 2147483647, %v1973
      %vm2038 = vcmp.eq.f32.partialorder %v2037, 8.507059e+37
      %v2039 = vand.u32 %v1973, 2147483648
      %v2040 = vor.u32 1.1754944e-38, %v2039
      %v2041 = vsel %vm2038, %v2040, %v2036
      %v2042 = vrcp.pop %v1976
      %v2043 = vmul.f32 %v1976, %v2042
      %v2044 = vsub.f32 1.0, %v2043
      %v2045 = vmul.f32 %v2042, %v2044
      %v2046 = vadd.f32 %v2042, %v2045
      %vm2047 = vweird.f32 %v1976
      %vm2048 = vweird.f32 %v2042
      %vm2049 = vmor %vm2047, %vm2048
      %v2050 = vsel %vm2049, %v2042, %v2046
      %v2051 = vand.u32 2147483647, %v1976
      %vm2052 = vcmp.eq.f32.partialorder %v2051, 8.507059e+37
      %v2053 = vand.u32 %v1976, 2147483648
      %v2054 = vor.u32 1.1754944e-38, %v2053
      %v2055 = vsel %vm2052, %v2054, %v2050
      %v2056 = vrcp.pop %v1979
      %v2057 = vmul.f32 %v1979, %v2056
      %v2058 = vsub.f32 1.0, %v2057
      %v2059 = vmul.f32 %v2056, %v2058
      %v2060 = vadd.f32 %v2056, %v2059
      %vm2061 = vweird.f32 %v1979
      %vm2062 = vweird.f32 %v2056
      %vm2063 = vmor %vm2061, %vm2062
      %v2064 = vsel %vm2063, %v2056, %v2060
      %v2065 = vand.u32 2147483647, %v1979
      %vm2066 = vcmp.eq.f32.partialorder %v2065, 8.507059e+37
      %v2067 = vand.u32 %v1979, 2147483648
      %v2068 = vor.u32 1.1754944e-38, %v2067
      %v2069 = vsel %vm2066, %v2068, %v2064
      %v2070 = vrcp.pop %v1982
      %v2071 = vmul.f32 %v1982, %v2070
      %v2072 = vsub.f32 1.0, %v2071
      %v2073 = vmul.f32 %v2070, %v2072
      %v2074 = vadd.f32 %v2070, %v2073
      %vm2075 = vweird.f32 %v1982
      %vm2076 = vweird.f32 %v2070
      %vm2077 = vmor %vm2075, %vm2076
      %v2078 = vsel %vm2077, %v2070, %v2074
      %v2079 = vand.u32 2147483647, %v1982
      %vm2080 = vcmp.eq.f32.partialorder %v2079, 8.507059e+37
      %v2081 = vand.u32 %v1982, 2147483648
      %v2082 = vor.u32 1.1754944e-38, %v2081
      %v2083 = vsel %vm2080, %v2082, %v2078
      %v2084 = vrcp.pop %v1985
      %v2085 = vmul.f32 %v1985, %v2084
      %v2086 = vsub.f32 1.0, %v2085
      %v2087 = vmul.f32 %v2084, %v2086
      %v2088 = vadd.f32 %v2084, %v2087
      %vm2089 = vweird.f32 %v1985
      %vm2090 = vweird.f32 %v2084
      %vm2091 = vmor %vm2089, %vm2090
      %v2092 = vsel %vm2091, %v2084, %v2088
      %v2093 = vand.u32 2147483647, %v1985
      %vm2094 = vcmp.eq.f32.partialorder %v2093, 8.507059e+37
      %v2095 = vand.u32 %v1985, 2147483648
      %v2096 = vor.u32 1.1754944e-38, %v2095
      %v2097 = vsel %vm2094, %v2096, %v2092
      %v2098 = vmul.f32 %v1947, %v1999
      %v2099 = vmul.f32 %v1949, %v2013
      %v2100 = vmul.f32 %v1951, %v2027
      %v2101 = vmul.f32 %v1953, %v2041
      %v2102 = vmul.f32 %v1955, %v2055
      %v2103 = vmul.f32 %v1957, %v2069
      %v2104 = vmul.f32 %v1959, %v2083
      %v2105 = vmul.f32 %v1961, %v2097
      %v2106 = vpack.c.bf16 %v2098, %v2098
      %v2107 = vpack.c.bf16 %v2099, %v2099
      %v2108 = vpack.c.bf16 %v2100, %v2100
      %v2109 = vpack.c.bf16 %v2101, %v2101
      %v2110 = vpack.c.bf16 %v2102, %v2102
      %v2111 = vpack.c.bf16 %v2103, %v2103
      %v2112 = vpack.c.bf16 %v2104, %v2104
      %v2113 = vpack.c.bf16 %v2105, %v2105
      %2114 = vrot.lane.b32.xlu0 %v1306, 56
      %v2115 = vpop.permute.xlu0 %2114
      %v2117 = vsel %vm1103, %v2106, 0
      %v2120 = vsel %vm1312, %v2115, 0
      %2122 = vmatpush.bf16.msra.mxu0 0
      %2123 = vmatpush.bf16.msra.mxu0 0
      %2124 = vmatpush.bf16.msra.mxu0 0
      %2125 = vmatpush.bf16.msra.mxu0 0
      %2126 = vmatpush.bf16.msra.mxu0 0
      %2127 = vmatpush.bf16.msra.mxu0 0
      %2128 = vmatpush.bf16.msra.mxu0 0
      %2129 = vmatpush.bf16.msra.mxu0 %v2120
      %2130 = vmatmul.bf16.gmra.mxu0 %v2117
      %v2131 = vpop.f32.mrf.mxu0
      %v2132 = vadd.f32 0.0, %v2131
      %v2133 = vpop.f32.mrf.mxu0
      %2134 = vdwg.mxu0
      %2135 = vrot.lane.b32.xlu0 %v1331, 56
      %v2136 = vpop.permute.xlu0 %2135
      %v2138 = vsel %vm1103, %v2107, 0
      %v2141 = vsel %vm1312, %v2136, 0
      %2143 = vmatpush.bf16.msra.mxu0 0
      %2144 = vmatpush.bf16.msra.mxu0 0
      %2145 = vmatpush.bf16.msra.mxu0 0
      %2146 = vmatpush.bf16.msra.mxu0 0
      %2147 = vmatpush.bf16.msra.mxu0 0
      %2148 = vmatpush.bf16.msra.mxu0 0
      %2149 = vmatpush.bf16.msra.mxu0 0
      %2150 = vmatpush.bf16.msra.mxu0 %v2141
      %2151 = vmatmul.bf16.gmra.mxu0 %v2138
      %v2152 = vpop.f32.mrf.mxu0
      %v2153 = vadd.f32 0.0, %v2152
      %v2154 = vpop.f32.mrf.mxu0
      %2155 = vdwg.mxu0
      %2156 = vrot.lane.b32.xlu0 %v1355, 56
      %v2157 = vpop.permute.xlu0 %2156
      %v2159 = vsel %vm1103, %v2108, 0
      %v2162 = vsel %vm1312, %v2157, 0
      %2164 = vmatpush.bf16.msra.mxu0 0
      %2165 = vmatpush.bf16.msra.mxu0 0
      %2166 = vmatpush.bf16.msra.mxu0 0
      %2167 = vmatpush.bf16.msra.mxu0 0
      %2168 = vmatpush.bf16.msra.mxu0 0
      %2169 = vmatpush.bf16.msra.mxu0 0
      %2170 = vmatpush.bf16.msra.mxu0 0
      %2171 = vmatpush.bf16.msra.mxu0 %v2162
      %2172 = vmatmul.bf16.gmra.mxu0 %v2159
      %v2173 = vpop.f32.mrf.mxu0
      %v2174 = vadd.f32 0.0, %v2173
      %v2175 = vpop.f32.mrf.mxu0
      %2176 = vdwg.mxu0
      %2177 = vrot.lane.b32.xlu0 %v1379, 56
      %v2178 = vpop.permute.xlu0 %2177
      %v2180 = vsel %vm1103, %v2109, 0
      %v2183 = vsel %vm1312, %v2178, 0
      %2185 = vmatpush.bf16.msra.mxu0 0
      %2186 = vmatpush.bf16.msra.mxu0 0
      %2187 = vmatpush.bf16.msra.mxu0 0
      %2188 = vmatpush.bf16.msra.mxu0 0
      %2189 = vmatpush.bf16.msra.mxu0 0
      %2190 = vmatpush.bf16.msra.mxu0 0
      %2191 = vmatpush.bf16.msra.mxu0 0
      %2192 = vmatpush.bf16.msra.mxu0 %v2183
      %2193 = vmatmul.bf16.gmra.mxu0 %v2180
      %v2194 = vpop.f32.mrf.mxu0
      %v2195 = vadd.f32 0.0, %v2194
      %v2196 = vpop.f32.mrf.mxu0
      %2197 = vdwg.mxu0
      %2198 = vrot.lane.b32.xlu0 %v1403, 56
      %v2199 = vpop.permute.xlu0 %2198
      %v2201 = vsel %vm1103, %v2110, 0
      %v2204 = vsel %vm1312, %v2199, 0
      %2206 = vmatpush.bf16.msra.mxu0 0
      %2207 = vmatpush.bf16.msra.mxu0 0
      %2208 = vmatpush.bf16.msra.mxu0 0
      %2209 = vmatpush.bf16.msra.mxu0 0
      %2210 = vmatpush.bf16.msra.mxu0 0
      %2211 = vmatpush.bf16.msra.mxu0 0
      %2212 = vmatpush.bf16.msra.mxu0 0
      %2213 = vmatpush.bf16.msra.mxu0 %v2204
      %2214 = vmatmul.bf16.gmra.mxu0 %v2201
      %v2215 = vpop.f32.mrf.mxu0
      %v2216 = vadd.f32 0.0, %v2215
      %v2217 = vpop.f32.mrf.mxu0
      %2218 = vdwg.mxu0
      %2219 = vrot.lane.b32.xlu0 %v1427, 56
      %v2220 = vpop.permute.xlu0 %2219
      %v2222 = vsel %vm1103, %v2111, 0
      %v2225 = vsel %vm1312, %v2220, 0
      %2227 = vmatpush.bf16.msra.mxu0 0
      %2228 = vmatpush.bf16.msra.mxu0 0
      %2229 = vmatpush.bf16.msra.mxu0 0
      %2230 = vmatpush.bf16.msra.mxu0 0
      %2231 = vmatpush.bf16.msra.mxu0 0
      %2232 = vmatpush.bf16.msra.mxu0 0
      %2233 = vmatpush.bf16.msra.mxu0 0
      %2234 = vmatpush.bf16.msra.mxu0 %v2225
      %2235 = vmatmul.bf16.gmra.mxu0 %v2222
      %v2236 = vpop.f32.mrf.mxu0
      %v2237 = vadd.f32 0.0, %v2236
      %v2238 = vpop.f32.mrf.mxu0
      %2239 = vdwg.mxu0
      %2240 = vrot.lane.b32.xlu0 %v1451, 56
      %v2241 = vpop.permute.xlu0 %2240
      %v2243 = vsel %vm1103, %v2112, 0
      %v2246 = vsel %vm1312, %v2241, 0
      %2248 = vmatpush.bf16.msra.mxu0 0
      %2249 = vmatpush.bf16.msra.mxu0 0
      %2250 = vmatpush.bf16.msra.mxu0 0
      %2251 = vmatpush.bf16.msra.mxu0 0
      %2252 = vmatpush.bf16.msra.mxu0 0
      %2253 = vmatpush.bf16.msra.mxu0 0
      %2254 = vmatpush.bf16.msra.mxu0 0
      %2255 = vmatpush.bf16.msra.mxu0 %v2246
      %2256 = vmatmul.bf16.gmra.mxu0 %v2243
      %v2257 = vpop.f32.mrf.mxu0
      %v2258 = vadd.f32 0.0, %v2257
      %v2259 = vpop.f32.mrf.mxu0
      %2260 = vdwg.mxu0
      %2261 = vrot.lane.b32.xlu0 %v1475, 56
      %v2262 = vpop.permute.xlu0 %2261
      %v2264 = vsel %vm1103, %v2113, 0
      %v2267 = vsel %vm1312, %v2262, 0
      %2269 = vmatpush.bf16.msra.mxu0 0
      %2270 = vmatpush.bf16.msra.mxu0 0
      %2271 = vmatpush.bf16.msra.mxu0 0
      %2272 = vmatpush.bf16.msra.mxu0 0
      %2273 = vmatpush.bf16.msra.mxu0 0
      %2274 = vmatpush.bf16.msra.mxu0 0
      %2275 = vmatpush.bf16.msra.mxu0 0
      %2276 = vmatpush.bf16.msra.mxu0 %v2267
      %2277 = vmatmul.bf16.gmra.mxu0 %v2264
      %v2278 = vpop.f32.mrf.mxu0
      %v2279 = vadd.f32 0.0, %v2278
      %v2280 = vpop.f32.mrf.mxu0
      %2281 = vdwg.mxu0
      %v2282 = vpack.c.bf16 %v2132, %v2132
      %v2283 = vpack.c.bf16 %v2153, %v2153
      %v2284 = vpack.c.bf16 %v2174, %v2174
      %v2285 = vpack.c.bf16 %v2195, %v2195
      %v2286 = vpack.c.bf16 %v2216, %v2216
      %v2287 = vpack.c.bf16 %v2237, %v2237
      %v2288 = vpack.c.bf16 %v2258, %v2258
      %v2289 = vpack.c.bf16 %v2279, %v2279
      %2298 = vrot.lane.b32.xlu0 %v2282, 8
      %v2299 = vpop.permute.xlu0 %2298
      %2300 = vrot.lane.b32.xlu0 %v2283, 8
      %v2301 = vpop.permute.xlu0 %2300
      %2302 = vrot.lane.b32.xlu0 %v2284, 8
      %v2303 = vpop.permute.xlu0 %2302
      %2304 = vrot.lane.b32.xlu0 %v2285, 8
      %v2305 = vpop.permute.xlu0 %2304
      %2306 = vrot.lane.b32.xlu0 %v2286, 8
      %v2307 = vpop.permute.xlu0 %2306
      %2308 = vrot.lane.b32.xlu0 %v2287, 8
      %v2309 = vpop.permute.xlu0 %2308
      %2310 = vrot.lane.b32.xlu0 %v2288, 8
      %v2311 = vpop.permute.xlu0 %2310
      %2312 = vrot.lane.b32.xlu0 %v2289, 8
      %v2313 = vpop.permute.xlu0 %2312
      %vm2322 = vcmask 126016
      %2323 = vst.msk [vmem:[#allocation2] sm:$0xf] %vm2322, %v2299
      %2324 = vst.msk [vmem:[#allocation2 + $0x4] sm:$0xf] %vm2322, %v2301
      %2325 = vst.msk [vmem:[#allocation2 + $0x8] sm:$0xf] %vm2322, %v2303
      %2326 = vst.msk [vmem:[#allocation2 + $0xc] sm:$0xf] %vm2322, %v2305
      %2327 = vst.msk [vmem:[#allocation2 + $0x10] sm:$0xf] %vm2322, %v2307
      %2328 = vst.msk [vmem:[#allocation2 + $0x14] sm:$0xf] %vm2322, %v2309
      %2329 = vst.msk [vmem:[#allocation2 + $0x18] sm:$0xf] %vm2322, %v2311
      %2330 = vst.msk [vmem:[#allocation2 + $0x1c] sm:$0xf] %vm2322, %v2313
      %2331 = vrot.lane.b32.xlu0 %v656, 104
      %v2332 = vpop.permute.xlu0 %2331
      %2333 = vrot.lane.b32.xlu0 %v661, 72
      %v2334 = vpop.permute.xlu0 %2333
      %v2336 = vsel %vm664, %v2332, 0
      %v2339 = vsel %vm664, %v2334, 0
      %2341 = vmatpush.bf16.xpose.msra.mxu0 0
      %2342 = vmatpush.bf16.xpose.msra.mxu0 0
      %2343 = vmatpush.bf16.xpose.msra.mxu0 0
      %2344 = vmatpush.bf16.xpose.msra.mxu0 0
      %2345 = vmatpush.bf16.xpose.msra.mxu0 0
      %2346 = vmatpush.bf16.xpose.msra.mxu0 0
      %2347 = vmatpush.bf16.xpose.msra.mxu0 0
      %2348 = vmatpush.bf16.xpose.msra.mxu0 %v2339
      %2349 = vmatmul.bf16.gmra.mxu0 %v2336
      %v2350 = vpop.f32.mrf.mxu0
      %v2351 = vadd.f32 0.0, %v2350
      %v2352 = vpop.f32.mrf.mxu0
      %2353 = vdwg.mxu0
      %2354 = vrot.lane.b32.xlu0 %v686, 104
      %v2355 = vpop.permute.xlu0 %2354
      %2356 = vrot.lane.b32.xlu0 %v691, 72
      %v2357 = vpop.permute.xlu0 %2356
      %v2359 = vsel %vm664, %v2355, 0
      %v2362 = vsel %vm664, %v2357, 0
      %2364 = vmatpush.bf16.xpose.msra.mxu0 0
      %2365 = vmatpush.bf16.xpose.msra.mxu0 0
      %2366 = vmatpush.bf16.xpose.msra.mxu0 0
      %2367 = vmatpush.bf16.xpose.msra.mxu0 0
      %2368 = vmatpush.bf16.xpose.msra.mxu0 0
      %2369 = vmatpush.bf16.xpose.msra.mxu0 0
      %2370 = vmatpush.bf16.xpose.msra.mxu0 0
      %2371 = vmatpush.bf16.xpose.msra.mxu0 %v2362
      %2372 = vmatmul.bf16.gmra.mxu0 %v2359
      %v2373 = vpop.f32.mrf.mxu0
      %v2374 = vadd.f32 0.0, %v2373
      %v2375 = vpop.f32.mrf.mxu0
      %2376 = vdwg.mxu0
      %2377 = vrot.lane.b32.xlu0 %v715, 104
      %v2378 = vpop.permute.xlu0 %2377
      %2379 = vrot.lane.b32.xlu0 %v720, 72
      %v2380 = vpop.permute.xlu0 %2379
      %v2382 = vsel %vm664, %v2378, 0
      %v2385 = vsel %vm664, %v2380, 0
      %2387 = vmatpush.bf16.xpose.msra.mxu0 0
      %2388 = vmatpush.bf16.xpose.msra.mxu0 0
      %2389 = vmatpush.bf16.xpose.msra.mxu0 0
      %2390 = vmatpush.bf16.xpose.msra.mxu0 0
      %2391 = vmatpush.bf16.xpose.msra.mxu0 0
      %2392 = vmatpush.bf16.xpose.msra.mxu0 0
      %2393 = vmatpush.bf16.xpose.msra.mxu0 0
      %2394 = vmatpush.bf16.xpose.msra.mxu0 %v2385
      %2395 = vmatmul.bf16.gmra.mxu0 %v2382
      %v2396 = vpop.f32.mrf.mxu0
      %v2397 = vadd.f32 0.0, %v2396
      %v2398 = vpop.f32.mrf.mxu0
      %2399 = vdwg.mxu0
      %2400 = vrot.lane.b32.xlu0 %v744, 104
      %v2401 = vpop.permute.xlu0 %2400
      %2402 = vrot.lane.b32.xlu0 %v749, 72
      %v2403 = vpop.permute.xlu0 %2402
      %v2405 = vsel %vm664, %v2401, 0
      %v2408 = vsel %vm664, %v2403, 0
      %2410 = vmatpush.bf16.xpose.msra.mxu0 0
      %2411 = vmatpush.bf16.xpose.msra.mxu0 0
      %2412 = vmatpush.bf16.xpose.msra.mxu0 0
      %2413 = vmatpush.bf16.xpose.msra.mxu0 0
      %2414 = vmatpush.bf16.xpose.msra.mxu0 0
      %2415 = vmatpush.bf16.xpose.msra.mxu0 0
      %2416 = vmatpush.bf16.xpose.msra.mxu0 0
      %2417 = vmatpush.bf16.xpose.msra.mxu0 %v2408
      %2418 = vmatmul.bf16.gmra.mxu0 %v2405
      %v2419 = vpop.f32.mrf.mxu0
      %v2420 = vadd.f32 0.0, %v2419
      %v2421 = vpop.f32.mrf.mxu0
      %2422 = vdwg.mxu0
      %2423 = vrot.lane.b32.xlu0 %v773, 104
      %v2424 = vpop.permute.xlu0 %2423
      %2425 = vrot.lane.b32.xlu0 %v778, 72
      %v2426 = vpop.permute.xlu0 %2425
      %v2428 = vsel %vm664, %v2424, 0
      %v2431 = vsel %vm664, %v2426, 0
      %2433 = vmatpush.bf16.xpose.msra.mxu0 0
      %2434 = vmatpush.bf16.xpose.msra.mxu0 0
      %2435 = vmatpush.bf16.xpose.msra.mxu0 0
      %2436 = vmatpush.bf16.xpose.msra.mxu0 0
      %2437 = vmatpush.bf16.xpose.msra.mxu0 0
      %2438 = vmatpush.bf16.xpose.msra.mxu0 0
      %2439 = vmatpush.bf16.xpose.msra.mxu0 0
      %2440 = vmatpush.bf16.xpose.msra.mxu0 %v2431
      %2441 = vmatmul.bf16.gmra.mxu0 %v2428
      %v2442 = vpop.f32.mrf.mxu0
      %v2443 = vadd.f32 0.0, %v2442
      %v2444 = vpop.f32.mrf.mxu0
      %2445 = vdwg.mxu0
      %2446 = vrot.lane.b32.xlu0 %v802, 104
      %v2447 = vpop.permute.xlu0 %2446
      %2448 = vrot.lane.b32.xlu0 %v807, 72
      %v2449 = vpop.permute.xlu0 %2448
      %v2451 = vsel %vm664, %v2447, 0
      %v2454 = vsel %vm664, %v2449, 0
      %2456 = vmatpush.bf16.xpose.msra.mxu0 0
      %2457 = vmatpush.bf16.xpose.msra.mxu0 0
      %2458 = vmatpush.bf16.xpose.msra.mxu0 0
      %2459 = vmatpush.bf16.xpose.msra.mxu0 0
      %2460 = vmatpush.bf16.xpose.msra.mxu0 0
      %2461 = vmatpush.bf16.xpose.msra.mxu0 0
      %2462 = vmatpush.bf16.xpose.msra.mxu0 0
      %2463 = vmatpush.bf16.xpose.msra.mxu0 %v2454
      %2464 = vmatmul.bf16.gmra.mxu0 %v2451
      %v2465 = vpop.f32.mrf.mxu0
      %v2466 = vadd.f32 0.0, %v2465
      %v2467 = vpop.f32.mrf.mxu0
      %2468 = vdwg.mxu0
      %2469 = vrot.lane.b32.xlu0 %v831, 104
      %v2470 = vpop.permute.xlu0 %2469
      %2471 = vrot.lane.b32.xlu0 %v836, 72
      %v2472 = vpop.permute.xlu0 %2471
      %v2474 = vsel %vm664, %v2470, 0
      %v2477 = vsel %vm664, %v2472, 0
      %2479 = vmatpush.bf16.xpose.msra.mxu0 0
      %2480 = vmatpush.bf16.xpose.msra.mxu0 0
      %2481 = vmatpush.bf16.xpose.msra.mxu0 0
      %2482 = vmatpush.bf16.xpose.msra.mxu0 0
      %2483 = vmatpush.bf16.xpose.msra.mxu0 0
      %2484 = vmatpush.bf16.xpose.msra.mxu0 0
      %2485 = vmatpush.bf16.xpose.msra.mxu0 0
      %2486 = vmatpush.bf16.xpose.msra.mxu0 %v2477
      %2487 = vmatmul.bf16.gmra.mxu0 %v2474
      %v2488 = vpop.f32.mrf.mxu0
      %v2489 = vadd.f32 0.0, %v2488
      %v2490 = vpop.f32.mrf.mxu0
      %2491 = vdwg.mxu0
      %2492 = vrot.lane.b32.xlu0 %v860, 104
      %v2493 = vpop.permute.xlu0 %2492
      %2494 = vrot.lane.b32.xlu0 %v865, 72
      %v2495 = vpop.permute.xlu0 %2494
      %v2497 = vsel %vm664, %v2493, 0
      %v2500 = vsel %vm664, %v2495, 0
      %2502 = vmatpush.bf16.xpose.msra.mxu0 0
      %2503 = vmatpush.bf16.xpose.msra.mxu0 0
      %2504 = vmatpush.bf16.xpose.msra.mxu0 0
      %2505 = vmatpush.bf16.xpose.msra.mxu0 0
      %2506 = vmatpush.bf16.xpose.msra.mxu0 0
      %2507 = vmatpush.bf16.xpose.msra.mxu0 0
      %2508 = vmatpush.bf16.xpose.msra.mxu0 0
      %2509 = vmatpush.bf16.xpose.msra.mxu0 %v2500
      %2510 = vmatmul.bf16.gmra.mxu0 %v2497
      %v2511 = vpop.f32.mrf.mxu0
      %v2512 = vadd.f32 0.0, %v2511
      %v2513 = vpop.f32.mrf.mxu0
      %2514 = vdwg.mxu0
      %2515 = vrot.lane.b32.xlu0 %v1700, 120
      %v2516 = vpop.permute.xlu0 %2515
      %2517 = vrot.lane.b32.xlu0 %v889, 88
      %v2518 = vpop.permute.xlu0 %2517
      %v2520 = vsel %vm664, %v2516, 0
      %v2523 = vsel %vm664, %v2518, 0
      %2525 = vmatpush.bf16.xpose.msra.mxu0 0
      %2526 = vmatpush.bf16.xpose.msra.mxu0 0
      %2527 = vmatpush.bf16.xpose.msra.mxu0 0
      %2528 = vmatpush.bf16.xpose.msra.mxu0 0
      %2529 = vmatpush.bf16.xpose.msra.mxu0 0
      %2530 = vmatpush.bf16.xpose.msra.mxu0 0
      %2531 = vmatpush.bf16.xpose.msra.mxu0 0
      %2532 = vmatpush.bf16.xpose.msra.mxu0 %v2523
      %2533 = vmatmul.bf16.gmra.mxu0 %v2520
      %v2534 = vpop.f32.mrf.mxu0
      %v2535 = vadd.f32 %v2351, %v2534
      %v2536 = vpop.f32.mrf.mxu0
      %2537 = vdwg.mxu0
      %2538 = vrot.lane.b32.xlu0 %v1726, 120
      %v2539 = vpop.permute.xlu0 %2538
      %2540 = vrot.lane.b32.xlu0 %v913, 88
      %v2541 = vpop.permute.xlu0 %2540
      %v2543 = vsel %vm664, %v2539, 0
      %v2546 = vsel %vm664, %v2541, 0
      %2548 = vmatpush.bf16.xpose.msra.mxu0 0
      %2549 = vmatpush.bf16.xpose.msra.mxu0 0
      %2550 = vmatpush.bf16.xpose.msra.mxu0 0
      %2551 = vmatpush.bf16.xpose.msra.mxu0 0
      %2552 = vmatpush.bf16.xpose.msra.mxu0 0
      %2553 = vmatpush.bf16.xpose.msra.mxu0 0
      %2554 = vmatpush.bf16.xpose.msra.mxu0 0
      %2555 = vmatpush.bf16.xpose.msra.mxu0 %v2546
      %2556 = vmatmul.bf16.gmra.mxu0 %v2543
      %v2557 = vpop.f32.mrf.mxu0
      %v2558 = vadd.f32 %v2374, %v2557
      %v2559 = vpop.f32.mrf.mxu0
      %2560 = vdwg.mxu0
      %2561 = vrot.lane.b32.xlu0 %v1752, 120
      %v2562 = vpop.permute.xlu0 %2561
      %2563 = vrot.lane.b32.xlu0 %v937, 88
      %v2564 = vpop.permute.xlu0 %2563
      %v2566 = vsel %vm664, %v2562, 0
      %v2569 = vsel %vm664, %v2564, 0
      %2571 = vmatpush.bf16.xpose.msra.mxu0 0
      %2572 = vmatpush.bf16.xpose.msra.mxu0 0
      %2573 = vmatpush.bf16.xpose.msra.mxu0 0
      %2574 = vmatpush.bf16.xpose.msra.mxu0 0
      %2575 = vmatpush.bf16.xpose.msra.mxu0 0
      %2576 = vmatpush.bf16.xpose.msra.mxu0 0
      %2577 = vmatpush.bf16.xpose.msra.mxu0 0
      %2578 = vmatpush.bf16.xpose.msra.mxu0 %v2569
      %2579 = vmatmul.bf16.gmra.mxu0 %v2566
      %v2580 = vpop.f32.mrf.mxu0
      %v2581 = vadd.f32 %v2397, %v2580
      %v2582 = vpop.f32.mrf.mxu0
      %2583 = vdwg.mxu0
      %2584 = vrot.lane.b32.xlu0 %v1778, 120
      %v2585 = vpop.permute.xlu0 %2584
      %2586 = vrot.lane.b32.xlu0 %v961, 88
      %v2587 = vpop.permute.xlu0 %2586
      %v2589 = vsel %vm664, %v2585, 0
      %v2592 = vsel %vm664, %v2587, 0
      %2594 = vmatpush.bf16.xpose.msra.mxu0 0
      %2595 = vmatpush.bf16.xpose.msra.mxu0 0
      %2596 = vmatpush.bf16.xpose.msra.mxu0 0
      %2597 = vmatpush.bf16.xpose.msra.mxu0 0
      %2598 = vmatpush.bf16.xpose.msra.mxu0 0
      %2599 = vmatpush.bf16.xpose.msra.mxu0 0
      %2600 = vmatpush.bf16.xpose.msra.mxu0 0
      %2601 = vmatpush.bf16.xpose.msra.mxu0 %v2592
      %2602 = vmatmul.bf16.gmra.mxu0 %v2589
      %v2603 = vpop.f32.mrf.mxu0
      %v2604 = vadd.f32 %v2420, %v2603
      %v2605 = vpop.f32.mrf.mxu0
      %2606 = vdwg.mxu0
      %2607 = vrot.lane.b32.xlu0 %v1804, 120
      %v2608 = vpop.permute.xlu0 %2607
      %2609 = vrot.lane.b32.xlu0 %v985, 88
      %v2610 = vpop.permute.xlu0 %2609
      %v2612 = vsel %vm664, %v2608, 0
      %v2615 = vsel %vm664, %v2610, 0
      %2617 = vmatpush.bf16.xpose.msra.mxu0 0
      %2618 = vmatpush.bf16.xpose.msra.mxu0 0
      %2619 = vmatpush.bf16.xpose.msra.mxu0 0
      %2620 = vmatpush.bf16.xpose.msra.mxu0 0
      %2621 = vmatpush.bf16.xpose.msra.mxu0 0
      %2622 = vmatpush.bf16.xpose.msra.mxu0 0
      %2623 = vmatpush.bf16.xpose.msra.mxu0 0
      %2624 = vmatpush.bf16.xpose.msra.mxu0 %v2615
      %2625 = vmatmul.bf16.gmra.mxu0 %v2612
      %v2626 = vpop.f32.mrf.mxu0
      %v2627 = vadd.f32 %v2443, %v2626
      %v2628 = vpop.f32.mrf.mxu0
      %2629 = vdwg.mxu0
      %2630 = vrot.lane.b32.xlu0 %v1830, 120
      %v2631 = vpop.permute.xlu0 %2630
      %2632 = vrot.lane.b32.xlu0 %v1009, 88
      %v2633 = vpop.permute.xlu0 %2632
      %v2635 = vsel %vm664, %v2631, 0
      %v2638 = vsel %vm664, %v2633, 0
      %2640 = vmatpush.bf16.xpose.msra.mxu0 0
      %2641 = vmatpush.bf16.xpose.msra.mxu0 0
      %2642 = vmatpush.bf16.xpose.msra.mxu0 0
      %2643 = vmatpush.bf16.xpose.msra.mxu0 0
      %2644 = vmatpush.bf16.xpose.msra.mxu0 0
      %2645 = vmatpush.bf16.xpose.msra.mxu0 0
      %2646 = vmatpush.bf16.xpose.msra.mxu0 0
      %2647 = vmatpush.bf16.xpose.msra.mxu0 %v2638
      %2648 = vmatmul.bf16.gmra.mxu0 %v2635
      %v2649 = vpop.f32.mrf.mxu0
      %v2650 = vadd.f32 %v2466, %v2649
      %v2651 = vpop.f32.mrf.mxu0
      %2652 = vdwg.mxu0
      %2653 = vrot.lane.b32.xlu0 %v1856, 120
      %v2654 = vpop.permute.xlu0 %2653
      %2655 = vrot.lane.b32.xlu0 %v1033, 88
      %v2656 = vpop.permute.xlu0 %2655
      %v2658 = vsel %vm664, %v2654, 0
      %v2661 = vsel %vm664, %v2656, 0
      %2663 = vmatpush.bf16.xpose.msra.mxu0 0
      %2664 = vmatpush.bf16.xpose.msra.mxu0 0
      %2665 = vmatpush.bf16.xpose.msra.mxu0 0
      %2666 = vmatpush.bf16.xpose.msra.mxu0 0
      %2667 = vmatpush.bf16.xpose.msra.mxu0 0
      %2668 = vmatpush.bf16.xpose.msra.mxu0 0
      %2669 = vmatpush.bf16.xpose.msra.mxu0 0
      %2670 = vmatpush.bf16.xpose.msra.mxu0 %v2661
      %2671 = vmatmul.bf16.gmra.mxu0 %v2658
      %v2672 = vpop.f32.mrf.mxu0
      %v2673 = vadd.f32 %v2489, %v2672
      %v2674 = vpop.f32.mrf.mxu0
      %2675 = vdwg.mxu0
      %2676 = vrot.lane.b32.xlu0 %v1882, 120
      %v2677 = vpop.permute.xlu0 %2676
      %2678 = vrot.lane.b32.xlu0 %v1057, 88
      %v2679 = vpop.permute.xlu0 %2678
      %v2681 = vsel %vm664, %v2677, 0
      %v2684 = vsel %vm664, %v2679, 0
      %2686 = vmatpush.bf16.xpose.msra.mxu0 0
      %2687 = vmatpush.bf16.xpose.msra.mxu0 0
      %2688 = vmatpush.bf16.xpose.msra.mxu0 0
      %2689 = vmatpush.bf16.xpose.msra.mxu0 0
      %2690 = vmatpush.bf16.xpose.msra.mxu0 0
      %2691 = vmatpush.bf16.xpose.msra.mxu0 0
      %2692 = vmatpush.bf16.xpose.msra.mxu0 0
      %2693 = vmatpush.bf16.xpose.msra.mxu0 %v2684
      %2694 = vmatmul.bf16.gmra.mxu0 %v2681
      %v2695 = vpop.f32.mrf.mxu0
      %v2696 = vadd.f32 %v2512, %v2695
      %v2697 = vpop.f32.mrf.mxu0
      %2698 = vdwg.mxu0
      %v2699 = vadd.f32 %v2535, %v1079
      %v2700 = vadd.f32 %v2558, %v1080
      %v2701 = vadd.f32 %v2581, %v1081
      %v2702 = vadd.f32 %v2604, %v1082
      %v2703 = vadd.f32 %v2627, %v1083
      %v2704 = vadd.f32 %v2650, %v1084
      %v2705 = vadd.f32 %v2673, %v1085
      %v2706 = vadd.f32 %v2696, %v1086
      %v2707 = vsel %vm1103, %v2699, -inf
      %2708 = vmax.xlane.f32.xlu0 %v2707
      %v2709 = vpop.xlane.xlu0 %2708
      %v2710 = vsel %vm1103, %v2700, -inf
      %2711 = vmax.xlane.f32.xlu0 %v2710
      %v2712 = vpop.xlane.xlu0 %2711
      %v2713 = vsel %vm1103, %v2701, -inf
      %2714 = vmax.xlane.f32.xlu0 %v2713
      %v2715 = vpop.xlane.xlu0 %2714
      %v2716 = vsel %vm1103, %v2702, -inf
      %2717 = vmax.xlane.f32.xlu0 %v2716
      %v2718 = vpop.xlane.xlu0 %2717
      %v2719 = vsel %vm1103, %v2703, -inf
      %2720 = vmax.xlane.f32.xlu0 %v2719
      %v2721 = vpop.xlane.xlu0 %2720
      %v2722 = vsel %vm1103, %v2704, -inf
      %2723 = vmax.xlane.f32.xlu0 %v2722
      %v2724 = vpop.xlane.xlu0 %2723
      %v2725 = vsel %vm1103, %v2705, -inf
      %2726 = vmax.xlane.f32.xlu0 %v2725
      %v2727 = vpop.xlane.xlu0 %2726
      %v2728 = vsel %vm1103, %v2706, -inf
      %2729 = vmax.xlane.f32.xlu0 %v2728
      %v2730 = vpop.xlane.xlu0 %2729
      %v2731 = vsub.f32 %v2699, %v2709
      %v2732 = vsub.f32 %v2700, %v2712
      %v2733 = vsub.f32 %v2701, %v2715
      %v2734 = vsub.f32 %v2702, %v2718
      %v2735 = vsub.f32 %v2703, %v2721
      %v2736 = vsub.f32 %v2704, %v2724
      %v2737 = vsub.f32 %v2705, %v2727
      %v2738 = vsub.f32 %v2706, %v2730
      %v2739 = vmul.f32 %v2731, 1.442695
      %v2740 = vpow.pop %v2739
      %v2741 = vmul.f32 %v2732, 1.442695
      %v2742 = vpow.pop %v2741
      %v2743 = vmul.f32 %v2733, 1.442695
      %v2744 = vpow.pop %v2743
      %v2745 = vmul.f32 %v2734, 1.442695
      %v2746 = vpow.pop %v2745
      %v2747 = vmul.f32 %v2735, 1.442695
      %v2748 = vpow.pop %v2747
      %v2749 = vmul.f32 %v2736, 1.442695
      %v2750 = vpow.pop %v2749
      %v2751 = vmul.f32 %v2737, 1.442695
      %v2752 = vpow.pop %v2751
      %v2753 = vmul.f32 %v2738, 1.442695
      %v2754 = vpow.pop %v2753
      %v2755 = vsel %vm1103, %v2740, 0.0
      %2756 = vadd.xlane.f32.xlu0 %v2755
      %v2757 = vpop.xlane.xlu0 %2756
      %v2758 = vsel %vm1103, %v2742, 0.0
      %2759 = vadd.xlane.f32.xlu0 %v2758
      %v2760 = vpop.xlane.xlu0 %2759
      %v2761 = vsel %vm1103, %v2744, 0.0
      %2762 = vadd.xlane.f32.xlu0 %v2761
      %v2763 = vpop.xlane.xlu0 %2762
      %v2764 = vsel %vm1103, %v2746, 0.0
      %2765 = vadd.xlane.f32.xlu0 %v2764
      %v2766 = vpop.xlane.xlu0 %2765
      %v2767 = vsel %vm1103, %v2748, 0.0
      %2768 = vadd.xlane.f32.xlu0 %v2767
      %v2769 = vpop.xlane.xlu0 %2768
      %v2770 = vsel %vm1103, %v2750, 0.0
      %2771 = vadd.xlane.f32.xlu0 %v2770
      %v2772 = vpop.xlane.xlu0 %2771
      %v2773 = vsel %vm1103, %v2752, 0.0
      %2774 = vadd.xlane.f32.xlu0 %v2773
      %v2775 = vpop.xlane.xlu0 %2774
      %v2776 = vsel %vm1103, %v2754, 0.0
      %2777 = vadd.xlane.f32.xlu0 %v2776
      %v2778 = vpop.xlane.xlu0 %2777
      %v2779 = vrcp.pop %v2757
      %v2780 = vmul.f32 %v2757, %v2779
      %v2781 = vsub.f32 1.0, %v2780
      %v2782 = vmul.f32 %v2779, %v2781
      %v2783 = vadd.f32 %v2779, %v2782
      %vm2784 = vweird.f32 %v2757
      %vm2785 = vweird.f32 %v2779
      %vm2786 = vmor %vm2784, %vm2785
      %v2787 = vsel %vm2786, %v2779, %v2783
      %v2788 = vand.u32 2147483647, %v2757
      %vm2789 = vcmp.eq.f32.partialorder %v2788, 8.507059e+37
      %v2790 = vand.u32 %v2757, 2147483648
      %v2791 = vor.u32 1.1754944e-38, %v2790
      %v2792 = vsel %vm2789, %v2791, %v2787
      %v2793 = vrcp.pop %v2760
      %v2794 = vmul.f32 %v2760, %v2793
      %v2795 = vsub.f32 1.0, %v2794
      %v2796 = vmul.f32 %v2793, %v2795
      %v2797 = vadd.f32 %v2793, %v2796
      %vm2798 = vweird.f32 %v2760
      %vm2799 = vweird.f32 %v2793
      %vm2800 = vmor %vm2798, %vm2799
      %v2801 = vsel %vm2800, %v2793, %v2797
      %v2802 = vand.u32 2147483647, %v2760
      %vm2803 = vcmp.eq.f32.partialorder %v2802, 8.507059e+37
      %v2804 = vand.u32 %v2760, 2147483648
      %v2805 = vor.u32 1.1754944e-38, %v2804
      %v2806 = vsel %vm2803, %v2805, %v2801
      %v2807 = vrcp.pop %v2763
      %v2808 = vmul.f32 %v2763, %v2807
      %v2809 = vsub.f32 1.0, %v2808
      %v2810 = vmul.f32 %v2807, %v2809
      %v2811 = vadd.f32 %v2807, %v2810
      %vm2812 = vweird.f32 %v2763
      %vm2813 = vweird.f32 %v2807
      %vm2814 = vmor %vm2812, %vm2813
      %v2815 = vsel %vm2814, %v2807, %v2811
      %v2816 = vand.u32 2147483647, %v2763
      %vm2817 = vcmp.eq.f32.partialorder %v2816, 8.507059e+37
      %v2818 = vand.u32 %v2763, 2147483648
      %v2819 = vor.u32 1.1754944e-38, %v2818
      %v2820 = vsel %vm2817, %v2819, %v2815
      %v2821 = vrcp.pop %v2766
      %v2822 = vmul.f32 %v2766, %v2821
      %v2823 = vsub.f32 1.0, %v2822
      %v2824 = vmul.f32 %v2821, %v2823
      %v2825 = vadd.f32 %v2821, %v2824
      %vm2826 = vweird.f32 %v2766
      %vm2827 = vweird.f32 %v2821
      %vm2828 = vmor %vm2826, %vm2827
      %v2829 = vsel %vm2828, %v2821, %v2825
      %v2830 = vand.u32 2147483647, %v2766
      %vm2831 = vcmp.eq.f32.partialorder %v2830, 8.507059e+37
      %v2832 = vand.u32 %v2766, 2147483648
      %v2833 = vor.u32 1.1754944e-38, %v2832
      %v2834 = vsel %vm2831, %v2833, %v2829
      %v2835 = vrcp.pop %v2769
      %v2836 = vmul.f32 %v2769, %v2835
      %v2837 = vsub.f32 1.0, %v2836
      %v2838 = vmul.f32 %v2835, %v2837
      %v2839 = vadd.f32 %v2835, %v2838
      %vm2840 = vweird.f32 %v2769
      %vm2841 = vweird.f32 %v2835
      %vm2842 = vmor %vm2840, %vm2841
      %v2843 = vsel %vm2842, %v2835, %v2839
      %v2844 = vand.u32 2147483647, %v2769
      %vm2845 = vcmp.eq.f32.partialorder %v2844, 8.507059e+37
      %v2846 = vand.u32 %v2769, 2147483648
      %v2847 = vor.u32 1.1754944e-38, %v2846
      %v2848 = vsel %vm2845, %v2847, %v2843
      %v2849 = vrcp.pop %v2772
      %v2850 = vmul.f32 %v2772, %v2849
      %v2851 = vsub.f32 1.0, %v2850
      %v2852 = vmul.f32 %v2849, %v2851
      %v2853 = vadd.f32 %v2849, %v2852
      %vm2854 = vweird.f32 %v2772
      %vm2855 = vweird.f32 %v2849
      %vm2856 = vmor %vm2854, %vm2855
      %v2857 = vsel %vm2856, %v2849, %v2853
      %v2858 = vand.u32 2147483647, %v2772
      %vm2859 = vcmp.eq.f32.partialorder %v2858, 8.507059e+37
      %v2860 = vand.u32 %v2772, 2147483648
      %v2861 = vor.u32 1.1754944e-38, %v2860
      %v2862 = vsel %vm2859, %v2861, %v2857
      %v2863 = vrcp.pop %v2775
      %v2864 = vmul.f32 %v2775, %v2863
      %v2865 = vsub.f32 1.0, %v2864
      %v2866 = vmul.f32 %v2863, %v2865
      %v2867 = vadd.f32 %v2863, %v2866
      %vm2868 = vweird.f32 %v2775
      %vm2869 = vweird.f32 %v2863
      %vm2870 = vmor %vm2868, %vm2869
      %v2871 = vsel %vm2870, %v2863, %v2867
      %v2872 = vand.u32 2147483647, %v2775
      %vm2873 = vcmp.eq.f32.partialorder %v2872, 8.507059e+37
      %v2874 = vand.u32 %v2775, 2147483648
      %v2875 = vor.u32 1.1754944e-38, %v2874
      %v2876 = vsel %vm2873, %v2875, %v2871
      %v2877 = vrcp.pop %v2778
      %v2878 = vmul.f32 %v2778, %v2877
      %v2879 = vsub.f32 1.0, %v2878
      %v2880 = vmul.f32 %v2877, %v2879
      %v2881 = vadd.f32 %v2877, %v2880
      %vm2882 = vweird.f32 %v2778
      %vm2883 = vweird.f32 %v2877
      %vm2884 = vmor %vm2882, %vm2883
      %v2885 = vsel %vm2884, %v2877, %v2881
      %v2886 = vand.u32 2147483647, %v2778
      %vm2887 = vcmp.eq.f32.partialorder %v2886, 8.507059e+37
      %v2888 = vand.u32 %v2778, 2147483648
      %v2889 = vor.u32 1.1754944e-38, %v2888
      %v2890 = vsel %vm2887, %v2889, %v2885
      %v2891 = vmul.f32 %v2740, %v2792
      %v2892 = vmul.f32 %v2742, %v2806
      %v2893 = vmul.f32 %v2744, %v2820
      %v2894 = vmul.f32 %v2746, %v2834
      %v2895 = vmul.f32 %v2748, %v2848
      %v2896 = vmul.f32 %v2750, %v2862
      %v2897 = vmul.f32 %v2752, %v2876
      %v2898 = vmul.f32 %v2754, %v2890
      %v2899 = vpack.c.bf16 %v2891, %v2891
      %v2900 = vpack.c.bf16 %v2892, %v2892
      %v2901 = vpack.c.bf16 %v2893, %v2893
      %v2902 = vpack.c.bf16 %v2894, %v2894
      %v2903 = vpack.c.bf16 %v2895, %v2895
      %v2904 = vpack.c.bf16 %v2896, %v2896
      %v2905 = vpack.c.bf16 %v2897, %v2897
      %v2906 = vpack.c.bf16 %v2898, %v2898
      %2907 = vrot.lane.b32.xlu0 %v1306, 48
      %v2908 = vpop.permute.xlu0 %2907
      %v2910 = vsel %vm1103, %v2899, 0
      %v2913 = vsel %vm1312, %v2908, 0
      %2915 = vmatpush.bf16.msra.mxu0 0
      %2916 = vmatpush.bf16.msra.mxu0 0
      %2917 = vmatpush.bf16.msra.mxu0 0
      %2918 = vmatpush.bf16.msra.mxu0 0
      %2919 = vmatpush.bf16.msra.mxu0 0
      %2920 = vmatpush.bf16.msra.mxu0 0
      %2921 = vmatpush.bf16.msra.mxu0 0
      %2922 = vmatpush.bf16.msra.mxu0 %v2913
      %2923 = vmatmul.bf16.gmra.mxu0 %v2910
      %v2924 = vpop.f32.mrf.mxu0
      %v2925 = vadd.f32 0.0, %v2924
      %v2926 = vpop.f32.mrf.mxu0
      %2927 = vdwg.mxu0
      %2928 = vrot.lane.b32.xlu0 %v1331, 48
      %v2929 = vpop.permute.xlu0 %2928
      %v2931 = vsel %vm1103, %v2900, 0
      %v2934 = vsel %vm1312, %v2929, 0
      %2936 = vmatpush.bf16.msra.mxu0 0
      %2937 = vmatpush.bf16.msra.mxu0 0
      %2938 = vmatpush.bf16.msra.mxu0 0
      %2939 = vmatpush.bf16.msra.mxu0 0
      %2940 = vmatpush.bf16.msra.mxu0 0
      %2941 = vmatpush.bf16.msra.mxu0 0
      %2942 = vmatpush.bf16.msra.mxu0 0
      %2943 = vmatpush.bf16.msra.mxu0 %v2934
      %2944 = vmatmul.bf16.gmra.mxu0 %v2931
      %v2945 = vpop.f32.mrf.mxu0
      %v2946 = vadd.f32 0.0, %v2945
      %v2947 = vpop.f32.mrf.mxu0
      %2948 = vdwg.mxu0
      %2949 = vrot.lane.b32.xlu0 %v1355, 48
      %v2950 = vpop.permute.xlu0 %2949
      %v2952 = vsel %vm1103, %v2901, 0
      %v2955 = vsel %vm1312, %v2950, 0
      %2957 = vmatpush.bf16.msra.mxu0 0
      %2958 = vmatpush.bf16.msra.mxu0 0
      %2959 = vmatpush.bf16.msra.mxu0 0
      %2960 = vmatpush.bf16.msra.mxu0 0
      %2961 = vmatpush.bf16.msra.mxu0 0
      %2962 = vmatpush.bf16.msra.mxu0 0
      %2963 = vmatpush.bf16.msra.mxu0 0
      %2964 = vmatpush.bf16.msra.mxu0 %v2955
      %2965 = vmatmul.bf16.gmra.mxu0 %v2952
      %v2966 = vpop.f32.mrf.mxu0
      %v2967 = vadd.f32 0.0, %v2966
      %v2968 = vpop.f32.mrf.mxu0
      %2969 = vdwg.mxu0
      %2970 = vrot.lane.b32.xlu0 %v1379, 48
      %v2971 = vpop.permute.xlu0 %2970
      %v2973 = vsel %vm1103, %v2902, 0
      %v2976 = vsel %vm1312, %v2971, 0
      %2978 = vmatpush.bf16.msra.mxu0 0
      %2979 = vmatpush.bf16.msra.mxu0 0
      %2980 = vmatpush.bf16.msra.mxu0 0
      %2981 = vmatpush.bf16.msra.mxu0 0
      %2982 = vmatpush.bf16.msra.mxu0 0
      %2983 = vmatpush.bf16.msra.mxu0 0
      %2984 = vmatpush.bf16.msra.mxu0 0
      %2985 = vmatpush.bf16.msra.mxu0 %v2976
      %2986 = vmatmul.bf16.gmra.mxu0 %v2973
      %v2987 = vpop.f32.mrf.mxu0
      %v2988 = vadd.f32 0.0, %v2987
      %v2989 = vpop.f32.mrf.mxu0
      %2990 = vdwg.mxu0
      %2991 = vrot.lane.b32.xlu0 %v1403, 48
      %v2992 = vpop.permute.xlu0 %2991
      %v2994 = vsel %vm1103, %v2903, 0
      %v2997 = vsel %vm1312, %v2992, 0
      %2999 = vmatpush.bf16.msra.mxu0 0
      %3000 = vmatpush.bf16.msra.mxu0 0
      %3001 = vmatpush.bf16.msra.mxu0 0
      %3002 = vmatpush.bf16.msra.mxu0 0
      %3003 = vmatpush.bf16.msra.mxu0 0
      %3004 = vmatpush.bf16.msra.mxu0 0
      %3005 = vmatpush.bf16.msra.mxu0 0
      %3006 = vmatpush.bf16.msra.mxu0 %v2997
      %3007 = vmatmul.bf16.gmra.mxu0 %v2994
      %v3008 = vpop.f32.mrf.mxu0
      %v3009 = vadd.f32 0.0, %v3008
      %v3010 = vpop.f32.mrf.mxu0
      %3011 = vdwg.mxu0
      %3012 = vrot.lane.b32.xlu0 %v1427, 48
      %v3013 = vpop.permute.xlu0 %3012
      %v3015 = vsel %vm1103, %v2904, 0
      %v3018 = vsel %vm1312, %v3013, 0
      %3020 = vmatpush.bf16.msra.mxu0 0
      %3021 = vmatpush.bf16.msra.mxu0 0
      %3022 = vmatpush.bf16.msra.mxu0 0
      %3023 = vmatpush.bf16.msra.mxu0 0
      %3024 = vmatpush.bf16.msra.mxu0 0
      %3025 = vmatpush.bf16.msra.mxu0 0
      %3026 = vmatpush.bf16.msra.mxu0 0
      %3027 = vmatpush.bf16.msra.mxu0 %v3018
      %3028 = vmatmul.bf16.gmra.mxu0 %v3015
      %v3029 = vpop.f32.mrf.mxu0
      %v3030 = vadd.f32 0.0, %v3029
      %v3031 = vpop.f32.mrf.mxu0
      %3032 = vdwg.mxu0
      %3033 = vrot.lane.b32.xlu0 %v1451, 48
      %v3034 = vpop.permute.xlu0 %3033
      %v3036 = vsel %vm1103, %v2905, 0
      %v3039 = vsel %vm1312, %v3034, 0
      %3041 = vmatpush.bf16.msra.mxu0 0
      %3042 = vmatpush.bf16.msra.mxu0 0
      %3043 = vmatpush.bf16.msra.mxu0 0
      %3044 = vmatpush.bf16.msra.mxu0 0
      %3045 = vmatpush.bf16.msra.mxu0 0
      %3046 = vmatpush.bf16.msra.mxu0 0
      %3047 = vmatpush.bf16.msra.mxu0 0
      %3048 = vmatpush.bf16.msra.mxu0 %v3039
      %3049 = vmatmul.bf16.gmra.mxu0 %v3036
      %v3050 = vpop.f32.mrf.mxu0
      %v3051 = vadd.f32 0.0, %v3050
      %v3052 = vpop.f32.mrf.mxu0
      %3053 = vdwg.mxu0
      %3054 = vrot.lane.b32.xlu0 %v1475, 48
      %v3055 = vpop.permute.xlu0 %3054
      %v3057 = vsel %vm1103, %v2906, 0
      %v3060 = vsel %vm1312, %v3055, 0
      %3062 = vmatpush.bf16.msra.mxu0 0
      %3063 = vmatpush.bf16.msra.mxu0 0
      %3064 = vmatpush.bf16.msra.mxu0 0
      %3065 = vmatpush.bf16.msra.mxu0 0
      %3066 = vmatpush.bf16.msra.mxu0 0
      %3067 = vmatpush.bf16.msra.mxu0 0
      %3068 = vmatpush.bf16.msra.mxu0 0
      %3069 = vmatpush.bf16.msra.mxu0 %v3060
      %3070 = vmatmul.bf16.gmra.mxu0 %v3057
      %v3071 = vpop.f32.mrf.mxu0
      %v3072 = vadd.f32 0.0, %v3071
      %v3073 = vpop.f32.mrf.mxu0
      %3074 = vdwg.mxu0
      %v3075 = vpack.c.bf16 %v2925, %v2925
      %v3076 = vpack.c.bf16 %v2946, %v2946
      %v3077 = vpack.c.bf16 %v2967, %v2967
      %v3078 = vpack.c.bf16 %v2988, %v2988
      %v3079 = vpack.c.bf16 %v3009, %v3009
      %v3080 = vpack.c.bf16 %v3030, %v3030
      %v3081 = vpack.c.bf16 %v3051, %v3051
      %v3082 = vpack.c.bf16 %v3072, %v3072
      %3091 = vrot.lane.b32.xlu0 %v3075, 16
      %v3092 = vpop.permute.xlu0 %3091
      %3093 = vrot.lane.b32.xlu0 %v3076, 16
      %v3094 = vpop.permute.xlu0 %3093
      %3095 = vrot.lane.b32.xlu0 %v3077, 16
      %v3096 = vpop.permute.xlu0 %3095
      %3097 = vrot.lane.b32.xlu0 %v3078, 16
      %v3098 = vpop.permute.xlu0 %3097
      %3099 = vrot.lane.b32.xlu0 %v3079, 16
      %v3100 = vpop.permute.xlu0 %3099
      %3101 = vrot.lane.b32.xlu0 %v3080, 16
      %v3102 = vpop.permute.xlu0 %3101
      %3103 = vrot.lane.b32.xlu0 %v3081, 16
      %v3104 = vpop.permute.xlu0 %3103
      %3105 = vrot.lane.b32.xlu0 %v3082, 16
      %v3106 = vpop.permute.xlu0 %3105
      %vm3115 = vcmask 191616
      %3116 = vst.msk [vmem:[#allocation2] sm:$0xf] %vm3115, %v3092
      %3117 = vst.msk [vmem:[#allocation2 + $0x4] sm:$0xf] %vm3115, %v3094
      %3118 = vst.msk [vmem:[#allocation2 + $0x8] sm:$0xf] %vm3115, %v3096
      %3119 = vst.msk [vmem:[#allocation2 + $0xc] sm:$0xf] %vm3115, %v3098
      %3120 = vst.msk [vmem:[#allocation2 + $0x10] sm:$0xf] %vm3115, %v3100
      %3121 = vst.msk [vmem:[#allocation2 + $0x14] sm:$0xf] %vm3115, %v3102
      %3122 = vst.msk [vmem:[#allocation2 + $0x18] sm:$0xf] %vm3115, %v3104
      %3123 = vst.msk [vmem:[#allocation2 + $0x1c] sm:$0xf] %vm3115, %v3106
      %3124 = vrot.lane.b32.xlu0 %v656, 100
      %v3125 = vpop.permute.xlu0 %3124
      %3126 = vrot.lane.b32.xlu0 %v661, 68
      %v3127 = vpop.permute.xlu0 %3126
      %v3129 = vsel %vm664, %v3125, 0
      %v3132 = vsel %vm664, %v3127, 0
      %3134 = vmatpush.bf16.xpose.msra.mxu0 0
      %3135 = vmatpush.bf16.xpose.msra.mxu0 0
      %3136 = vmatpush.bf16.xpose.msra.mxu0 0
      %3137 = vmatpush.bf16.xpose.msra.mxu0 0
      %3138 = vmatpush.bf16.xpose.msra.mxu0 0
      %3139 = vmatpush.bf16.xpose.msra.mxu0 0
      %3140 = vmatpush.bf16.xpose.msra.mxu0 0
      %3141 = vmatpush.bf16.xpose.msra.mxu0 %v3132
      %3142 = vmatmul.bf16.gmra.mxu0 %v3129
      %v3143 = vpop.f32.mrf.mxu0
      %v3144 = vadd.f32 0.0, %v3143
      %v3145 = vpop.f32.mrf.mxu0
      %3146 = vdwg.mxu0
      %3147 = vrot.lane.b32.xlu0 %v686, 100
      %v3148 = vpop.permute.xlu0 %3147
      %3149 = vrot.lane.b32.xlu0 %v691, 68
      %v3150 = vpop.permute.xlu0 %3149
      %v3152 = vsel %vm664, %v3148, 0
      %v3155 = vsel %vm664, %v3150, 0
      %3157 = vmatpush.bf16.xpose.msra.mxu0 0
      %3158 = vmatpush.bf16.xpose.msra.mxu0 0
      %3159 = vmatpush.bf16.xpose.msra.mxu0 0
      %3160 = vmatpush.bf16.xpose.msra.mxu0 0
      %3161 = vmatpush.bf16.xpose.msra.mxu0 0
      %3162 = vmatpush.bf16.xpose.msra.mxu0 0
      %3163 = vmatpush.bf16.xpose.msra.mxu0 0
      %3164 = vmatpush.bf16.xpose.msra.mxu0 %v3155
      %3165 = vmatmul.bf16.gmra.mxu0 %v3152
      %v3166 = vpop.f32.mrf.mxu0
      %v3167 = vadd.f32 0.0, %v3166
      %v3168 = vpop.f32.mrf.mxu0
      %3169 = vdwg.mxu0
      %3170 = vrot.lane.b32.xlu0 %v715, 100
      %v3171 = vpop.permute.xlu0 %3170
      %3172 = vrot.lane.b32.xlu0 %v720, 68
      %v3173 = vpop.permute.xlu0 %3172
      %v3175 = vsel %vm664, %v3171, 0
      %v3178 = vsel %vm664, %v3173, 0
      %3180 = vmatpush.bf16.xpose.msra.mxu0 0
      %3181 = vmatpush.bf16.xpose.msra.mxu0 0
      %3182 = vmatpush.bf16.xpose.msra.mxu0 0
      %3183 = vmatpush.bf16.xpose.msra.mxu0 0
      %3184 = vmatpush.bf16.xpose.msra.mxu0 0
      %3185 = vmatpush.bf16.xpose.msra.mxu0 0
      %3186 = vmatpush.bf16.xpose.msra.mxu0 0
      %3187 = vmatpush.bf16.xpose.msra.mxu0 %v3178
      %3188 = vmatmul.bf16.gmra.mxu0 %v3175
      %v3189 = vpop.f32.mrf.mxu0
      %v3190 = vadd.f32 0.0, %v3189
      %v3191 = vpop.f32.mrf.mxu0
      %3192 = vdwg.mxu0
      %3193 = vrot.lane.b32.xlu0 %v744, 100
      %v3194 = vpop.permute.xlu0 %3193
      %3195 = vrot.lane.b32.xlu0 %v749, 68
      %v3196 = vpop.permute.xlu0 %3195
      %v3198 = vsel %vm664, %v3194, 0
      %v3201 = vsel %vm664, %v3196, 0
      %3203 = vmatpush.bf16.xpose.msra.mxu0 0
      %3204 = vmatpush.bf16.xpose.msra.mxu0 0
      %3205 = vmatpush.bf16.xpose.msra.mxu0 0
      %3206 = vmatpush.bf16.xpose.msra.mxu0 0
      %3207 = vmatpush.bf16.xpose.msra.mxu0 0
      %3208 = vmatpush.bf16.xpose.msra.mxu0 0
      %3209 = vmatpush.bf16.xpose.msra.mxu0 0
      %3210 = vmatpush.bf16.xpose.msra.mxu0 %v3201
      %3211 = vmatmul.bf16.gmra.mxu0 %v3198
      %v3212 = vpop.f32.mrf.mxu0
      %v3213 = vadd.f32 0.0, %v3212
      %v3214 = vpop.f32.mrf.mxu0
      %3215 = vdwg.mxu0
      %3216 = vrot.lane.b32.xlu0 %v773, 100
      %v3217 = vpop.permute.xlu0 %3216
      %3218 = vrot.lane.b32.xlu0 %v778, 68
      %v3219 = vpop.permute.xlu0 %3218
      %v3221 = vsel %vm664, %v3217, 0
      %v3224 = vsel %vm664, %v3219, 0
      %3226 = vmatpush.bf16.xpose.msra.mxu0 0
      %3227 = vmatpush.bf16.xpose.msra.mxu0 0
      %3228 = vmatpush.bf16.xpose.msra.mxu0 0
      %3229 = vmatpush.bf16.xpose.msra.mxu0 0
      %3230 = vmatpush.bf16.xpose.msra.mxu0 0
      %3231 = vmatpush.bf16.xpose.msra.mxu0 0
      %3232 = vmatpush.bf16.xpose.msra.mxu0 0
      %3233 = vmatpush.bf16.xpose.msra.mxu0 %v3224
      %3234 = vmatmul.bf16.gmra.mxu0 %v3221
      %v3235 = vpop.f32.mrf.mxu0
      %v3236 = vadd.f32 0.0, %v3235
      %v3237 = vpop.f32.mrf.mxu0
      %3238 = vdwg.mxu0
      %3239 = vrot.lane.b32.xlu0 %v802, 100
      %v3240 = vpop.permute.xlu0 %3239
      %3241 = vrot.lane.b32.xlu0 %v807, 68
      %v3242 = vpop.permute.xlu0 %3241
      %v3244 = vsel %vm664, %v3240, 0
      %v3247 = vsel %vm664, %v3242, 0
      %3249 = vmatpush.bf16.xpose.msra.mxu0 0
      %3250 = vmatpush.bf16.xpose.msra.mxu0 0
      %3251 = vmatpush.bf16.xpose.msra.mxu0 0
      %3252 = vmatpush.bf16.xpose.msra.mxu0 0
      %3253 = vmatpush.bf16.xpose.msra.mxu0 0
      %3254 = vmatpush.bf16.xpose.msra.mxu0 0
      %3255 = vmatpush.bf16.xpose.msra.mxu0 0
      %3256 = vmatpush.bf16.xpose.msra.mxu0 %v3247
      %3257 = vmatmul.bf16.gmra.mxu0 %v3244
      %v3258 = vpop.f32.mrf.mxu0
      %v3259 = vadd.f32 0.0, %v3258
      %v3260 = vpop.f32.mrf.mxu0
      %3261 = vdwg.mxu0
      %3262 = vrot.lane.b32.xlu0 %v831, 100
      %v3263 = vpop.permute.xlu0 %3262
      %3264 = vrot.lane.b32.xlu0 %v836, 68
      %v3265 = vpop.permute.xlu0 %3264
      %v3267 = vsel %vm664, %v3263, 0
      %v3270 = vsel %vm664, %v3265, 0
      %3272 = vmatpush.bf16.xpose.msra.mxu0 0
      %3273 = vmatpush.bf16.xpose.msra.mxu0 0
      %3274 = vmatpush.bf16.xpose.msra.mxu0 0
      %3275 = vmatpush.bf16.xpose.msra.mxu0 0
      %3276 = vmatpush.bf16.xpose.msra.mxu0 0
      %3277 = vmatpush.bf16.xpose.msra.mxu0 0
      %3278 = vmatpush.bf16.xpose.msra.mxu0 0
      %3279 = vmatpush.bf16.xpose.msra.mxu0 %v3270
      %3280 = vmatmul.bf16.gmra.mxu0 %v3267
      %v3281 = vpop.f32.mrf.mxu0
      %v3282 = vadd.f32 0.0, %v3281
      %v3283 = vpop.f32.mrf.mxu0
      %3284 = vdwg.mxu0
      %3285 = vrot.lane.b32.xlu0 %v860, 100
      %v3286 = vpop.permute.xlu0 %3285
      %3287 = vrot.lane.b32.xlu0 %v865, 68
      %v3288 = vpop.permute.xlu0 %3287
      %v3290 = vsel %vm664, %v3286, 0
      %v3293 = vsel %vm664, %v3288, 0
      %3295 = vmatpush.bf16.xpose.msra.mxu0 0
      %3296 = vmatpush.bf16.xpose.msra.mxu0 0
      %3297 = vmatpush.bf16.xpose.msra.mxu0 0
      %3298 = vmatpush.bf16.xpose.msra.mxu0 0
      %3299 = vmatpush.bf16.xpose.msra.mxu0 0
      %3300 = vmatpush.bf16.xpose.msra.mxu0 0
      %3301 = vmatpush.bf16.xpose.msra.mxu0 0
      %3302 = vmatpush.bf16.xpose.msra.mxu0 %v3293
      %3303 = vmatmul.bf16.gmra.mxu0 %v3290
      %v3304 = vpop.f32.mrf.mxu0
      %v3305 = vadd.f32 0.0, %v3304
      %v3306 = vpop.f32.mrf.mxu0
      %3307 = vdwg.mxu0
      %3308 = vrot.lane.b32.xlu0 %v1700, 116
      %v3309 = vpop.permute.xlu0 %3308
      %3310 = vrot.lane.b32.xlu0 %v889, 84
      %v3311 = vpop.permute.xlu0 %3310
      %v3313 = vsel %vm664, %v3309, 0
      %v3316 = vsel %vm664, %v3311, 0
      %3318 = vmatpush.bf16.xpose.msra.mxu0 0
      %3319 = vmatpush.bf16.xpose.msra.mxu0 0
      %3320 = vmatpush.bf16.xpose.msra.mxu0 0
      %3321 = vmatpush.bf16.xpose.msra.mxu0 0
      %3322 = vmatpush.bf16.xpose.msra.mxu0 0
      %3323 = vmatpush.bf16.xpose.msra.mxu0 0
      %3324 = vmatpush.bf16.xpose.msra.mxu0 0
      %3325 = vmatpush.bf16.xpose.msra.mxu0 %v3316
      %3326 = vmatmul.bf16.gmra.mxu0 %v3313
      %v3327 = vpop.f32.mrf.mxu0
      %v3328 = vadd.f32 %v3144, %v3327
      %v3329 = vpop.f32.mrf.mxu0
      %3330 = vdwg.mxu0
      %3331 = vrot.lane.b32.xlu0 %v1726, 116
      %v3332 = vpop.permute.xlu0 %3331
      %3333 = vrot.lane.b32.xlu0 %v913, 84
      %v3334 = vpop.permute.xlu0 %3333
      %v3336 = vsel %vm664, %v3332, 0
      %v3339 = vsel %vm664, %v3334, 0
      %3341 = vmatpush.bf16.xpose.msra.mxu0 0
      %3342 = vmatpush.bf16.xpose.msra.mxu0 0
      %3343 = vmatpush.bf16.xpose.msra.mxu0 0
      %3344 = vmatpush.bf16.xpose.msra.mxu0 0
      %3345 = vmatpush.bf16.xpose.msra.mxu0 0
      %3346 = vmatpush.bf16.xpose.msra.mxu0 0
      %3347 = vmatpush.bf16.xpose.msra.mxu0 0
      %3348 = vmatpush.bf16.xpose.msra.mxu0 %v3339
      %3349 = vmatmul.bf16.gmra.mxu0 %v3336
      %v3350 = vpop.f32.mrf.mxu0
      %v3351 = vadd.f32 %v3167, %v3350
      %v3352 = vpop.f32.mrf.mxu0
      %3353 = vdwg.mxu0
      %3354 = vrot.lane.b32.xlu0 %v1752, 116
      %v3355 = vpop.permute.xlu0 %3354
      %3356 = vrot.lane.b32.xlu0 %v937, 84
      %v3357 = vpop.permute.xlu0 %3356
      %v3359 = vsel %vm664, %v3355, 0
      %v3362 = vsel %vm664, %v3357, 0
      %3364 = vmatpush.bf16.xpose.msra.mxu0 0
      %3365 = vmatpush.bf16.xpose.msra.mxu0 0
      %3366 = vmatpush.bf16.xpose.msra.mxu0 0
      %3367 = vmatpush.bf16.xpose.msra.mxu0 0
      %3368 = vmatpush.bf16.xpose.msra.mxu0 0
      %3369 = vmatpush.bf16.xpose.msra.mxu0 0
      %3370 = vmatpush.bf16.xpose.msra.mxu0 0
      %3371 = vmatpush.bf16.xpose.msra.mxu0 %v3362
      %3372 = vmatmul.bf16.gmra.mxu0 %v3359
      %v3373 = vpop.f32.mrf.mxu0
      %v3374 = vadd.f32 %v3190, %v3373
      %v3375 = vpop.f32.mrf.mxu0
      %3376 = vdwg.mxu0
      %3377 = vrot.lane.b32.xlu0 %v1778, 116
      %v3378 = vpop.permute.xlu0 %3377
      %3379 = vrot.lane.b32.xlu0 %v961, 84
      %v3380 = vpop.permute.xlu0 %3379
      %v3382 = vsel %vm664, %v3378, 0
      %v3385 = vsel %vm664, %v3380, 0
      %3387 = vmatpush.bf16.xpose.msra.mxu0 0
      %3388 = vmatpush.bf16.xpose.msra.mxu0 0
      %3389 = vmatpush.bf16.xpose.msra.mxu0 0
      %3390 = vmatpush.bf16.xpose.msra.mxu0 0
      %3391 = vmatpush.bf16.xpose.msra.mxu0 0
      %3392 = vmatpush.bf16.xpose.msra.mxu0 0
      %3393 = vmatpush.bf16.xpose.msra.mxu0 0
      %3394 = vmatpush.bf16.xpose.msra.mxu0 %v3385
      %3395 = vmatmul.bf16.gmra.mxu0 %v3382
      %v3396 = vpop.f32.mrf.mxu0
      %v3397 = vadd.f32 %v3213, %v3396
      %v3398 = vpop.f32.mrf.mxu0
      %3399 = vdwg.mxu0
      %3400 = vrot.lane.b32.xlu0 %v1804, 116
      %v3401 = vpop.permute.xlu0 %3400
      %3402 = vrot.lane.b32.xlu0 %v985, 84
      %v3403 = vpop.permute.xlu0 %3402
      %v3405 = vsel %vm664, %v3401, 0
      %v3408 = vsel %vm664, %v3403, 0
      %3410 = vmatpush.bf16.xpose.msra.mxu0 0
      %3411 = vmatpush.bf16.xpose.msra.mxu0 0
      %3412 = vmatpush.bf16.xpose.msra.mxu0 0
      %3413 = vmatpush.bf16.xpose.msra.mxu0 0
      %3414 = vmatpush.bf16.xpose.msra.mxu0 0
      %3415 = vmatpush.bf16.xpose.msra.mxu0 0
      %3416 = vmatpush.bf16.xpose.msra.mxu0 0
      %3417 = vmatpush.bf16.xpose.msra.mxu0 %v3408
      %3418 = vmatmul.bf16.gmra.mxu0 %v3405
      %v3419 = vpop.f32.mrf.mxu0
      %v3420 = vadd.f32 %v3236, %v3419
      %v3421 = vpop.f32.mrf.mxu0
      %3422 = vdwg.mxu0
      %3423 = vrot.lane.b32.xlu0 %v1830, 116
      %v3424 = vpop.permute.xlu0 %3423
      %3425 = vrot.lane.b32.xlu0 %v1009, 84
      %v3426 = vpop.permute.xlu0 %3425
      %v3428 = vsel %vm664, %v3424, 0
      %v3431 = vsel %vm664, %v3426, 0
      %3433 = vmatpush.bf16.xpose.msra.mxu0 0
      %3434 = vmatpush.bf16.xpose.msra.mxu0 0
      %3435 = vmatpush.bf16.xpose.msra.mxu0 0
      %3436 = vmatpush.bf16.xpose.msra.mxu0 0
      %3437 = vmatpush.bf16.xpose.msra.mxu0 0
      %3438 = vmatpush.bf16.xpose.msra.mxu0 0
      %3439 = vmatpush.bf16.xpose.msra.mxu0 0
      %3440 = vmatpush.bf16.xpose.msra.mxu0 %v3431
      %3441 = vmatmul.bf16.gmra.mxu0 %v3428
      %v3442 = vpop.f32.mrf.mxu0
      %v3443 = vadd.f32 %v3259, %v3442
      %v3444 = vpop.f32.mrf.mxu0
      %3445 = vdwg.mxu0
      %3446 = vrot.lane.b32.xlu0 %v1856, 116
      %v3447 = vpop.permute.xlu0 %3446
      %3448 = vrot.lane.b32.xlu0 %v1033, 84
      %v3449 = vpop.permute.xlu0 %3448
      %v3451 = vsel %vm664, %v3447, 0
      %v3454 = vsel %vm664, %v3449, 0
      %3456 = vmatpush.bf16.xpose.msra.mxu0 0
      %3457 = vmatpush.bf16.xpose.msra.mxu0 0
      %3458 = vmatpush.bf16.xpose.msra.mxu0 0
      %3459 = vmatpush.bf16.xpose.msra.mxu0 0
      %3460 = vmatpush.bf16.xpose.msra.mxu0 0
      %3461 = vmatpush.bf16.xpose.msra.mxu0 0
      %3462 = vmatpush.bf16.xpose.msra.mxu0 0
      %3463 = vmatpush.bf16.xpose.msra.mxu0 %v3454
      %3464 = vmatmul.bf16.gmra.mxu0 %v3451
      %v3465 = vpop.f32.mrf.mxu0
      %v3466 = vadd.f32 %v3282, %v3465
      %v3467 = vpop.f32.mrf.mxu0
      %3468 = vdwg.mxu0
      %3469 = vrot.lane.b32.xlu0 %v1882, 116
      %v3470 = vpop.permute.xlu0 %3469
      %3471 = vrot.lane.b32.xlu0 %v1057, 84
      %v3472 = vpop.permute.xlu0 %3471
      %v3474 = vsel %vm664, %v3470, 0
      %v3477 = vsel %vm664, %v3472, 0
      %3479 = vmatpush.bf16.xpose.msra.mxu0 0
      %3480 = vmatpush.bf16.xpose.msra.mxu0 0
      %3481 = vmatpush.bf16.xpose.msra.mxu0 0
      %3482 = vmatpush.bf16.xpose.msra.mxu0 0
      %3483 = vmatpush.bf16.xpose.msra.mxu0 0
      %3484 = vmatpush.bf16.xpose.msra.mxu0 0
      %3485 = vmatpush.bf16.xpose.msra.mxu0 0
      %3486 = vmatpush.bf16.xpose.msra.mxu0 %v3477
      %3487 = vmatmul.bf16.gmra.mxu0 %v3474
      %v3488 = vpop.f32.mrf.mxu0
      %v3489 = vadd.f32 %v3305, %v3488
      %v3490 = vpop.f32.mrf.mxu0
      %3491 = vdwg.mxu0
      %v3492 = vadd.f32 %v3328, %v1079
      %v3493 = vadd.f32 %v3351, %v1080
      %v3494 = vadd.f32 %v3374, %v1081
      %v3495 = vadd.f32 %v3397, %v1082
      %v3496 = vadd.f32 %v3420, %v1083
      %v3497 = vadd.f32 %v3443, %v1084
      %v3498 = vadd.f32 %v3466, %v1085
      %v3499 = vadd.f32 %v3489, %v1086
      %v3500 = vsel %vm1103, %v3492, -inf
      %3501 = vmax.xlane.f32.xlu0 %v3500
      %v3502 = vpop.xlane.xlu0 %3501
      %v3503 = vsel %vm1103, %v3493, -inf
      %3504 = vmax.xlane.f32.xlu0 %v3503
      %v3505 = vpop.xlane.xlu0 %3504
      %v3506 = vsel %vm1103, %v3494, -inf
      %3507 = vmax.xlane.f32.xlu0 %v3506
      %v3508 = vpop.xlane.xlu0 %3507
      %v3509 = vsel %vm1103, %v3495, -inf
      %3510 = vmax.xlane.f32.xlu0 %v3509
      %v3511 = vpop.xlane.xlu0 %3510
      %v3512 = vsel %vm1103, %v3496, -inf
      %3513 = vmax.xlane.f32.xlu0 %v3512
      %v3514 = vpop.xlane.xlu0 %3513
      %v3515 = vsel %vm1103, %v3497, -inf
      %3516 = vmax.xlane.f32.xlu0 %v3515
      %v3517 = vpop.xlane.xlu0 %3516
      %v3518 = vsel %vm1103, %v3498, -inf
      %3519 = vmax.xlane.f32.xlu0 %v3518
      %v3520 = vpop.xlane.xlu0 %3519
      %v3521 = vsel %vm1103, %v3499, -inf
      %3522 = vmax.xlane.f32.xlu0 %v3521
      %v3523 = vpop.xlane.xlu0 %3522
      %v3524 = vsub.f32 %v3492, %v3502
      %v3525 = vsub.f32 %v3493, %v3505
      %v3526 = vsub.f32 %v3494, %v3508
      %v3527 = vsub.f32 %v3495, %v3511
      %v3528 = vsub.f32 %v3496, %v3514
      %v3529 = vsub.f32 %v3497, %v3517
      %v3530 = vsub.f32 %v3498, %v3520
      %v3531 = vsub.f32 %v3499, %v3523
      %v3532 = vmul.f32 %v3524, 1.442695
      %v3533 = vpow.pop %v3532
      %v3534 = vmul.f32 %v3525, 1.442695
      %v3535 = vpow.pop %v3534
      %v3536 = vmul.f32 %v3526, 1.442695
      %v3537 = vpow.pop %v3536
      %v3538 = vmul.f32 %v3527, 1.442695
      %v3539 = vpow.pop %v3538
      %v3540 = vmul.f32 %v3528, 1.442695
      %v3541 = vpow.pop %v3540
      %v3542 = vmul.f32 %v3529, 1.442695
      %v3543 = vpow.pop %v3542
      %v3544 = vmul.f32 %v3530, 1.442695
      %v3545 = vpow.pop %v3544
      %v3546 = vmul.f32 %v3531, 1.442695
      %v3547 = vpow.pop %v3546
      %v3548 = vsel %vm1103, %v3533, 0.0
      %3549 = vadd.xlane.f32.xlu0 %v3548
      %v3550 = vpop.xlane.xlu0 %3549
      %v3551 = vsel %vm1103, %v3535, 0.0
      %3552 = vadd.xlane.f32.xlu0 %v3551
      %v3553 = vpop.xlane.xlu0 %3552
      %v3554 = vsel %vm1103, %v3537, 0.0
      %3555 = vadd.xlane.f32.xlu0 %v3554
      %v3556 = vpop.xlane.xlu0 %3555
      %v3557 = vsel %vm1103, %v3539, 0.0
      %3558 = vadd.xlane.f32.xlu0 %v3557
      %v3559 = vpop.xlane.xlu0 %3558
      %v3560 = vsel %vm1103, %v3541, 0.0
      %3561 = vadd.xlane.f32.xlu0 %v3560
      %v3562 = vpop.xlane.xlu0 %3561
      %v3563 = vsel %vm1103, %v3543, 0.0
      %3564 = vadd.xlane.f32.xlu0 %v3563
      %v3565 = vpop.xlane.xlu0 %3564
      %v3566 = vsel %vm1103, %v3545, 0.0
      %3567 = vadd.xlane.f32.xlu0 %v3566
      %v3568 = vpop.xlane.xlu0 %3567
      %v3569 = vsel %vm1103, %v3547, 0.0
      %3570 = vadd.xlane.f32.xlu0 %v3569
      %v3571 = vpop.xlane.xlu0 %3570
      %v3572 = vrcp.pop %v3550
      %v3573 = vmul.f32 %v3550, %v3572
      %v3574 = vsub.f32 1.0, %v3573
      %v3575 = vmul.f32 %v3572, %v3574
      %v3576 = vadd.f32 %v3572, %v3575
      %vm3577 = vweird.f32 %v3550
      %vm3578 = vweird.f32 %v3572
      %vm3579 = vmor %vm3577, %vm3578
      %v3580 = vsel %vm3579, %v3572, %v3576
      %v3581 = vand.u32 2147483647, %v3550
      %vm3582 = vcmp.eq.f32.partialorder %v3581, 8.507059e+37
      %v3583 = vand.u32 %v3550, 2147483648
      %v3584 = vor.u32 1.1754944e-38, %v3583
      %v3585 = vsel %vm3582, %v3584, %v3580
      %v3586 = vrcp.pop %v3553
      %v3587 = vmul.f32 %v3553, %v3586
      %v3588 = vsub.f32 1.0, %v3587
      %v3589 = vmul.f32 %v3586, %v3588
      %v3590 = vadd.f32 %v3586, %v3589
      %vm3591 = vweird.f32 %v3553
      %vm3592 = vweird.f32 %v3586
      %vm3593 = vmor %vm3591, %vm3592
      %v3594 = vsel %vm3593, %v3586, %v3590
      %v3595 = vand.u32 2147483647, %v3553
      %vm3596 = vcmp.eq.f32.partialorder %v3595, 8.507059e+37
      %v3597 = vand.u32 %v3553, 2147483648
      %v3598 = vor.u32 1.1754944e-38, %v3597
      %v3599 = vsel %vm3596, %v3598, %v3594
      %v3600 = vrcp.pop %v3556
      %v3601 = vmul.f32 %v3556, %v3600
      %v3602 = vsub.f32 1.0, %v3601
      %v3603 = vmul.f32 %v3600, %v3602
      %v3604 = vadd.f32 %v3600, %v3603
      %vm3605 = vweird.f32 %v3556
      %vm3606 = vweird.f32 %v3600
      %vm3607 = vmor %vm3605, %vm3606
      %v3608 = vsel %vm3607, %v3600, %v3604
      %v3609 = vand.u32 2147483647, %v3556
      %vm3610 = vcmp.eq.f32.partialorder %v3609, 8.507059e+37
      %v3611 = vand.u32 %v3556, 2147483648
      %v3612 = vor.u32 1.1754944e-38, %v3611
      %v3613 = vsel %vm3610, %v3612, %v3608
      %v3614 = vrcp.pop %v3559
      %v3615 = vmul.f32 %v3559, %v3614
      %v3616 = vsub.f32 1.0, %v3615
      %v3617 = vmul.f32 %v3614, %v3616
      %v3618 = vadd.f32 %v3614, %v3617
      %vm3619 = vweird.f32 %v3559
      %vm3620 = vweird.f32 %v3614
      %vm3621 = vmor %vm3619, %vm3620
      %v3622 = vsel %vm3621, %v3614, %v3618
      %v3623 = vand.u32 2147483647, %v3559
      %vm3624 = vcmp.eq.f32.partialorder %v3623, 8.507059e+37
      %v3625 = vand.u32 %v3559, 2147483648
      %v3626 = vor.u32 1.1754944e-38, %v3625
      %v3627 = vsel %vm3624, %v3626, %v3622
      %v3628 = vrcp.pop %v3562
      %v3629 = vmul.f32 %v3562, %v3628
      %v3630 = vsub.f32 1.0, %v3629
      %v3631 = vmul.f32 %v3628, %v3630
      %v3632 = vadd.f32 %v3628, %v3631
      %vm3633 = vweird.f32 %v3562
      %vm3634 = vweird.f32 %v3628
      %vm3635 = vmor %vm3633, %vm3634
      %v3636 = vsel %vm3635, %v3628, %v3632
      %v3637 = vand.u32 2147483647, %v3562
      %vm3638 = vcmp.eq.f32.partialorder %v3637, 8.507059e+37
      %v3639 = vand.u32 %v3562, 2147483648
      %v3640 = vor.u32 1.1754944e-38, %v3639
      %v3641 = vsel %vm3638, %v3640, %v3636
      %v3642 = vrcp.pop %v3565
      %v3643 = vmul.f32 %v3565, %v3642
      %v3644 = vsub.f32 1.0, %v3643
      %v3645 = vmul.f32 %v3642, %v3644
      %v3646 = vadd.f32 %v3642, %v3645
      %vm3647 = vweird.f32 %v3565
      %vm3648 = vweird.f32 %v3642
      %vm3649 = vmor %vm3647, %vm3648
      %v3650 = vsel %vm3649, %v3642, %v3646
      %v3651 = vand.u32 2147483647, %v3565
      %vm3652 = vcmp.eq.f32.partialorder %v3651, 8.507059e+37
      %v3653 = vand.u32 %v3565, 2147483648
      %v3654 = vor.u32 1.1754944e-38, %v3653
      %v3655 = vsel %vm3652, %v3654, %v3650
      %v3656 = vrcp.pop %v3568
      %v3657 = vmul.f32 %v3568, %v3656
      %v3658 = vsub.f32 1.0, %v3657
      %v3659 = vmul.f32 %v3656, %v3658
      %v3660 = vadd.f32 %v3656, %v3659
      %vm3661 = vweird.f32 %v3568
      %vm3662 = vweird.f32 %v3656
      %vm3663 = vmor %vm3661, %vm3662
      %v3664 = vsel %vm3663, %v3656, %v3660
      %v3665 = vand.u32 2147483647, %v3568
      %vm3666 = vcmp.eq.f32.partialorder %v3665, 8.507059e+37
      %v3667 = vand.u32 %v3568, 2147483648
      %v3668 = vor.u32 1.1754944e-38, %v3667
      %v3669 = vsel %vm3666, %v3668, %v3664
      %v3670 = vrcp.pop %v3571
      %v3671 = vmul.f32 %v3571, %v3670
      %v3672 = vsub.f32 1.0, %v3671
      %v3673 = vmul.f32 %v3670, %v3672
      %v3674 = vadd.f32 %v3670, %v3673
      %vm3675 = vweird.f32 %v3571
      %vm3676 = vweird.f32 %v3670
      %vm3677 = vmor %vm3675, %vm3676
      %v3678 = vsel %vm3677, %v3670, %v3674
      %v3679 = vand.u32 2147483647, %v3571
      %vm3680 = vcmp.eq.f32.partialorder %v3679, 8.507059e+37
      %v3681 = vand.u32 %v3571, 2147483648
      %v3682 = vor.u32 1.1754944e-38, %v3681
      %v3683 = vsel %vm3680, %v3682, %v3678
      %v3684 = vmul.f32 %v3533, %v3585
      %v3685 = vmul.f32 %v3535, %v3599
      %v3686 = vmul.f32 %v3537, %v3613
      %v3687 = vmul.f32 %v3539, %v3627
      %v3688 = vmul.f32 %v3541, %v3641
      %v3689 = vmul.f32 %v3543, %v3655
      %v3690 = vmul.f32 %v3545, %v3669
      %v3691 = vmul.f32 %v3547, %v3683
      %v3692 = vpack.c.bf16 %v3684, %v3684
      %v3693 = vpack.c.bf16 %v3685, %v3685
      %v3694 = vpack.c.bf16 %v3686, %v3686
      %v3695 = vpack.c.bf16 %v3687, %v3687
      %v3696 = vpack.c.bf16 %v3688, %v3688
      %v3697 = vpack.c.bf16 %v3689, %v3689
      %v3698 = vpack.c.bf16 %v3690, %v3690
      %v3699 = vpack.c.bf16 %v3691, %v3691
      %3700 = vrot.lane.b32.xlu0 %v1306, 40
      %v3701 = vpop.permute.xlu0 %3700
      %v3703 = vsel %vm1103, %v3692, 0
      %v3706 = vsel %vm1312, %v3701, 0
      %3708 = vmatpush.bf16.msra.mxu0 0
      %3709 = vmatpush.bf16.msra.mxu0 0
      %3710 = vmatpush.bf16.msra.mxu0 0
      %3711 = vmatpush.bf16.msra.mxu0 0
      %3712 = vmatpush.bf16.msra.mxu0 0
      %3713 = vmatpush.bf16.msra.mxu0 0
      %3714 = vmatpush.bf16.msra.mxu0 0
      %3715 = vmatpush.bf16.msra.mxu0 %v3706
      %3716 = vmatmul.bf16.gmra.mxu0 %v3703
      %v3717 = vpop.f32.mrf.mxu0
      %v3718 = vadd.f32 0.0, %v3717
      %v3719 = vpop.f32.mrf.mxu0
      %3720 = vdwg.mxu0
      %3721 = vrot.lane.b32.xlu0 %v1331, 40
      %v3722 = vpop.permute.xlu0 %3721
      %v3724 = vsel %vm1103, %v3693, 0
      %v3727 = vsel %vm1312, %v3722, 0
      %3729 = vmatpush.bf16.msra.mxu0 0
      %3730 = vmatpush.bf16.msra.mxu0 0
      %3731 = vmatpush.bf16.msra.mxu0 0
      %3732 = vmatpush.bf16.msra.mxu0 0
      %3733 = vmatpush.bf16.msra.mxu0 0
      %3734 = vmatpush.bf16.msra.mxu0 0
      %3735 = vmatpush.bf16.msra.mxu0 0
      %3736 = vmatpush.bf16.msra.mxu0 %v3727
      %3737 = vmatmul.bf16.gmra.mxu0 %v3724
      %v3738 = vpop.f32.mrf.mxu0
      %v3739 = vadd.f32 0.0, %v3738
      %v3740 = vpop.f32.mrf.mxu0
      %3741 = vdwg.mxu0
      %3742 = vrot.lane.b32.xlu0 %v1355, 40
      %v3743 = vpop.permute.xlu0 %3742
      %v3745 = vsel %vm1103, %v3694, 0
      %v3748 = vsel %vm1312, %v3743, 0
      %3750 = vmatpush.bf16.msra.mxu0 0
      %3751 = vmatpush.bf16.msra.mxu0 0
      %3752 = vmatpush.bf16.msra.mxu0 0
      %3753 = vmatpush.bf16.msra.mxu0 0
      %3754 = vmatpush.bf16.msra.mxu0 0
      %3755 = vmatpush.bf16.msra.mxu0 0
      %3756 = vmatpush.bf16.msra.mxu0 0
      %3757 = vmatpush.bf16.msra.mxu0 %v3748
      %3758 = vmatmul.bf16.gmra.mxu0 %v3745
      %v3759 = vpop.f32.mrf.mxu0
      %v3760 = vadd.f32 0.0, %v3759
      %v3761 = vpop.f32.mrf.mxu0
      %3762 = vdwg.mxu0
      %3763 = vrot.lane.b32.xlu0 %v1379, 40
      %v3764 = vpop.permute.xlu0 %3763
      %v3766 = vsel %vm1103, %v3695, 0
      %v3769 = vsel %vm1312, %v3764, 0
      %3771 = vmatpush.bf16.msra.mxu0 0
      %3772 = vmatpush.bf16.msra.mxu0 0
      %3773 = vmatpush.bf16.msra.mxu0 0
      %3774 = vmatpush.bf16.msra.mxu0 0
      %3775 = vmatpush.bf16.msra.mxu0 0
      %3776 = vmatpush.bf16.msra.mxu0 0
      %3777 = vmatpush.bf16.msra.mxu0 0
      %3778 = vmatpush.bf16.msra.mxu0 %v3769
      %3779 = vmatmul.bf16.gmra.mxu0 %v3766
      %v3780 = vpop.f32.mrf.mxu0
      %v3781 = vadd.f32 0.0, %v3780
      %v3782 = vpop.f32.mrf.mxu0
      %3783 = vdwg.mxu0
      %3784 = vrot.lane.b32.xlu0 %v1403, 40
      %v3785 = vpop.permute.xlu0 %3784
      %v3787 = vsel %vm1103, %v3696, 0
      %v3790 = vsel %vm1312, %v3785, 0
      %3792 = vmatpush.bf16.msra.mxu0 0
      %3793 = vmatpush.bf16.msra.mxu0 0
      %3794 = vmatpush.bf16.msra.mxu0 0
      %3795 = vmatpush.bf16.msra.mxu0 0
      %3796 = vmatpush.bf16.msra.mxu0 0
      %3797 = vmatpush.bf16.msra.mxu0 0
      %3798 = vmatpush.bf16.msra.mxu0 0
      %3799 = vmatpush.bf16.msra.mxu0 %v3790
      %3800 = vmatmul.bf16.gmra.mxu0 %v3787
      %v3801 = vpop.f32.mrf.mxu0
      %v3802 = vadd.f32 0.0, %v3801
      %v3803 = vpop.f32.mrf.mxu0
      %3804 = vdwg.mxu0
      %3805 = vrot.lane.b32.xlu0 %v1427, 40
      %v3806 = vpop.permute.xlu0 %3805
      %v3808 = vsel %vm1103, %v3697, 0
      %v3811 = vsel %vm1312, %v3806, 0
      %3813 = vmatpush.bf16.msra.mxu0 0
      %3814 = vmatpush.bf16.msra.mxu0 0
      %3815 = vmatpush.bf16.msra.mxu0 0
      %3816 = vmatpush.bf16.msra.mxu0 0
      %3817 = vmatpush.bf16.msra.mxu0 0
      %3818 = vmatpush.bf16.msra.mxu0 0
      %3819 = vmatpush.bf16.msra.mxu0 0
      %3820 = vmatpush.bf16.msra.mxu0 %v3811
      %3821 = vmatmul.bf16.gmra.mxu0 %v3808
      %v3822 = vpop.f32.mrf.mxu0
      %v3823 = vadd.f32 0.0, %v3822
      %v3824 = vpop.f32.mrf.mxu0
      %3825 = vdwg.mxu0
      %3826 = vrot.lane.b32.xlu0 %v1451, 40
      %v3827 = vpop.permute.xlu0 %3826
      %v3829 = vsel %vm1103, %v3698, 0
      %v3832 = vsel %vm1312, %v3827, 0
      %3834 = vmatpush.bf16.msra.mxu0 0
      %3835 = vmatpush.bf16.msra.mxu0 0
      %3836 = vmatpush.bf16.msra.mxu0 0
      %3837 = vmatpush.bf16.msra.mxu0 0
      %3838 = vmatpush.bf16.msra.mxu0 0
      %3839 = vmatpush.bf16.msra.mxu0 0
      %3840 = vmatpush.bf16.msra.mxu0 0
      %3841 = vmatpush.bf16.msra.mxu0 %v3832
      %3842 = vmatmul.bf16.gmra.mxu0 %v3829
      %v3843 = vpop.f32.mrf.mxu0
      %v3844 = vadd.f32 0.0, %v3843
      %v3845 = vpop.f32.mrf.mxu0
      %3846 = vdwg.mxu0
      %3847 = vrot.lane.b32.xlu0 %v1475, 40
      %v3848 = vpop.permute.xlu0 %3847
      %v3850 = vsel %vm1103, %v3699, 0
      %v3853 = vsel %vm1312, %v3848, 0
      %3855 = vmatpush.bf16.msra.mxu0 0
      %3856 = vmatpush.bf16.msra.mxu0 0
      %3857 = vmatpush.bf16.msra.mxu0 0
      %3858 = vmatpush.bf16.msra.mxu0 0
      %3859 = vmatpush.bf16.msra.mxu0 0
      %3860 = vmatpush.bf16.msra.mxu0 0
      %3861 = vmatpush.bf16.msra.mxu0 0
      %3862 = vmatpush.bf16.msra.mxu0 %v3853
      %3863 = vmatmul.bf16.gmra.mxu0 %v3850
      %v3864 = vpop.f32.mrf.mxu0
      %v3865 = vadd.f32 0.0, %v3864
      %v3866 = vpop.f32.mrf.mxu0
      %3867 = vdwg.mxu0
      %v3868 = vpack.c.bf16 %v3718, %v3718
      %v3869 = vpack.c.bf16 %v3739, %v3739
      %v3870 = vpack.c.bf16 %v3760, %v3760
      %v3871 = vpack.c.bf16 %v3781, %v3781
      %v3872 = vpack.c.bf16 %v3802, %v3802
      %v3873 = vpack.c.bf16 %v3823, %v3823
      %v3874 = vpack.c.bf16 %v3844, %v3844
      %v3875 = vpack.c.bf16 %v3865, %v3865
      %3884 = vrot.lane.b32.xlu0 %v3868, 24
      %v3885 = vpop.permute.xlu0 %3884
      %3886 = vrot.lane.b32.xlu0 %v3869, 24
      %v3887 = vpop.permute.xlu0 %3886
      %3888 = vrot.lane.b32.xlu0 %v3870, 24
      %v3889 = vpop.permute.xlu0 %3888
      %3890 = vrot.lane.b32.xlu0 %v3871, 24
      %v3891 = vpop.permute.xlu0 %3890
      %3892 = vrot.lane.b32.xlu0 %v3872, 24
      %v3893 = vpop.permute.xlu0 %3892
      %3894 = vrot.lane.b32.xlu0 %v3873, 24
      %v3895 = vpop.permute.xlu0 %3894
      %3896 = vrot.lane.b32.xlu0 %v3874, 24
      %v3897 = vpop.permute.xlu0 %3896
      %3898 = vrot.lane.b32.xlu0 %v3875, 24
      %v3899 = vpop.permute.xlu0 %3898
      %vm3908 = vcmask 257216
      %3909 = vst.msk [vmem:[#allocation2] sm:$0xf] %vm3908, %v3885
      %3910 = vst.msk [vmem:[#allocation2 + $0x4] sm:$0xf] %vm3908, %v3887
      %3911 = vst.msk [vmem:[#allocation2 + $0x8] sm:$0xf] %vm3908, %v3889
      %3912 = vst.msk [vmem:[#allocation2 + $0xc] sm:$0xf] %vm3908, %v3891
      %3913 = vst.msk [vmem:[#allocation2 + $0x10] sm:$0xf] %vm3908, %v3893
      %3914 = vst.msk [vmem:[#allocation2 + $0x14] sm:$0xf] %vm3908, %v3895
      %3915 = vst.msk [vmem:[#allocation2 + $0x18] sm:$0xf] %vm3908, %v3897
      %3916 = vst.msk [vmem:[#allocation2 + $0x1c] sm:$0xf] %vm3908, %v3899
      %v3917 = vld [vmem:[#allocation2] sm:$0xf]
      %v3918 = vld [vmem:[#allocation2 + $0x4] sm:$0xf]
      %v3919 = vld [vmem:[#allocation2 + $0x8] sm:$0xf]
      %v3920 = vld [vmem:[#allocation2 + $0xc] sm:$0xf]
      %v3921 = vld [vmem:[#allocation2 + $0x10] sm:$0xf]
      %v3922 = vld [vmem:[#allocation2 + $0x14] sm:$0xf]
      %v3923 = vld [vmem:[#allocation2 + $0x18] sm:$0xf]
      %v3924 = vld [vmem:[#allocation2 + $0x1c] sm:$0xf]
      %v3925 = vld [vmem:[%s5] sm:$0xf]
      %v3926 = vld [vmem:[%s5 + $0x4] sm:$0xf]
      %v3927 = vld [vmem:[%s5 + $0x8] sm:$0xf]
      %v3928 = vld [vmem:[%s5 + $0xc] sm:$0xf]
      %v3937 = vunpack.c.l.b16 %v3917
      %v3938 = vunpack.c.l.b16 %v3918
      %v3939 = vunpack.c.l.b16 %v3919
      %v3940 = vunpack.c.l.b16 %v3920
      %v3941 = vunpack.c.l.b16 %v3921
      %v3942 = vunpack.c.l.b16 %v3922
      %v3943 = vunpack.c.l.b16 %v3923
      %v3944 = vunpack.c.l.b16 %v3924
      %v3945 = vpack.c.b16 %v3938, %v3937
      %v3946 = vpack.c.b16 %v3940, %v3939
      %v3947 = vpack.c.b16 %v3942, %v3941
      %v3948 = vpack.c.b16 %v3944, %v3943
      %v3953 = vunpack.c.l.b16 %v3925
      %v3954 = vunpack.c.l.b16 %v3926
      %v3955 = vunpack.c.l.b16 %v3927
      %v3956 = vunpack.c.l.b16 %v3928
      %v3957 = vpack.c.b16 %v3954, %v3953
      %v3958 = vpack.c.b16 %v3956, %v3955
      %v3962 = vsel %vm317, %v3945, 0
      %v3965 = vsel %vm317, %v3946, 0
      %v3968 = vsel %vm317, %v3947, 0
      %v3971 = vsel %vm317, %v3948, 0
      %3973 = vmatpush.bf16.msra.mxu0 0
      %3974 = vmatpush.bf16.msra.mxu0 0
      %3975 = vmatpush.bf16.msra.mxu0 0
      %3976 = vmatpush.bf16.msra.mxu0 0
      %3977 = vmatpush.bf16.msra.mxu0 0
      %3978 = vmatpush.bf16.msra.mxu0 0
      %3979 = vmatpush.bf16.msra.mxu0 %v3958
      %3980 = vmatpush.bf16.msra.mxu0 %v3957
      %3981 = vmatmul.bf16.gmra.mxu0 %v3962
      %v3982 = vpop.f32.mrf.mxu0
      %v3983 = vadd.f32 0.0, %v3982
      %v3984 = vpop.f32.mrf.mxu0
      %v3985 = vadd.f32 0.0, %v3984
      %3986 = vmatmul.bf16.gmra.mxu0 %v3965
      %v3987 = vpop.f32.mrf.mxu0
      %v3988 = vadd.f32 0.0, %v3987
      %v3989 = vpop.f32.mrf.mxu0
      %v3990 = vadd.f32 0.0, %v3989
      %3991 = vmatmul.bf16.gmra.mxu0 %v3968
      %v3992 = vpop.f32.mrf.mxu0
      %v3993 = vadd.f32 0.0, %v3992
      %v3994 = vpop.f32.mrf.mxu0
      %v3995 = vadd.f32 0.0, %v3994
      %3996 = vmatmul.bf16.gmra.mxu0 %v3971
      %v3997 = vpop.f32.mrf.mxu0
      %v3998 = vadd.f32 0.0, %v3997
      %v3999 = vpop.f32.mrf.mxu0
      %v4000 = vadd.f32 0.0, %v3999
      %4001 = vdwg.mxu0
      %4002 = vst.msk [vmem:[%s270] sm:$0xff] %vm317, %v3983
      %4003 = vst.msk [vmem:[%s270 + $0x8] sm:$0xff] %vm317, %v3985
      %4004 = vst.msk [vmem:[%s270 + $0x10] sm:$0xff] %vm317, %v3988
      %4005 = vst.msk [vmem:[%s270 + $0x18] sm:$0xff] %vm317, %v3990
      %4006 = vst.msk [vmem:[%s270 + $0x20] sm:$0xff] %vm317, %v3993
      %4007 = vst.msk [vmem:[%s270 + $0x28] sm:$0xff] %vm317, %v3995
      %4008 = vst.msk [vmem:[%s270 + $0x30] sm:$0xff] %vm317, %v3998
      %4009 = vst.msk [vmem:[%s270 + $0x38] sm:$0xff] %vm317, %v4000
      %s4010 = smul.u32 8, %s17
      %p4011 = scmp.lt.s32.totalorder %s4010, 15
      %s4012 = scalar_select %p4011, %s4010, 15
      %s4013 = smul.addr %s4012, 8
      %s4014 = scalar_lea.vmem %s6, %s4013
      // Predicated region
      $region45: #{tpu_custom_call.1} parent=43 // pred_check
        %p4015 = pneg %p171
      $region46: #{tpu_custom_call.1} parent=43 // pred_check_branch
        %4017 = sbr.rel (%p4015) target = $region48
      $region47: #{tpu_custom_call.1} parent=43 // pred_region
        %s4018 = smul.u32 8, %s17
      $region48: #{tpu_custom_call.1} parent=43 // pred_fallthru
        _
    $region44: #{tpu_custom_call.1} parent=5 // pred_fallthru
      _
    %p4019 = scmp.le.s32.totalorder 2, %s12
    // Predicated region
    $region49: #{tpu_custom_call.1} parent=5 // pred_check
      %p4020 = pneg %p4019
    $region50: #{tpu_custom_call.1} parent=5 // pred_check_branch
      %4022 = sbr.rel (%p4020) target = $region52
    $region51: #{tpu_custom_call.1} parent=5 // pred_region
      %s4023 = ssub.s32 %s12, 2
      // Predicated region
      $region53: #{tpu_custom_call.1} parent=51 // pred_check
        %p4024 = pneg %p177
      $region54: #{tpu_custom_call.1} parent=51 // pred_check_branch
        %4026 = sbr.rel (%p4024) target = $region56
      $region55: #{tpu_custom_call.1} parent=51 // pred_region
        %s4027 = smul.u32 8, %s18
        %p4028 = scmp.lt.s32.totalorder %s4027, 15
        %s4029 = scalar_select %p4028, %s4027, 15
        %s4030 = smul.addr %s4029, 8
        %s4031 = scalar_lea.vmem %s6, %s4030
      $region56: #{tpu_custom_call.1} parent=51 // pred_fallthru
        _
    $region52: #{tpu_custom_call.1} parent=5 // pred_fallthru
      _
  $region6: #{tpu_custom_call.1} parent=0 // loop_footer
    %s16 = sadd.s32 1, %s12
  $region7: #{tpu_custom_call.1} parent=0 // loop_footer_branch
    %11 = sbr.rel target = $region3
  $region8: #{tpu_custom_call.1} parent=0 // loop_exit
    _

</llo_original>
